<compile_context>
chip_gen: v7x
topology: tpu7x:2x2x1
jax: 0.10.0
libtpu: 0.0.40
codegen_flags: <defaults>
</compile_context>

<pallas_src>
import math
import functools

import jax
import jax.numpy as jnp
from jax.experimental import pallas as pl
from jax.experimental.pallas import tpu as pltpu


# ----------------------------- config ------------------------------------- #
VOCAB = 100          # synthetic vocab
MAX_POS = 64         # max position embeddings
B, S = 2, 8          # batch, sequence length
H = 32               # hidden size
NH = 2               # number of attention heads
HD = H // NH         # head dim
I = 64               # FFN intermediate size
NUM_LAYERS = 2
LN_EPS = 1e-12       # BERT layer-norm eps

# stacked-parameter indices (static python ints -> free leading-axis indexing)
_Q, _K, _V = range(3)                              # wqkv / bqkv stacks
_BO, _LN1G, _LN1B, _B2, _LN2G, _LN2B = range(6)    # hp stack


# --------------------------- kernel helpers -------------------------------- #
def _layer_norm(x, gamma, beta, eps):
    # x: [S, H] f32, gamma/beta: [1, H] f32
    mu = jnp.mean(x, axis=-1, keepdims=True)
    var = jnp.mean((x - mu) ** 2, axis=-1, keepdims=True)
    return (x - mu) * jax.lax.rsqrt(var + eps) * gamma + beta


# ----------------------------- fused kernel --------------------------------- #
def fused_encoder_kernel(
    emb_ref, bias_ref, eln_ref, wqkv_ref, bqkv_ref, wo_ref,
    w1_ref, b1_ref, w2_ref, hp_ref,
    cls_ref,
    *, num_layers, num_heads, seq_len, eps,
):
    """One grid step == one batch element. Runs the full encoder stack."""
    x = emb_ref[0].astype(jnp.float32)                                # [S, H]
    hidden = x.shape[-1]
    # additive attention bias, broadcast ONCE for all heads & layers
    bias2d = jnp.broadcast_to(bias_ref[0], (seq_len, seq_len))        # [S, S]

    # embedding LayerNorm
    x = _layer_norm(x, eln_ref[0], eln_ref[1], eps)

    for l in range(num_layers):            # static unroll (NUM_LAYERS small)
        xb = x.astype(jnp.bfloat16)

        # ---- multi-head self-attention (head split baked into weights) ----
        attn = jnp.zeros((seq_len, hidden), jnp.float32)
        for h in range(num_heads):         # static unroll, no slices / concat
            # 1/sqrt(HD) is folded into Wq/bq at init time
            qh = jnp.dot(xb, wqkv_ref[_Q, l, h],
                         preferred_element_type=jnp.float32) + bqkv_ref[_Q, l, h]
            kh = jnp.dot(xb, wqkv_ref[_K, l, h],
                         preferred_element_type=jnp.float32) + bqkv_ref[_K, l, h]
            vh = jnp.dot(xb, wqkv_ref[_V, l, h],
                         preferred_element_type=jnp.float32) + bqkv_ref[_V, l, h]

            s = jnp.dot(qh.astype(jnp.bfloat16), kh.astype(jnp.bfloat16).T,
                        preferred_element_type=jnp.float32)           # [S, S]
            s = s + bias2d
            s = s - jnp.max(s, axis=-1, keepdims=True)
            p = jnp.exp(s)
            p = p * pl.reciprocal(jnp.sum(p, axis=-1, keepdims=True),
                                  approx=True)
            ctx = jnp.dot(p.astype(jnp.bfloat16), vh.astype(jnp.bfloat16),
                          preferred_element_type=jnp.float32)         # [S, HD]
            # output projection contribution of this head (sum == concat @ Wo)
            attn = attn + jnp.dot(ctx.astype(jnp.bfloat16), wo_ref[l, h],
                                  preferred_element_type=jnp.float32)
        attn = attn + hp_ref[l, _BO]
        h1 = _layer_norm(x + attn, hp_ref[l, _LN1G], hp_ref[l, _LN1B], eps)

        # ---- feed-forward ---------------------------------------------------
        inter = jnp.dot(h1.astype(jnp.bfloat16), w1_ref[l],
                        preferred_element_type=jnp.float32) + b1_ref[l]
        # TODO(synk): HF BERT uses exact erf GELU; tanh approximation used here.
        inter = jax.nn.gelu(inter, approximate=True)
        ffn = jnp.dot(inter.astype(jnp.bfloat16), w2_ref[l],
                      preferred_element_type=jnp.float32) + hp_ref[l, _B2]
        x = _layer_norm(h1 + ffn, hp_ref[l, _LN2G], hp_ref[l, _LN2B], eps)

    # only the CLS row is written back (saves S-1 rows of HBM writeback)
    cls_ref[0] = x[0:1, :].astype(cls_ref.dtype)


# ------------------------------- wrapper ------------------------------------ #
def fused_encoder(emb, attn_bias, params):
    Bx, Sx, Hx = emb.shape
    L = NUM_LAYERS

    def full(shape):
        nd = len(shape)
        return pl.BlockSpec(shape, lambda b, _nd=nd: (0,) * _nd)

    kernel = functools.partial(
        fused_encoder_kernel,
        num_layers=L, num_heads=NH, seq_len=Sx, eps=LN_EPS)

    out = pl.pallas_call(
        kernel,
        out_shape=jax.ShapeDtypeStruct((Bx, 1, Hx), jnp.float32),
        grid=(Bx,),
        in_specs=[
            pl.BlockSpec((1, Sx, Hx), lambda b: (b, 0, 0)),   # embeddings
            pl.BlockSpec((1, 1, Sx), lambda b: (b, 0, 0)),    # attention bias
            full(params["emb_ln"].shape),                      # emb LN  [2,1,H]
            full(params["wqkv"].shape),                        # [3,L,NH,H,HD]
            full(params["bqkv"].shape),                        # [3,L,NH,1,HD]
            full(params["wo"].shape),                          # [L,NH,HD,H]
            full(params["w1"].shape),                          # [L,H,I]
            full(params["b1"].shape),                          # [L,1,I]
            full(params["w2"].shape),                          # [L,I,H]
            full(params["hp"].shape),                          # [L,6,1,H]
        ],
        out_specs=pl.BlockSpec((1, 1, Hx), lambda b: (b, 0, 0)),
        compiler_params=pltpu.CompilerParams(
            dimension_semantics=("parallel",)),
    )(
        emb, attn_bias,
        params["emb_ln"], params["wqkv"], params["bqkv"], params["wo"],
        params["w1"], params["b1"], params["w2"], params["hp"],
    )
    return out[:, 0, :]                                        # [B, H]


# --------------------------- parameter init -------------------------------- #
def init_params(key):
    def nrm(k, shape):
        return 0.02 * jax.random.normal(k, shape, dtype=jnp.float32)

    L = NUM_LAYERS
    keys = jax.random.split(key, 9)
    scale = 1.0 / math.sqrt(HD)

    def split_heads_in(w):   # [L,H,H] -> [L,NH,H,HD]  (columns split per head)
        return jnp.transpose(w.reshape(L, H, NH, HD), (0, 2, 1, 3))

    def split_heads_out(w):  # [L,H,H] -> [L,NH,HD,H]  (rows split per head)
        return w.reshape(L, NH, HD, H)

    # 1/sqrt(HD) attention scale folded into Wq / bq (one-time, free at runtime)
    wq = split_heads_in(nrm(keys[3], (L, H, H))) * scale
    wk = split_heads_in(nrm(keys[4], (L, H, H)))
    wv = split_heads_in(nrm(keys[5], (L, H, H)))
    bq = jnp.zeros((L, NH, 1, HD), jnp.float32) * scale
    bk = jnp.zeros((L, NH, 1, HD), jnp.float32)
    bv = jnp.zeros((L, NH, 1, HD), jnp.float32)

    zeros_h = jnp.zeros((L, 1, H), jnp.float32)
    ones_h = jnp.ones((L, 1, H), jnp.float32)

    params = {
        "word_emb": nrm(keys[0], (VOCAB, H)),
        "pos_emb": nrm(keys[1], (MAX_POS, H)),
        "type_emb": nrm(keys[2], (2, H)),
        # embedding LayerNorm: [gamma, beta] -> [2, 1, H]
        "emb_ln": jnp.stack([jnp.ones((1, H), jnp.float32),
                             jnp.zeros((1, H), jnp.float32)], axis=0),
        # MXU operands stored in bf16 (halves weight DMA bytes); biases / LN f32
        "wqkv": jnp.stack([wq, wk, wv], axis=0).astype(jnp.bfloat16),  # [3,L,NH,H,HD]
        "bqkv": jnp.stack([bq, bk, bv], axis=0),                       # [3,L,NH,1,HD]
        "wo": split_heads_out(nrm(keys[6], (L, H, H))).astype(jnp.bfloat16),
        "w1": nrm(keys[7], (L, H, I)).astype(jnp.bfloat16),
        "b1": jnp.zeros((L, 1, I), jnp.float32),
        "w2": nrm(keys[8], (L, I, H)).astype(jnp.bfloat16),
        # per-layer H-wide params stacked: [bo, ln1_g, ln1_b, b2, ln2_g, ln2_b]
        "hp": jnp.stack([zeros_h, ones_h, zeros_h,
                         zeros_h, ones_h, zeros_h], axis=1),           # [L,6,1,H]
    }
    return params


# ------------------------------ forward ------------------------------------ #
def ner_model_forward(params, input_ids, attention_mask):
    """Equivalent of NERModel.forward: BERT encoder -> last_hidden_state[:, 0]."""
    # TODO(synk): tokenizer decode/re-encode skipped (string ops); ids used as-is.
    # --- embeddings (gather = glue in plain JAX / XLA) ---
    word = params["word_emb"][input_ids]                      # [B, S, H]
    pos = params["pos_emb"][jnp.arange(input_ids.shape[1])]   # [S, H]
    typ = params["type_emb"][0]                               # [H]
    emb = word + pos[None, :, :] + typ[None, None, :]
    # additive attention bias, computed once for the whole layer stack
    bias = ((1.0 - attention_mask.astype(jnp.float32)) * (-1e9))[:, None, :]

    # --- fused encoder (single pallas_call) -> CLS ---
    return fused_encoder(emb, bias, params)                   # [B, H]


# -------------------------------- main -------------------------------------- #
if __name__ == "__main__":
    key = jax.random.PRNGKey(0)
    pkey, ikey = jax.random.split(key)

    params = init_params(pkey)
    input_ids = jax.random.randint(ikey, (B, S), 0, VOCAB, dtype=jnp.int32)
    # deterministic padding mask: first batch has 6 valid tokens, second has 8
    lengths = jnp.array([[6], [8]], dtype=jnp.int32)
    attention_mask = (jnp.arange(S)[None, :] < lengths).astype(jnp.int32)

    fwd = jax.jit(ner_model_forward)
    cls = fwd(params, input_ids, attention_mask)
    cls = jax.block_until_ready(cls)

    assert cls.shape == (B, H) and cls.dtype == jnp.float32
    assert bool(jnp.all(jnp.isfinite(cls)))
    print("KERNEL_OK")
</pallas_src>

<mosaic_0001>
module attributes {stable_mosaic.version = 11 : i64} {
  func.func @fused_encoder_kernel(%arg0: i32, %arg1: memref<1x8x32xf32, #tpu.memory_space<vmem>>, %arg2: memref<1x1x8xf32, #tpu.memory_space<vmem>>, %arg3: memref<2x1x32xf32, #tpu.memory_space<vmem>>, %arg4: memref<3x2x2x32x16xbf16, #tpu.memory_space<vmem>>, %arg5: memref<3x2x2x1x16xf32, #tpu.memory_space<vmem>>, %arg6: memref<2x2x16x32xbf16, #tpu.memory_space<vmem>>, %arg7: memref<2x32x64xbf16, #tpu.memory_space<vmem>>, %arg8: memref<2x1x64xf32, #tpu.memory_space<vmem>>, %arg9: memref<2x64x32xbf16, #tpu.memory_space<vmem>>, %arg10: memref<2x6x1x32xf32, #tpu.memory_space<vmem>>, %arg11: memref<1x1x32xf32, #tpu.memory_space<vmem>>) attributes {dimension_semantics = [#tpu.dimension_semantics<parallel>], iteration_bounds = array<i64: 2>, scalar_prefetch = 0 : i64, scratch_operands = 0 : i64, tpu.core_type = #tpu.core_type<tc>, window_params = [{transform_indices = @transform_0, window_bounds = array<i64: 1, 8, 32>}, {transform_indices = @transform_1, window_bounds = array<i64: 1, 1, 8>}, {pipeline_mode = #tpu.pipeline_mode<synchronous>, transform_indices = @transform_2, window_bounds = array<i64: 2, 1, 32>}, {pipeline_mode = #tpu.pipeline_mode<synchronous>, transform_indices = @transform_3, window_bounds = array<i64: 3, 2, 2, 32, 16>}, {pipeline_mode = #tpu.pipeline_mode<synchronous>, transform_indices = @transform_4, window_bounds = array<i64: 3, 2, 2, 1, 16>}, {pipeline_mode = #tpu.pipeline_mode<synchronous>, transform_indices = @transform_5, window_bounds = array<i64: 2, 2, 16, 32>}, {pipeline_mode = #tpu.pipeline_mode<synchronous>, transform_indices = @transform_6, window_bounds = array<i64: 2, 32, 64>}, {pipeline_mode = #tpu.pipeline_mode<synchronous>, transform_indices = @transform_7, window_bounds = array<i64: 2, 1, 64>}, {pipeline_mode = #tpu.pipeline_mode<synchronous>, transform_indices = @transform_8, window_bounds = array<i64: 2, 64, 32>}, {pipeline_mode = #tpu.pipeline_mode<synchronous>, transform_indices = @transform_9, window_bounds = array<i64: 2, 6, 1, 32>}, {transform_indices = @transform_10, window_bounds = array<i64: 1, 1, 32>}]} {
    %c0 = arith.constant 0 : index
    %c0_0 = arith.constant 0 : index
    %c0_1 = arith.constant 0 : index
    %0 = vector.load %arg1[%c0, %c0_0, %c0_1] : memref<1x8x32xf32, #tpu.memory_space<vmem>>, vector<1x8x32xf32>
    %1 = vector.shape_cast %0 : vector<1x8x32xf32> to vector<8x32xf32>
    %c0_2 = arith.constant 0 : index
    %c0_3 = arith.constant 0 : index
    %c0_4 = arith.constant 0 : index
    %2 = vector.load %arg2[%c0_2, %c0_3, %c0_4] : memref<1x1x8xf32, #tpu.memory_space<vmem>>, vector<1x1x8xf32>
    %3 = vector.shape_cast %2 : vector<1x1x8xf32> to vector<1x8xf32>
    %4 = vector.shape_cast %3 : vector<1x8xf32> to vector<1x8xf32>
    %5 = vector.broadcast %4 : vector<1x8xf32> to vector<8x8xf32>
    %c0_5 = arith.constant 0 : index
    %c0_6 = arith.constant 0 : index
    %c0_7 = arith.constant 0 : index
    %6 = vector.load %arg3[%c0_5, %c0_6, %c0_7] : memref<2x1x32xf32, #tpu.memory_space<vmem>>, vector<1x1x32xf32>
    %7 = vector.shape_cast %6 : vector<1x1x32xf32> to vector<1x32xf32>
    %c1 = arith.constant 1 : index
    %c0_8 = arith.constant 0 : index
    %c0_9 = arith.constant 0 : index
    %8 = vector.load %arg3[%c1, %c0_8, %c0_9] : memref<2x1x32xf32, #tpu.memory_space<vmem>>, vector<1x1x32xf32>
    %9 = vector.shape_cast %8 : vector<1x1x32xf32> to vector<1x32xf32>
    %cst = arith.constant dense<0.000000e+00> : vector<8xf32>
    %10 = vector.multi_reduction <add>, %1, %cst [1] : vector<8x32xf32> to vector<8xf32>
    %11 = vector.shape_cast %10 : vector<8xf32> to vector<8x1xf32>
    %cst_10 = arith.constant 3.200000e+01 : f32
    %12 = vector.broadcast %cst_10 : f32 to vector<8x1xf32>
    %13 = arith.divf %11, %12 : vector<8x1xf32>
    %14 = vector.broadcast %13 : vector<8x1xf32> to vector<8x32xf32>
    %15 = arith.subf %1, %14 : vector<8x32xf32>
    %16 = arith.mulf %15, %15 : vector<8x32xf32>
    %cst_11 = arith.constant dense<0.000000e+00> : vector<8xf32>
    %17 = vector.multi_reduction <add>, %16, %cst_11 [1] : vector<8x32xf32> to vector<8xf32>
    %18 = vector.shape_cast %17 : vector<8xf32> to vector<8x1xf32>
    %cst_12 = arith.constant 3.200000e+01 : f32
    %19 = vector.broadcast %cst_12 : f32 to vector<8x1xf32>
    %20 = arith.divf %18, %19 : vector<8x1xf32>
    %21 = vector.broadcast %13 : vector<8x1xf32> to vector<8x32xf32>
    %22 = arith.subf %1, %21 : vector<8x32xf32>
    %cst_13 = arith.constant 9.99999996E-13 : f32
    %23 = vector.broadcast %cst_13 : f32 to vector<8x1xf32>
    %24 = arith.addf %20, %23 : vector<8x1xf32>
    %25 = math.rsqrt %24 : vector<8x1xf32>
    %26 = vector.broadcast %25 : vector<8x1xf32> to vector<8x32xf32>
    %27 = arith.mulf %22, %26 : vector<8x32xf32>
    %28 = vector.broadcast %7 : vector<1x32xf32> to vector<8x32xf32>
    %29 = arith.mulf %27, %28 : vector<8x32xf32>
    %30 = vector.broadcast %9 : vector<1x32xf32> to vector<8x32xf32>
    %31 = arith.addf %29, %30 : vector<8x32xf32>
    %32 = arith.truncf %31 : vector<8x32xf32> to vector<8x32xbf16>
    %cst_14 = arith.constant 0.000000e+00 : f32
    %33 = vector.broadcast %cst_14 : f32 to vector<8x32xf32>
    %c0_15 = arith.constant 0 : index
    %c0_16 = arith.constant 0 : index
    %c0_17 = arith.constant 0 : index
    %c0_18 = arith.constant 0 : index
    %c0_19 = arith.constant 0 : index
    %34 = vector.load %arg4[%c0_15, %c0_16, %c0_17, %c0_18, %c0_19] : memref<3x2x2x32x16xbf16, #tpu.memory_space<vmem>>, vector<1x1x1x32x16xbf16>
    %35 = vector.shape_cast %34 : vector<1x1x1x32x16xbf16> to vector<32x16xbf16>
    %cst_20 = arith.constant dense<0.000000e+00> : vector<8x16xf32>
    %36 = tpu.matmul %32, %35, %cst_20 {dimension_numbers = #tpu.dot_dimension_numbers<[1], [0], [0], [1], [0, 0, 1, 1], [], []>} : vector<8x32xbf16>, vector<32x16xbf16>, vector<8x16xf32> -> vector<8x16xf32>
    %c0_21 = arith.constant 0 : index
    %c0_22 = arith.constant 0 : index
    %c0_23 = arith.constant 0 : index
    %c0_24 = arith.constant 0 : index
    %c0_25 = arith.constant 0 : index
    %37 = vector.load %arg5[%c0_21, %c0_22, %c0_23, %c0_24, %c0_25] : memref<3x2x2x1x16xf32, #tpu.memory_space<vmem>>, vector<1x1x1x1x16xf32>
    %38 = vector.shape_cast %37 : vector<1x1x1x1x16xf32> to vector<1x16xf32>
    %39 = vector.broadcast %38 : vector<1x16xf32> to vector<8x16xf32>
    %40 = arith.addf %36, %39 : vector<8x16xf32>
    %c1_26 = arith.constant 1 : index
    %c0_27 = arith.constant 0 : index
    %c0_28 = arith.constant 0 : index
    %c0_29 = arith.constant 0 : index
    %c0_30 = arith.constant 0 : index
    %41 = vector.load %arg4[%c1_26, %c0_27, %c0_28, %c0_29, %c0_30] : memref<3x2x2x32x16xbf16, #tpu.memory_space<vmem>>, vector<1x1x1x32x16xbf16>
    %42 = vector.shape_cast %41 : vector<1x1x1x32x16xbf16> to vector<32x16xbf16>
    %cst_31 = arith.constant dense<0.000000e+00> : vector<8x16xf32>
    %43 = tpu.matmul %32, %42, %cst_31 {dimension_numbers = #tpu.dot_dimension_numbers<[1], [0], [0], [1], [0, 0, 1, 1], [], []>} : vector<8x32xbf16>, vector<32x16xbf16>, vector<8x16xf32> -> vector<8x16xf32>
    %c1_32 = arith.constant 1 : index
    %c0_33 = arith.constant 0 : index
    %c0_34 = arith.constant 0 : index
    %c0_35 = arith.constant 0 : index
    %c0_36 = arith.constant 0 : index
    %44 = vector.load %arg5[%c1_32, %c0_33, %c0_34, %c0_35, %c0_36] : memref<3x2x2x1x16xf32, #tpu.memory_space<vmem>>, vector<1x1x1x1x16xf32>
    %45 = vector.shape_cast %44 : vector<1x1x1x1x16xf32> to vector<1x16xf32>
    %46 = vector.broadcast %45 : vector<1x16xf32> to vector<8x16xf32>
    %47 = arith.addf %43, %46 : vector<8x16xf32>
    %c2 = arith.constant 2 : index
    %c0_37 = arith.constant 0 : index
    %c0_38 = arith.constant 0 : index
    %c0_39 = arith.constant 0 : index
    %c0_40 = arith.constant 0 : index
    %48 = vector.load %arg4[%c2, %c0_37, %c0_38, %c0_39, %c0_40] : memref<3x2x2x32x16xbf16, #tpu.memory_space<vmem>>, vector<1x1x1x32x16xbf16>
    %49 = vector.shape_cast %48 : vector<1x1x1x32x16xbf16> to vector<32x16xbf16>
    %cst_41 = arith.constant dense<0.000000e+00> : vector<8x16xf32>
    %50 = tpu.matmul %32, %49, %cst_41 {dimension_numbers = #tpu.dot_dimension_numbers<[1], [0], [0], [1], [0, 0, 1, 1], [], []>} : vector<8x32xbf16>, vector<32x16xbf16>, vector<8x16xf32> -> vector<8x16xf32>
    %c2_42 = arith.constant 2 : index
    %c0_43 = arith.constant 0 : index
    %c0_44 = arith.constant 0 : index
    %c0_45 = arith.constant 0 : index
    %c0_46 = arith.constant 0 : index
    %51 = vector.load %arg5[%c2_42, %c0_43, %c0_44, %c0_45, %c0_46] : memref<3x2x2x1x16xf32, #tpu.memory_space<vmem>>, vector<1x1x1x1x16xf32>
    %52 = vector.shape_cast %51 : vector<1x1x1x1x16xf32> to vector<1x16xf32>
    %53 = vector.broadcast %52 : vector<1x16xf32> to vector<8x16xf32>
    %54 = arith.addf %50, %53 : vector<8x16xf32>
    %55 = arith.truncf %40 : vector<8x16xf32> to vector<8x16xbf16>
    %56 = arith.truncf %47 : vector<8x16xf32> to vector<8x16xbf16>
    %57 = tpu.transpose %56, [1, 0] : vector<8x16xbf16> -> vector<16x8xbf16>
    %cst_47 = arith.constant dense<0.000000e+00> : vector<8x8xf32>
    %58 = tpu.matmul %55, %57, %cst_47 {dimension_numbers = #tpu.dot_dimension_numbers<[1], [0], [0], [1], [0, 0, 1, 1], [], []>} : vector<8x16xbf16>, vector<16x8xbf16>, vector<8x8xf32> -> vector<8x8xf32>
    %59 = arith.addf %58, %5 : vector<8x8xf32>
    %cst_48 = arith.constant dense<0xFF800000> : vector<8xf32>
    %60 = vector.multi_reduction <maximumf>, %59, %cst_48 [1] : vector<8x8xf32> to vector<8xf32>
    %61 = vector.shape_cast %60 : vector<8xf32> to vector<8x1xf32>
    %62 = vector.broadcast %61 : vector<8x1xf32> to vector<8x8xf32>
    %63 = arith.subf %59, %62 : vector<8x8xf32>
    %64 = math.exp %63 : vector<8x8xf32>
    %cst_49 = arith.constant dense<0.000000e+00> : vector<8xf32>
    %65 = vector.multi_reduction <add>, %64, %cst_49 [1] : vector<8x8xf32> to vector<8xf32>
    %66 = vector.shape_cast %65 : vector<8xf32> to vector<8x1xf32>
    %67 = tpu.reciprocal %66 {approx = true} : vector<8x1xf32> -> vector<8x1xf32>
    %68 = vector.broadcast %67 : vector<8x1xf32> to vector<8x8xf32>
    %69 = arith.mulf %64, %68 : vector<8x8xf32>
    %70 = arith.truncf %69 : vector<8x8xf32> to vector<8x8xbf16>
    %71 = arith.truncf %54 : vector<8x16xf32> to vector<8x16xbf16>
    %cst_50 = arith.constant dense<0.000000e+00> : vector<8x16xf32>
    %72 = tpu.matmul %70, %71, %cst_50 {dimension_numbers = #tpu.dot_dimension_numbers<[1], [0], [0], [1], [0, 0, 1, 1], [], []>} : vector<8x8xbf16>, vector<8x16xbf16>, vector<8x16xf32> -> vector<8x16xf32>
    %73 = arith.truncf %72 : vector<8x16xf32> to vector<8x16xbf16>
    %c0_51 = arith.constant 0 : index
    %c0_52 = arith.constant 0 : index
    %c0_53 = arith.constant 0 : index
    %c0_54 = arith.constant 0 : index
    %74 = vector.load %arg6[%c0_51, %c0_52, %c0_53, %c0_54] : memref<2x2x16x32xbf16, #tpu.memory_space<vmem>>, vector<1x1x16x32xbf16>
    %75 = vector.shape_cast %74 : vector<1x1x16x32xbf16> to vector<16x32xbf16>
    %cst_55 = arith.constant dense<0.000000e+00> : vector<8x32xf32>
    %76 = tpu.matmul %73, %75, %cst_55 {dimension_numbers = #tpu.dot_dimension_numbers<[1], [0], [0], [1], [0, 0, 1, 1], [], []>} : vector<8x16xbf16>, vector<16x32xbf16>, vector<8x32xf32> -> vector<8x32xf32>
    %77 = arith.addf %33, %76 : vector<8x32xf32>
    %c0_56 = arith.constant 0 : index
    %c0_57 = arith.constant 0 : index
    %c1_58 = arith.constant 1 : index
    %c0_59 = arith.constant 0 : index
    %c0_60 = arith.constant 0 : index
    %78 = vector.load %arg4[%c0_56, %c0_57, %c1_58, %c0_59, %c0_60] : memref<3x2x2x32x16xbf16, #tpu.memory_space<vmem>>, vector<1x1x1x32x16xbf16>
    %79 = vector.shape_cast %78 : vector<1x1x1x32x16xbf16> to vector<32x16xbf16>
    %cst_61 = arith.constant dense<0.000000e+00> : vector<8x16xf32>
    %80 = tpu.matmul %32, %79, %cst_61 {dimension_numbers = #tpu.dot_dimension_numbers<[1], [0], [0], [1], [0, 0, 1, 1], [], []>} : vector<8x32xbf16>, vector<32x16xbf16>, vector<8x16xf32> -> vector<8x16xf32>
    %c0_62 = arith.constant 0 : index
    %c0_63 = arith.constant 0 : index
    %c1_64 = arith.constant 1 : index
    %c0_65 = arith.constant 0 : index
    %c0_66 = arith.constant 0 : index
    %81 = vector.load %arg5[%c0_62, %c0_63, %c1_64, %c0_65, %c0_66] : memref<3x2x2x1x16xf32, #tpu.memory_space<vmem>>, vector<1x1x1x1x16xf32>
    %82 = vector.shape_cast %81 : vector<1x1x1x1x16xf32> to vector<1x16xf32>
    %83 = vector.broadcast %82 : vector<1x16xf32> to vector<8x16xf32>
    %84 = arith.addf %80, %83 : vector<8x16xf32>
    %c1_67 = arith.constant 1 : index
    %c0_68 = arith.constant 0 : index
    %c1_69 = arith.constant 1 : index
    %c0_70 = arith.constant 0 : index
    %c0_71 = arith.constant 0 : index
    %85 = vector.load %arg4[%c1_67, %c0_68, %c1_69, %c0_70, %c0_71] : memref<3x2x2x32x16xbf16, #tpu.memory_space<vmem>>, vector<1x1x1x32x16xbf16>
    %86 = vector.shape_cast %85 : vector<1x1x1x32x16xbf16> to vector<32x16xbf16>
    %cst_72 = arith.constant dense<0.000000e+00> : vector<8x16xf32>
    %87 = tpu.matmul %32, %86, %cst_72 {dimension_numbers = #tpu.dot_dimension_numbers<[1], [0], [0], [1], [0, 0, 1, 1], [], []>} : vector<8x32xbf16>, vector<32x16xbf16>, vector<8x16xf32> -> vector<8x16xf32>
    %c1_73 = arith.constant 1 : index
    %c0_74 = arith.constant 0 : index
    %c1_75 = arith.constant 1 : index
    %c0_76 = arith.constant 0 : index
    %c0_77 = arith.constant 0 : index
    %88 = vector.load %arg5[%c1_73, %c0_74, %c1_75, %c0_76, %c0_77] : memref<3x2x2x1x16xf32, #tpu.memory_space<vmem>>, vector<1x1x1x1x16xf32>
    %89 = vector.shape_cast %88 : vector<1x1x1x1x16xf32> to vector<1x16xf32>
    %90 = vector.broadcast %89 : vector<1x16xf32> to vector<8x16xf32>
    %91 = arith.addf %87, %90 : vector<8x16xf32>
    %c2_78 = arith.constant 2 : index
    %c0_79 = arith.constant 0 : index
    %c1_80 = arith.constant 1 : index
    %c0_81 = arith.constant 0 : index
    %c0_82 = arith.constant 0 : index
    %92 = vector.load %arg4[%c2_78, %c0_79, %c1_80, %c0_81, %c0_82] : memref<3x2x2x32x16xbf16, #tpu.memory_space<vmem>>, vector<1x1x1x32x16xbf16>
    %93 = vector.shape_cast %92 : vector<1x1x1x32x16xbf16> to vector<32x16xbf16>
    %cst_83 = arith.constant dense<0.000000e+00> : vector<8x16xf32>
    %94 = tpu.matmul %32, %93, %cst_83 {dimension_numbers = #tpu.dot_dimension_numbers<[1], [0], [0], [1], [0, 0, 1, 1], [], []>} : vector<8x32xbf16>, vector<32x16xbf16>, vector<8x16xf32> -> vector<8x16xf32>
    %c2_84 = arith.constant 2 : index
    %c0_85 = arith.constant 0 : index
    %c1_86 = arith.constant 1 : index
    %c0_87 = arith.constant 0 : index
    %c0_88 = arith.constant 0 : index
    %95 = vector.load %arg5[%c2_84, %c0_85, %c1_86, %c0_87, %c0_88] : memref<3x2x2x1x16xf32, #tpu.memory_space<vmem>>, vector<1x1x1x1x16xf32>
    %96 = vector.shape_cast %95 : vector<1x1x1x1x16xf32> to vector<1x16xf32>
    %97 = vector.broadcast %96 : vector<1x16xf32> to vector<8x16xf32>
    %98 = arith.addf %94, %97 : vector<8x16xf32>
    %99 = arith.truncf %84 : vector<8x16xf32> to vector<8x16xbf16>
    %100 = arith.truncf %91 : vector<8x16xf32> to vector<8x16xbf16>
    %101 = tpu.transpose %100, [1, 0] : vector<8x16xbf16> -> vector<16x8xbf16>
    %cst_89 = arith.constant dense<0.000000e+00> : vector<8x8xf32>
    %102 = tpu.matmul %99, %101, %cst_89 {dimension_numbers = #tpu.dot_dimension_numbers<[1], [0], [0], [1], [0, 0, 1, 1], [], []>} : vector<8x16xbf16>, vector<16x8xbf16>, vector<8x8xf32> -> vector<8x8xf32>
    %103 = arith.addf %102, %5 : vector<8x8xf32>
    %cst_90 = arith.constant dense<0xFF800000> : vector<8xf32>
    %104 = vector.multi_reduction <maximumf>, %103, %cst_90 [1] : vector<8x8xf32> to vector<8xf32>
    %105 = vector.shape_cast %104 : vector<8xf32> to vector<8x1xf32>
    %106 = vector.broadcast %105 : vector<8x1xf32> to vector<8x8xf32>
    %107 = arith.subf %103, %106 : vector<8x8xf32>
    %108 = math.exp %107 : vector<8x8xf32>
    %cst_91 = arith.constant dense<0.000000e+00> : vector<8xf32>
    %109 = vector.multi_reduction <add>, %108, %cst_91 [1] : vector<8x8xf32> to vector<8xf32>
    %110 = vector.shape_cast %109 : vector<8xf32> to vector<8x1xf32>
    %111 = tpu.reciprocal %110 {approx = true} : vector<8x1xf32> -> vector<8x1xf32>
    %112 = vector.broadcast %111 : vector<8x1xf32> to vector<8x8xf32>
    %113 = arith.mulf %108, %112 : vector<8x8xf32>
    %114 = arith.truncf %113 : vector<8x8xf32> to vector<8x8xbf16>
    %115 = arith.truncf %98 : vector<8x16xf32> to vector<8x16xbf16>
    %cst_92 = arith.constant dense<0.000000e+00> : vector<8x16xf32>
    %116 = tpu.matmul %114, %115, %cst_92 {dimension_numbers = #tpu.dot_dimension_numbers<[1], [0], [0], [1], [0, 0, 1, 1], [], []>} : vector<8x8xbf16>, vector<8x16xbf16>, vector<8x16xf32> -> vector<8x16xf32>
    %117 = arith.truncf %116 : vector<8x16xf32> to vector<8x16xbf16>
    %c0_93 = arith.constant 0 : index
    %c1_94 = arith.constant 1 : index
    %c0_95 = arith.constant 0 : index
    %c0_96 = arith.constant 0 : index
    %118 = vector.load %arg6[%c0_93, %c1_94, %c0_95, %c0_96] : memref<2x2x16x32xbf16, #tpu.memory_space<vmem>>, vector<1x1x16x32xbf16>
    %119 = vector.shape_cast %118 : vector<1x1x16x32xbf16> to vector<16x32xbf16>
    %cst_97 = arith.constant dense<0.000000e+00> : vector<8x32xf32>
    %120 = tpu.matmul %117, %119, %cst_97 {dimension_numbers = #tpu.dot_dimension_numbers<[1], [0], [0], [1], [0, 0, 1, 1], [], []>} : vector<8x16xbf16>, vector<16x32xbf16>, vector<8x32xf32> -> vector<8x32xf32>
    %121 = arith.addf %77, %120 : vector<8x32xf32>
    %c0_98 = arith.constant 0 : index
    %c0_99 = arith.constant 0 : index
    %c0_100 = arith.constant 0 : index
    %c0_101 = arith.constant 0 : index
    %122 = vector.load %arg10[%c0_98, %c0_99, %c0_100, %c0_101] : memref<2x6x1x32xf32, #tpu.memory_space<vmem>>, vector<1x1x1x32xf32>
    %123 = vector.shape_cast %122 : vector<1x1x1x32xf32> to vector<1x32xf32>
    %124 = vector.broadcast %123 : vector<1x32xf32> to vector<8x32xf32>
    %125 = arith.addf %121, %124 : vector<8x32xf32>
    %126 = arith.addf %31, %125 : vector<8x32xf32>
    %c0_102 = arith.constant 0 : index
    %c1_103 = arith.constant 1 : index
    %c0_104 = arith.constant 0 : index
    %c0_105 = arith.constant 0 : index
    %127 = vector.load %arg10[%c0_102, %c1_103, %c0_104, %c0_105] : memref<2x6x1x32xf32, #tpu.memory_space<vmem>>, vector<1x1x1x32xf32>
    %128 = vector.shape_cast %127 : vector<1x1x1x32xf32> to vector<1x32xf32>
    %c0_106 = arith.constant 0 : index
    %c2_107 = arith.constant 2 : index
    %c0_108 = arith.constant 0 : index
    %c0_109 = arith.constant 0 : index
    %129 = vector.load %arg10[%c0_106, %c2_107, %c0_108, %c0_109] : memref<2x6x1x32xf32, #tpu.memory_space<vmem>>, vector<1x1x1x32xf32>
    %130 = vector.shape_cast %129 : vector<1x1x1x32xf32> to vector<1x32xf32>
    %cst_110 = arith.constant dense<0.000000e+00> : vector<8xf32>
    %131 = vector.multi_reduction <add>, %126, %cst_110 [1] : vector<8x32xf32> to vector<8xf32>
    %132 = vector.shape_cast %131 : vector<8xf32> to vector<8x1xf32>
    %cst_111 = arith.constant 3.200000e+01 : f32
    %133 = vector.broadcast %cst_111 : f32 to vector<8x1xf32>
    %134 = arith.divf %132, %133 : vector<8x1xf32>
    %135 = vector.broadcast %134 : vector<8x1xf32> to vector<8x32xf32>
    %136 = arith.subf %126, %135 : vector<8x32xf32>
    %137 = arith.mulf %136, %136 : vector<8x32xf32>
    %cst_112 = arith.constant dense<0.000000e+00> : vector<8xf32>
    %138 = vector.multi_reduction <add>, %137, %cst_112 [1] : vector<8x32xf32> to vector<8xf32>
    %139 = vector.shape_cast %138 : vector<8xf32> to vector<8x1xf32>
    %cst_113 = arith.constant 3.200000e+01 : f32
    %140 = vector.broadcast %cst_113 : f32 to vector<8x1xf32>
    %141 = arith.divf %139, %140 : vector<8x1xf32>
    %142 = vector.broadcast %134 : vector<8x1xf32> to vector<8x32xf32>
    %143 = arith.subf %126, %142 : vector<8x32xf32>
    %cst_114 = arith.constant 9.99999996E-13 : f32
    %144 = vector.broadcast %cst_114 : f32 to vector<8x1xf32>
    %145 = arith.addf %141, %144 : vector<8x1xf32>
    %146 = math.rsqrt %145 : vector<8x1xf32>
    %147 = vector.broadcast %146 : vector<8x1xf32> to vector<8x32xf32>
    %148 = arith.mulf %143, %147 : vector<8x32xf32>
    %149 = vector.broadcast %128 : vector<1x32xf32> to vector<8x32xf32>
    %150 = arith.mulf %148, %149 : vector<8x32xf32>
    %151 = vector.broadcast %130 : vector<1x32xf32> to vector<8x32xf32>
    %152 = arith.addf %150, %151 : vector<8x32xf32>
    %153 = arith.truncf %152 : vector<8x32xf32> to vector<8x32xbf16>
    %c0_115 = arith.constant 0 : index
    %c0_116 = arith.constant 0 : index
    %c0_117 = arith.constant 0 : index
    %154 = vector.load %arg7[%c0_115, %c0_116, %c0_117] : memref<2x32x64xbf16, #tpu.memory_space<vmem>>, vector<1x32x64xbf16>
    %155 = vector.shape_cast %154 : vector<1x32x64xbf16> to vector<32x64xbf16>
    %cst_118 = arith.constant dense<0.000000e+00> : vector<8x64xf32>
    %156 = tpu.matmul %153, %155, %cst_118 {dimension_numbers = #tpu.dot_dimension_numbers<[1], [0], [0], [1], [0, 0, 1, 1], [], []>} : vector<8x32xbf16>, vector<32x64xbf16>, vector<8x64xf32> -> vector<8x64xf32>
    %c0_119 = arith.constant 0 : index
    %c0_120 = arith.constant 0 : index
    %c0_121 = arith.constant 0 : index
    %157 = vector.load %arg8[%c0_119, %c0_120, %c0_121] : memref<2x1x64xf32, #tpu.memory_space<vmem>>, vector<1x1x64xf32>
    %158 = vector.shape_cast %157 : vector<1x1x64xf32> to vector<1x64xf32>
    %159 = vector.broadcast %158 : vector<1x64xf32> to vector<8x64xf32>
    %160 = arith.addf %156, %159 : vector<8x64xf32>
    %161 = arith.mulf %160, %160 : vector<8x64xf32>
    %162 = arith.mulf %160, %161 : vector<8x64xf32>
    %cst_122 = arith.constant 4.471500e-02 : f32
    %163 = vector.broadcast %cst_122 : f32 to vector<8x64xf32>
    %164 = arith.mulf %163, %162 : vector<8x64xf32>
    %165 = arith.addf %160, %164 : vector<8x64xf32>
    %cst_123 = arith.constant 0.797884583 : f32
    %166 = vector.broadcast %cst_123 : f32 to vector<8x64xf32>
    %167 = arith.mulf %166, %165 : vector<8x64xf32>
    %168 = math.tanh %167 : vector<8x64xf32>
    %cst_124 = arith.constant 1.000000e+00 : f32
    %169 = vector.broadcast %cst_124 : f32 to vector<8x64xf32>
    %170 = arith.addf %169, %168 : vector<8x64xf32>
    %cst_125 = arith.constant 5.000000e-01 : f32
    %171 = vector.broadcast %cst_125 : f32 to vector<8x64xf32>
    %172 = arith.mulf %171, %170 : vector<8x64xf32>
    %173 = arith.mulf %160, %172 : vector<8x64xf32>
    %174 = arith.truncf %173 : vector<8x64xf32> to vector<8x64xbf16>
    %c0_126 = arith.constant 0 : index
    %c0_127 = arith.constant 0 : index
    %c0_128 = arith.constant 0 : index
    %175 = vector.load %arg9[%c0_126, %c0_127, %c0_128] : memref<2x64x32xbf16, #tpu.memory_space<vmem>>, vector<1x64x32xbf16>
    %176 = vector.shape_cast %175 : vector<1x64x32xbf16> to vector<64x32xbf16>
    %cst_129 = arith.constant dense<0.000000e+00> : vector<8x32xf32>
    %177 = tpu.matmul %174, %176, %cst_129 {dimension_numbers = #tpu.dot_dimension_numbers<[1], [0], [0], [1], [0, 0, 1, 1], [], []>} : vector<8x64xbf16>, vector<64x32xbf16>, vector<8x32xf32> -> vector<8x32xf32>
    %c0_130 = arith.constant 0 : index
    %c3 = arith.constant 3 : index
    %c0_131 = arith.constant 0 : index
    %c0_132 = arith.constant 0 : index
    %178 = vector.load %arg10[%c0_130, %c3, %c0_131, %c0_132] : memref<2x6x1x32xf32, #tpu.memory_space<vmem>>, vector<1x1x1x32xf32>
    %179 = vector.shape_cast %178 : vector<1x1x1x32xf32> to vector<1x32xf32>
    %180 = vector.broadcast %179 : vector<1x32xf32> to vector<8x32xf32>
    %181 = arith.addf %177, %180 : vector<8x32xf32>
    %182 = arith.addf %152, %181 : vector<8x32xf32>
    %c0_133 = arith.constant 0 : index
    %c4 = arith.constant 4 : index
    %c0_134 = arith.constant 0 : index
    %c0_135 = arith.constant 0 : index
    %183 = vector.load %arg10[%c0_133, %c4, %c0_134, %c0_135] : memref<2x6x1x32xf32, #tpu.memory_space<vmem>>, vector<1x1x1x32xf32>
    %184 = vector.shape_cast %183 : vector<1x1x1x32xf32> to vector<1x32xf32>
    %c0_136 = arith.constant 0 : index
    %c5 = arith.constant 5 : index
    %c0_137 = arith.constant 0 : index
    %c0_138 = arith.constant 0 : index
    %185 = vector.load %arg10[%c0_136, %c5, %c0_137, %c0_138] : memref<2x6x1x32xf32, #tpu.memory_space<vmem>>, vector<1x1x1x32xf32>
    %186 = vector.shape_cast %185 : vector<1x1x1x32xf32> to vector<1x32xf32>
    %cst_139 = arith.constant dense<0.000000e+00> : vector<8xf32>
    %187 = vector.multi_reduction <add>, %182, %cst_139 [1] : vector<8x32xf32> to vector<8xf32>
    %188 = vector.shape_cast %187 : vector<8xf32> to vector<8x1xf32>
    %cst_140 = arith.constant 3.200000e+01 : f32
    %189 = vector.broadcast %cst_140 : f32 to vector<8x1xf32>
    %190 = arith.divf %188, %189 : vector<8x1xf32>
    %191 = vector.broadcast %190 : vector<8x1xf32> to vector<8x32xf32>
    %192 = arith.subf %182, %191 : vector<8x32xf32>
    %193 = arith.mulf %192, %192 : vector<8x32xf32>
    %cst_141 = arith.constant dense<0.000000e+00> : vector<8xf32>
    %194 = vector.multi_reduction <add>, %193, %cst_141 [1] : vector<8x32xf32> to vector<8xf32>
    %195 = vector.shape_cast %194 : vector<8xf32> to vector<8x1xf32>
    %cst_142 = arith.constant 3.200000e+01 : f32
    %196 = vector.broadcast %cst_142 : f32 to vector<8x1xf32>
    %197 = arith.divf %195, %196 : vector<8x1xf32>
    %198 = vector.broadcast %190 : vector<8x1xf32> to vector<8x32xf32>
    %199 = arith.subf %182, %198 : vector<8x32xf32>
    %cst_143 = arith.constant 9.99999996E-13 : f32
    %200 = vector.broadcast %cst_143 : f32 to vector<8x1xf32>
    %201 = arith.addf %197, %200 : vector<8x1xf32>
    %202 = math.rsqrt %201 : vector<8x1xf32>
    %203 = vector.broadcast %202 : vector<8x1xf32> to vector<8x32xf32>
    %204 = arith.mulf %199, %203 : vector<8x32xf32>
    %205 = vector.broadcast %184 : vector<1x32xf32> to vector<8x32xf32>
    %206 = arith.mulf %204, %205 : vector<8x32xf32>
    %207 = vector.broadcast %186 : vector<1x32xf32> to vector<8x32xf32>
    %208 = arith.addf %206, %207 : vector<8x32xf32>
    %209 = arith.truncf %208 : vector<8x32xf32> to vector<8x32xbf16>
    %cst_144 = arith.constant 0.000000e+00 : f32
    %210 = vector.broadcast %cst_144 : f32 to vector<8x32xf32>
    %c0_145 = arith.constant 0 : index
    %c1_146 = arith.constant 1 : index
    %c0_147 = arith.constant 0 : index
    %c0_148 = arith.constant 0 : index
    %c0_149 = arith.constant 0 : index
    %211 = vector.load %arg4[%c0_145, %c1_146, %c0_147, %c0_148, %c0_149] : memref<3x2x2x32x16xbf16, #tpu.memory_space<vmem>>, vector<1x1x1x32x16xbf16>
    %212 = vector.shape_cast %211 : vector<1x1x1x32x16xbf16> to vector<32x16xbf16>
    %cst_150 = arith.constant dense<0.000000e+00> : vector<8x16xf32>
    %213 = tpu.matmul %209, %212, %cst_150 {dimension_numbers = #tpu.dot_dimension_numbers<[1], [0], [0], [1], [0, 0, 1, 1], [], []>} : vector<8x32xbf16>, vector<32x16xbf16>, vector<8x16xf32> -> vector<8x16xf32>
    %c0_151 = arith.constant 0 : index
    %c1_152 = arith.constant 1 : index
    %c0_153 = arith.constant 0 : index
    %c0_154 = arith.constant 0 : index
    %c0_155 = arith.constant 0 : index
    %214 = vector.load %arg5[%c0_151, %c1_152, %c0_153, %c0_154, %c0_155] : memref<3x2x2x1x16xf32, #tpu.memory_space<vmem>>, vector<1x1x1x1x16xf32>
    %215 = vector.shape_cast %214 : vector<1x1x1x1x16xf32> to vector<1x16xf32>
    %216 = vector.broadcast %215 : vector<1x16xf32> to vector<8x16xf32>
    %217 = arith.addf %213, %216 : vector<8x16xf32>
    %c1_156 = arith.constant 1 : index
    %c1_157 = arith.constant 1 : index
    %c0_158 = arith.constant 0 : index
    %c0_159 = arith.constant 0 : index
    %c0_160 = arith.constant 0 : index
    %218 = vector.load %arg4[%c1_156, %c1_157, %c0_158, %c0_159, %c0_160] : memref<3x2x2x32x16xbf16, #tpu.memory_space<vmem>>, vector<1x1x1x32x16xbf16>
    %219 = vector.shape_cast %218 : vector<1x1x1x32x16xbf16> to vector<32x16xbf16>
    %cst_161 = arith.constant dense<0.000000e+00> : vector<8x16xf32>
    %220 = tpu.matmul %209, %219, %cst_161 {dimension_numbers = #tpu.dot_dimension_numbers<[1], [0], [0], [1], [0, 0, 1, 1], [], []>} : vector<8x32xbf16>, vector<32x16xbf16>, vector<8x16xf32> -> vector<8x16xf32>
    %c1_162 = arith.constant 1 : index
    %c1_163 = arith.constant 1 : index
    %c0_164 = arith.constant 0 : index
    %c0_165 = arith.constant 0 : index
    %c0_166 = arith.constant 0 : index
    %221 = vector.load %arg5[%c1_162, %c1_163, %c0_164, %c0_165, %c0_166] : memref<3x2x2x1x16xf32, #tpu.memory_space<vmem>>, vector<1x1x1x1x16xf32>
    %222 = vector.shape_cast %221 : vector<1x1x1x1x16xf32> to vector<1x16xf32>
    %223 = vector.broadcast %222 : vector<1x16xf32> to vector<8x16xf32>
    %224 = arith.addf %220, %223 : vector<8x16xf32>
    %c2_167 = arith.constant 2 : index
    %c1_168 = arith.constant 1 : index
    %c0_169 = arith.constant 0 : index
    %c0_170 = arith.constant 0 : index
    %c0_171 = arith.constant 0 : index
    %225 = vector.load %arg4[%c2_167, %c1_168, %c0_169, %c0_170, %c0_171] : memref<3x2x2x32x16xbf16, #tpu.memory_space<vmem>>, vector<1x1x1x32x16xbf16>
    %226 = vector.shape_cast %225 : vector<1x1x1x32x16xbf16> to vector<32x16xbf16>
    %cst_172 = arith.constant dense<0.000000e+00> : vector<8x16xf32>
    %227 = tpu.matmul %209, %226, %cst_172 {dimension_numbers = #tpu.dot_dimension_numbers<[1], [0], [0], [1], [0, 0, 1, 1], [], []>} : vector<8x32xbf16>, vector<32x16xbf16>, vector<8x16xf32> -> vector<8x16xf32>
    %c2_173 = arith.constant 2 : index
    %c1_174 = arith.constant 1 : index
    %c0_175 = arith.constant 0 : index
    %c0_176 = arith.constant 0 : index
    %c0_177 = arith.constant 0 : index
    %228 = vector.load %arg5[%c2_173, %c1_174, %c0_175, %c0_176, %c0_177] : memref<3x2x2x1x16xf32, #tpu.memory_space<vmem>>, vector<1x1x1x1x16xf32>
    %229 = vector.shape_cast %228 : vector<1x1x1x1x16xf32> to vector<1x16xf32>
    %230 = vector.broadcast %229 : vector<1x16xf32> to vector<8x16xf32>
    %231 = arith.addf %227, %230 : vector<8x16xf32>
    %232 = arith.truncf %217 : vector<8x16xf32> to vector<8x16xbf16>
    %233 = arith.truncf %224 : vector<8x16xf32> to vector<8x16xbf16>
    %234 = tpu.transpose %233, [1, 0] : vector<8x16xbf16> -> vector<16x8xbf16>
    %cst_178 = arith.constant dense<0.000000e+00> : vector<8x8xf32>
    %235 = tpu.matmul %232, %234, %cst_178 {dimension_numbers = #tpu.dot_dimension_numbers<[1], [0], [0], [1], [0, 0, 1, 1], [], []>} : vector<8x16xbf16>, vector<16x8xbf16>, vector<8x8xf32> -> vector<8x8xf32>
    %236 = arith.addf %235, %5 : vector<8x8xf32>
    %cst_179 = arith.constant dense<0xFF800000> : vector<8xf32>
    %237 = vector.multi_reduction <maximumf>, %236, %cst_179 [1] : vector<8x8xf32> to vector<8xf32>
    %238 = vector.shape_cast %237 : vector<8xf32> to vector<8x1xf32>
    %239 = vector.broadcast %238 : vector<8x1xf32> to vector<8x8xf32>
    %240 = arith.subf %236, %239 : vector<8x8xf32>
    %241 = math.exp %240 : vector<8x8xf32>
    %cst_180 = arith.constant dense<0.000000e+00> : vector<8xf32>
    %242 = vector.multi_reduction <add>, %241, %cst_180 [1] : vector<8x8xf32> to vector<8xf32>
    %243 = vector.shape_cast %242 : vector<8xf32> to vector<8x1xf32>
    %244 = tpu.reciprocal %243 {approx = true} : vector<8x1xf32> -> vector<8x1xf32>
    %245 = vector.broadcast %244 : vector<8x1xf32> to vector<8x8xf32>
    %246 = arith.mulf %241, %245 : vector<8x8xf32>
    %247 = arith.truncf %246 : vector<8x8xf32> to vector<8x8xbf16>
    %248 = arith.truncf %231 : vector<8x16xf32> to vector<8x16xbf16>
    %cst_181 = arith.constant dense<0.000000e+00> : vector<8x16xf32>
    %249 = tpu.matmul %247, %248, %cst_181 {dimension_numbers = #tpu.dot_dimension_numbers<[1], [0], [0], [1], [0, 0, 1, 1], [], []>} : vector<8x8xbf16>, vector<8x16xbf16>, vector<8x16xf32> -> vector<8x16xf32>
    %250 = arith.truncf %249 : vector<8x16xf32> to vector<8x16xbf16>
    %c1_182 = arith.constant 1 : index
    %c0_183 = arith.constant 0 : index
    %c0_184 = arith.constant 0 : index
    %c0_185 = arith.constant 0 : index
    %251 = vector.load %arg6[%c1_182, %c0_183, %c0_184, %c0_185] : memref<2x2x16x32xbf16, #tpu.memory_space<vmem>>, vector<1x1x16x32xbf16>
    %252 = vector.shape_cast %251 : vector<1x1x16x32xbf16> to vector<16x32xbf16>
    %cst_186 = arith.constant dense<0.000000e+00> : vector<8x32xf32>
    %253 = tpu.matmul %250, %252, %cst_186 {dimension_numbers = #tpu.dot_dimension_numbers<[1], [0], [0], [1], [0, 0, 1, 1], [], []>} : vector<8x16xbf16>, vector<16x32xbf16>, vector<8x32xf32> -> vector<8x32xf32>
    %254 = arith.addf %210, %253 : vector<8x32xf32>
    %c0_187 = arith.constant 0 : index
    %c1_188 = arith.constant 1 : index
    %c1_189 = arith.constant 1 : index
    %c0_190 = arith.constant 0 : index
    %c0_191 = arith.constant 0 : index
    %255 = vector.load %arg4[%c0_187, %c1_188, %c1_189, %c0_190, %c0_191] : memref<3x2x2x32x16xbf16, #tpu.memory_space<vmem>>, vector<1x1x1x32x16xbf16>
    %256 = vector.shape_cast %255 : vector<1x1x1x32x16xbf16> to vector<32x16xbf16>
    %cst_192 = arith.constant dense<0.000000e+00> : vector<8x16xf32>
    %257 = tpu.matmul %209, %256, %cst_192 {dimension_numbers = #tpu.dot_dimension_numbers<[1], [0], [0], [1], [0, 0, 1, 1], [], []>} : vector<8x32xbf16>, vector<32x16xbf16>, vector<8x16xf32> -> vector<8x16xf32>
    %c0_193 = arith.constant 0 : index
    %c1_194 = arith.constant 1 : index
    %c1_195 = arith.constant 1 : index
    %c0_196 = arith.constant 0 : index
    %c0_197 = arith.constant 0 : index
    %258 = vector.load %arg5[%c0_193, %c1_194, %c1_195, %c0_196, %c0_197] : memref<3x2x2x1x16xf32, #tpu.memory_space<vmem>>, vector<1x1x1x1x16xf32>
    %259 = vector.shape_cast %258 : vector<1x1x1x1x16xf32> to vector<1x16xf32>
    %260 = vector.broadcast %259 : vector<1x16xf32> to vector<8x16xf32>
    %261 = arith.addf %257, %260 : vector<8x16xf32>
    %c1_198 = arith.constant 1 : index
    %c1_199 = arith.constant 1 : index
    %c1_200 = arith.constant 1 : index
    %c0_201 = arith.constant 0 : index
    %c0_202 = arith.constant 0 : index
    %262 = vector.load %arg4[%c1_198, %c1_199, %c1_200, %c0_201, %c0_202] : memref<3x2x2x32x16xbf16, #tpu.memory_space<vmem>>, vector<1x1x1x32x16xbf16>
    %263 = vector.shape_cast %262 : vector<1x1x1x32x16xbf16> to vector<32x16xbf16>
    %cst_203 = arith.constant dense<0.000000e+00> : vector<8x16xf32>
    %264 = tpu.matmul %209, %263, %cst_203 {dimension_numbers = #tpu.dot_dimension_numbers<[1], [0], [0], [1], [0, 0, 1, 1], [], []>} : vector<8x32xbf16>, vector<32x16xbf16>, vector<8x16xf32> -> vector<8x16xf32>
    %c1_204 = arith.constant 1 : index
    %c1_205 = arith.constant 1 : index
    %c1_206 = arith.constant 1 : index
    %c0_207 = arith.constant 0 : index
    %c0_208 = arith.constant 0 : index
    %265 = vector.load %arg5[%c1_204, %c1_205, %c1_206, %c0_207, %c0_208] : memref<3x2x2x1x16xf32, #tpu.memory_space<vmem>>, vector<1x1x1x1x16xf32>
    %266 = vector.shape_cast %265 : vector<1x1x1x1x16xf32> to vector<1x16xf32>
    %267 = vector.broadcast %266 : vector<1x16xf32> to vector<8x16xf32>
    %268 = arith.addf %264, %267 : vector<8x16xf32>
    %c2_209 = arith.constant 2 : index
    %c1_210 = arith.constant 1 : index
    %c1_211 = arith.constant 1 : index
    %c0_212 = arith.constant 0 : index
    %c0_213 = arith.constant 0 : index
    %269 = vector.load %arg4[%c2_209, %c1_210, %c1_211, %c0_212, %c0_213] : memref<3x2x2x32x16xbf16, #tpu.memory_space<vmem>>, vector<1x1x1x32x16xbf16>
    %270 = vector.shape_cast %269 : vector<1x1x1x32x16xbf16> to vector<32x16xbf16>
    %cst_214 = arith.constant dense<0.000000e+00> : vector<8x16xf32>
    %271 = tpu.matmul %209, %270, %cst_214 {dimension_numbers = #tpu.dot_dimension_numbers<[1], [0], [0], [1], [0, 0, 1, 1], [], []>} : vector<8x32xbf16>, vector<32x16xbf16>, vector<8x16xf32> -> vector<8x16xf32>
    %c2_215 = arith.constant 2 : index
    %c1_216 = arith.constant 1 : index
    %c1_217 = arith.constant 1 : index
    %c0_218 = arith.constant 0 : index
    %c0_219 = arith.constant 0 : index
    %272 = vector.load %arg5[%c2_215, %c1_216, %c1_217, %c0_218, %c0_219] : memref<3x2x2x1x16xf32, #tpu.memory_space<vmem>>, vector<1x1x1x1x16xf32>
    %273 = vector.shape_cast %272 : vector<1x1x1x1x16xf32> to vector<1x16xf32>
    %274 = vector.broadcast %273 : vector<1x16xf32> to vector<8x16xf32>
    %275 = arith.addf %271, %274 : vector<8x16xf32>
    %276 = arith.truncf %261 : vector<8x16xf32> to vector<8x16xbf16>
    %277 = arith.truncf %268 : vector<8x16xf32> to vector<8x16xbf16>
    %278 = tpu.transpose %277, [1, 0] : vector<8x16xbf16> -> vector<16x8xbf16>
    %cst_220 = arith.constant dense<0.000000e+00> : vector<8x8xf32>
    %279 = tpu.matmul %276, %278, %cst_220 {dimension_numbers = #tpu.dot_dimension_numbers<[1], [0], [0], [1], [0, 0, 1, 1], [], []>} : vector<8x16xbf16>, vector<16x8xbf16>, vector<8x8xf32> -> vector<8x8xf32>
    %280 = arith.addf %279, %5 : vector<8x8xf32>
    %cst_221 = arith.constant dense<0xFF800000> : vector<8xf32>
    %281 = vector.multi_reduction <maximumf>, %280, %cst_221 [1] : vector<8x8xf32> to vector<8xf32>
    %282 = vector.shape_cast %281 : vector<8xf32> to vector<8x1xf32>
    %283 = vector.broadcast %282 : vector<8x1xf32> to vector<8x8xf32>
    %284 = arith.subf %280, %283 : vector<8x8xf32>
    %285 = math.exp %284 : vector<8x8xf32>
    %cst_222 = arith.constant dense<0.000000e+00> : vector<8xf32>
    %286 = vector.multi_reduction <add>, %285, %cst_222 [1] : vector<8x8xf32> to vector<8xf32>
    %287 = vector.shape_cast %286 : vector<8xf32> to vector<8x1xf32>
    %288 = tpu.reciprocal %287 {approx = true} : vector<8x1xf32> -> vector<8x1xf32>
    %289 = vector.broadcast %288 : vector<8x1xf32> to vector<8x8xf32>
    %290 = arith.mulf %285, %289 : vector<8x8xf32>
    %291 = arith.truncf %290 : vector<8x8xf32> to vector<8x8xbf16>
    %292 = arith.truncf %275 : vector<8x16xf32> to vector<8x16xbf16>
    %cst_223 = arith.constant dense<0.000000e+00> : vector<8x16xf32>
    %293 = tpu.matmul %291, %292, %cst_223 {dimension_numbers = #tpu.dot_dimension_numbers<[1], [0], [0], [1], [0, 0, 1, 1], [], []>} : vector<8x8xbf16>, vector<8x16xbf16>, vector<8x16xf32> -> vector<8x16xf32>
    %294 = arith.truncf %293 : vector<8x16xf32> to vector<8x16xbf16>
    %c1_224 = arith.constant 1 : index
    %c1_225 = arith.constant 1 : index
    %c0_226 = arith.constant 0 : index
    %c0_227 = arith.constant 0 : index
    %295 = vector.load %arg6[%c1_224, %c1_225, %c0_226, %c0_227] : memref<2x2x16x32xbf16, #tpu.memory_space<vmem>>, vector<1x1x16x32xbf16>
    %296 = vector.shape_cast %295 : vector<1x1x16x32xbf16> to vector<16x32xbf16>
    %cst_228 = arith.constant dense<0.000000e+00> : vector<8x32xf32>
    %297 = tpu.matmul %294, %296, %cst_228 {dimension_numbers = #tpu.dot_dimension_numbers<[1], [0], [0], [1], [0, 0, 1, 1], [], []>} : vector<8x16xbf16>, vector<16x32xbf16>, vector<8x32xf32> -> vector<8x32xf32>
    %298 = arith.addf %254, %297 : vector<8x32xf32>
    %c1_229 = arith.constant 1 : index
    %c0_230 = arith.constant 0 : index
    %c0_231 = arith.constant 0 : index
    %c0_232 = arith.constant 0 : index
    %299 = vector.load %arg10[%c1_229, %c0_230, %c0_231, %c0_232] : memref<2x6x1x32xf32, #tpu.memory_space<vmem>>, vector<1x1x1x32xf32>
    %300 = vector.shape_cast %299 : vector<1x1x1x32xf32> to vector<1x32xf32>
    %301 = vector.broadcast %300 : vector<1x32xf32> to vector<8x32xf32>
    %302 = arith.addf %298, %301 : vector<8x32xf32>
    %303 = arith.addf %208, %302 : vector<8x32xf32>
    %c1_233 = arith.constant 1 : index
    %c1_234 = arith.constant 1 : index
    %c0_235 = arith.constant 0 : index
    %c0_236 = arith.constant 0 : index
    %304 = vector.load %arg10[%c1_233, %c1_234, %c0_235, %c0_236] : memref<2x6x1x32xf32, #tpu.memory_space<vmem>>, vector<1x1x1x32xf32>
    %305 = vector.shape_cast %304 : vector<1x1x1x32xf32> to vector<1x32xf32>
    %c1_237 = arith.constant 1 : index
    %c2_238 = arith.constant 2 : index
    %c0_239 = arith.constant 0 : index
    %c0_240 = arith.constant 0 : index
    %306 = vector.load %arg10[%c1_237, %c2_238, %c0_239, %c0_240] : memref<2x6x1x32xf32, #tpu.memory_space<vmem>>, vector<1x1x1x32xf32>
    %307 = vector.shape_cast %306 : vector<1x1x1x32xf32> to vector<1x32xf32>
    %cst_241 = arith.constant dense<0.000000e+00> : vector<8xf32>
    %308 = vector.multi_reduction <add>, %303, %cst_241 [1] : vector<8x32xf32> to vector<8xf32>
    %309 = vector.shape_cast %308 : vector<8xf32> to vector<8x1xf32>
    %cst_242 = arith.constant 3.200000e+01 : f32
    %310 = vector.broadcast %cst_242 : f32 to vector<8x1xf32>
    %311 = arith.divf %309, %310 : vector<8x1xf32>
    %312 = vector.broadcast %311 : vector<8x1xf32> to vector<8x32xf32>
    %313 = arith.subf %303, %312 : vector<8x32xf32>
    %314 = arith.mulf %313, %313 : vector<8x32xf32>
    %cst_243 = arith.constant dense<0.000000e+00> : vector<8xf32>
    %315 = vector.multi_reduction <add>, %314, %cst_243 [1] : vector<8x32xf32> to vector<8xf32>
    %316 = vector.shape_cast %315 : vector<8xf32> to vector<8x1xf32>
    %cst_244 = arith.constant 3.200000e+01 : f32
    %317 = vector.broadcast %cst_244 : f32 to vector<8x1xf32>
    %318 = arith.divf %316, %317 : vector<8x1xf32>
    %319 = vector.broadcast %311 : vector<8x1xf32> to vector<8x32xf32>
    %320 = arith.subf %303, %319 : vector<8x32xf32>
    %cst_245 = arith.constant 9.99999996E-13 : f32
    %321 = vector.broadcast %cst_245 : f32 to vector<8x1xf32>
    %322 = arith.addf %318, %321 : vector<8x1xf32>
    %323 = math.rsqrt %322 : vector<8x1xf32>
    %324 = vector.broadcast %323 : vector<8x1xf32> to vector<8x32xf32>
    %325 = arith.mulf %320, %324 : vector<8x32xf32>
    %326 = vector.broadcast %305 : vector<1x32xf32> to vector<8x32xf32>
    %327 = arith.mulf %325, %326 : vector<8x32xf32>
    %328 = vector.broadcast %307 : vector<1x32xf32> to vector<8x32xf32>
    %329 = arith.addf %327, %328 : vector<8x32xf32>
    %330 = arith.truncf %329 : vector<8x32xf32> to vector<8x32xbf16>
    %c1_246 = arith.constant 1 : index
    %c0_247 = arith.constant 0 : index
    %c0_248 = arith.constant 0 : index
    %331 = vector.load %arg7[%c1_246, %c0_247, %c0_248] : memref<2x32x64xbf16, #tpu.memory_space<vmem>>, vector<1x32x64xbf16>
    %332 = vector.shape_cast %331 : vector<1x32x64xbf16> to vector<32x64xbf16>
    %cst_249 = arith.constant dense<0.000000e+00> : vector<8x64xf32>
    %333 = tpu.matmul %330, %332, %cst_249 {dimension_numbers = #tpu.dot_dimension_numbers<[1], [0], [0], [1], [0, 0, 1, 1], [], []>} : vector<8x32xbf16>, vector<32x64xbf16>, vector<8x64xf32> -> vector<8x64xf32>
    %c1_250 = arith.constant 1 : index
    %c0_251 = arith.constant 0 : index
    %c0_252 = arith.constant 0 : index
    %334 = vector.load %arg8[%c1_250, %c0_251, %c0_252] : memref<2x1x64xf32, #tpu.memory_space<vmem>>, vector<1x1x64xf32>
    %335 = vector.shape_cast %334 : vector<1x1x64xf32> to vector<1x64xf32>
    %336 = vector.broadcast %335 : vector<1x64xf32> to vector<8x64xf32>
    %337 = arith.addf %333, %336 : vector<8x64xf32>
    %338 = arith.mulf %337, %337 : vector<8x64xf32>
    %339 = arith.mulf %337, %338 : vector<8x64xf32>
    %cst_253 = arith.constant 4.471500e-02 : f32
    %340 = vector.broadcast %cst_253 : f32 to vector<8x64xf32>
    %341 = arith.mulf %340, %339 : vector<8x64xf32>
    %342 = arith.addf %337, %341 : vector<8x64xf32>
    %cst_254 = arith.constant 0.797884583 : f32
    %343 = vector.broadcast %cst_254 : f32 to vector<8x64xf32>
    %344 = arith.mulf %343, %342 : vector<8x64xf32>
    %345 = math.tanh %344 : vector<8x64xf32>
    %cst_255 = arith.constant 1.000000e+00 : f32
    %346 = vector.broadcast %cst_255 : f32 to vector<8x64xf32>
    %347 = arith.addf %346, %345 : vector<8x64xf32>
    %cst_256 = arith.constant 5.000000e-01 : f32
    %348 = vector.broadcast %cst_256 : f32 to vector<8x64xf32>
    %349 = arith.mulf %348, %347 : vector<8x64xf32>
    %350 = arith.mulf %337, %349 : vector<8x64xf32>
    %351 = arith.truncf %350 : vector<8x64xf32> to vector<8x64xbf16>
    %c1_257 = arith.constant 1 : index
    %c0_258 = arith.constant 0 : index
    %c0_259 = arith.constant 0 : index
    %352 = vector.load %arg9[%c1_257, %c0_258, %c0_259] : memref<2x64x32xbf16, #tpu.memory_space<vmem>>, vector<1x64x32xbf16>
    %353 = vector.shape_cast %352 : vector<1x64x32xbf16> to vector<64x32xbf16>
    %cst_260 = arith.constant dense<0.000000e+00> : vector<8x32xf32>
    %354 = tpu.matmul %351, %353, %cst_260 {dimension_numbers = #tpu.dot_dimension_numbers<[1], [0], [0], [1], [0, 0, 1, 1], [], []>} : vector<8x64xbf16>, vector<64x32xbf16>, vector<8x32xf32> -> vector<8x32xf32>
    %c1_261 = arith.constant 1 : index
    %c3_262 = arith.constant 3 : index
    %c0_263 = arith.constant 0 : index
    %c0_264 = arith.constant 0 : index
    %355 = vector.load %arg10[%c1_261, %c3_262, %c0_263, %c0_264] : memref<2x6x1x32xf32, #tpu.memory_space<vmem>>, vector<1x1x1x32xf32>
    %356 = vector.shape_cast %355 : vector<1x1x1x32xf32> to vector<1x32xf32>
    %357 = vector.broadcast %356 : vector<1x32xf32> to vector<8x32xf32>
    %358 = arith.addf %354, %357 : vector<8x32xf32>
    %359 = arith.addf %329, %358 : vector<8x32xf32>
    %c1_265 = arith.constant 1 : index
    %c4_266 = arith.constant 4 : index
    %c0_267 = arith.constant 0 : index
    %c0_268 = arith.constant 0 : index
    %360 = vector.load %arg10[%c1_265, %c4_266, %c0_267, %c0_268] : memref<2x6x1x32xf32, #tpu.memory_space<vmem>>, vector<1x1x1x32xf32>
    %361 = vector.shape_cast %360 : vector<1x1x1x32xf32> to vector<1x32xf32>
    %c1_269 = arith.constant 1 : index
    %c5_270 = arith.constant 5 : index
    %c0_271 = arith.constant 0 : index
    %c0_272 = arith.constant 0 : index
    %362 = vector.load %arg10[%c1_269, %c5_270, %c0_271, %c0_272] : memref<2x6x1x32xf32, #tpu.memory_space<vmem>>, vector<1x1x1x32xf32>
    %363 = vector.shape_cast %362 : vector<1x1x1x32xf32> to vector<1x32xf32>
    %cst_273 = arith.constant dense<0.000000e+00> : vector<8xf32>
    %364 = vector.multi_reduction <add>, %359, %cst_273 [1] : vector<8x32xf32> to vector<8xf32>
    %365 = vector.shape_cast %364 : vector<8xf32> to vector<8x1xf32>
    %cst_274 = arith.constant 3.200000e+01 : f32
    %366 = vector.broadcast %cst_274 : f32 to vector<8x1xf32>
    %367 = arith.divf %365, %366 : vector<8x1xf32>
    %368 = vector.broadcast %367 : vector<8x1xf32> to vector<8x32xf32>
    %369 = arith.subf %359, %368 : vector<8x32xf32>
    %370 = arith.mulf %369, %369 : vector<8x32xf32>
    %cst_275 = arith.constant dense<0.000000e+00> : vector<8xf32>
    %371 = vector.multi_reduction <add>, %370, %cst_275 [1] : vector<8x32xf32> to vector<8xf32>
    %372 = vector.shape_cast %371 : vector<8xf32> to vector<8x1xf32>
    %cst_276 = arith.constant 3.200000e+01 : f32
    %373 = vector.broadcast %cst_276 : f32 to vector<8x1xf32>
    %374 = arith.divf %372, %373 : vector<8x1xf32>
    %375 = vector.broadcast %367 : vector<8x1xf32> to vector<8x32xf32>
    %376 = arith.subf %359, %375 : vector<8x32xf32>
    %cst_277 = arith.constant 9.99999996E-13 : f32
    %377 = vector.broadcast %cst_277 : f32 to vector<8x1xf32>
    %378 = arith.addf %374, %377 : vector<8x1xf32>
    %379 = math.rsqrt %378 : vector<8x1xf32>
    %380 = vector.broadcast %379 : vector<8x1xf32> to vector<8x32xf32>
    %381 = arith.mulf %376, %380 : vector<8x32xf32>
    %382 = vector.broadcast %361 : vector<1x32xf32> to vector<8x32xf32>
    %383 = arith.mulf %381, %382 : vector<8x32xf32>
    %384 = vector.broadcast %363 : vector<1x32xf32> to vector<8x32xf32>
    %385 = arith.addf %383, %384 : vector<8x32xf32>
    %386 = vector.extract_strided_slice %385 {offsets = [0, 0], sizes = [1, 32], strides = [1, 1]} : vector<8x32xf32> to vector<1x32xf32>
    %c0_278 = arith.constant 0 : index
    %c0_279 = arith.constant 0 : index
    %c0_280 = arith.constant 0 : index
    %387 = vector.load %arg11[%c0_278, %c0_279, %c0_280] : memref<1x1x32xf32, #tpu.memory_space<vmem>>, vector<1x1x32xf32>
    %388 = vector.shape_cast %387 : vector<1x1x32xf32> to vector<1x32xf32>
    %389 = vector.shape_cast %386 : vector<1x32xf32> to vector<1x1x32xf32>
    tpu.vector_store %arg11[%c0_278, %c0_279, %c0_280], %389 {strides = array<i32>} : memref<1x1x32xf32, #tpu.memory_space<vmem>>, vector<1x1x32xf32>,
    return
  }
  func.func @transform_0(%arg0: i32) -> (i32, i32, i32) {
    %c0_i32 = arith.constant 0 : i32
    %c0_i32_0 = arith.constant 0 : i32
    %c0_i32_1 = arith.constant 0 : i32
    return %arg0, %c0_i32, %c0_i32_0 : i32, i32, i32
  }
  func.func @transform_1(%arg0: i32) -> (i32, i32, i32) {
    %c0_i32 = arith.constant 0 : i32
    %c0_i32_0 = arith.constant 0 : i32
    %c0_i32_1 = arith.constant 0 : i32
    return %arg0, %c0_i32, %c0_i32_0 : i32, i32, i32
  }
  func.func @transform_2(%arg0: i32) -> (i32, i32, i32) {
    %c0_i32 = arith.constant 0 : i32
    %c0_i32_0 = arith.constant 0 : i32
    %c0_i32_1 = arith.constant 0 : i32
    %c0_i32_2 = arith.constant 0 : i32
    return %c0_i32, %c0_i32_0, %c0_i32_1 : i32, i32, i32
  }
  func.func @transform_3(%arg0: i32) -> (i32, i32, i32, i32, i32) {
    %c0_i32 = arith.constant 0 : i32
    %c0_i32_0 = arith.constant 0 : i32
    %c0_i32_1 = arith.constant 0 : i32
    %c0_i32_2 = arith.constant 0 : i32
    %c0_i32_3 = arith.constant 0 : i32
    %c0_i32_4 = arith.constant 0 : i32
    return %c0_i32, %c0_i32_0, %c0_i32_1, %c0_i32_2, %c0_i32_3 : i32, i32, i32, i32, i32
  }
  func.func @transform_4(%arg0: i32) -> (i32, i32, i32, i32, i32) {
    %c0_i32 = arith.constant 0 : i32
    %c0_i32_0 = arith.constant 0 : i32
    %c0_i32_1 = arith.constant 0 : i32
    %c0_i32_2 = arith.constant 0 : i32
    %c0_i32_3 = arith.constant 0 : i32
    %c0_i32_4 = arith.constant 0 : i32
    return %c0_i32, %c0_i32_0, %c0_i32_1, %c0_i32_2, %c0_i32_3 : i32, i32, i32, i32, i32
  }
  func.func @transform_5(%arg0: i32) -> (i32, i32, i32, i32) {
    %c0_i32 = arith.constant 0 : i32
    %c0_i32_0 = arith.constant 0 : i32
    %c0_i32_1 = arith.constant 0 : i32
    %c0_i32_2 = arith.constant 0 : i32
    %c0_i32_3 = arith.constant 0 : i32
    return %c0_i32, %c0_i32_0, %c0_i32_1, %c0_i32_2 : i32, i32, i32, i32
  }
  func.func @transform_6(%arg0: i32) -> (i32, i32, i32) {
    %c0_i32 = arith.constant 0 : i32
    %c0_i32_0 = arith.constant 0 : i32
    %c0_i32_1 = arith.constant 0 : i32
    %c0_i32_2 = arith.constant 0 : i32
    return %c0_i32, %c0_i32_0, %c0_i32_1 : i32, i32, i32
  }
  func.func @transform_7(%arg0: i32) -> (i32, i32, i32) {
    %c0_i32 = arith.constant 0 : i32
    %c0_i32_0 = arith.constant 0 : i32
    %c0_i32_1 = arith.constant 0 : i32
    %c0_i32_2 = arith.constant 0 : i32
    return %c0_i32, %c0_i32_0, %c0_i32_1 : i32, i32, i32
  }
  func.func @transform_8(%arg0: i32) -> (i32, i32, i32) {
    %c0_i32 = arith.constant 0 : i32
    %c0_i32_0 = arith.constant 0 : i32
    %c0_i32_1 = arith.constant 0 : i32
    %c0_i32_2 = arith.constant 0 : i32
    return %c0_i32, %c0_i32_0, %c0_i32_1 : i32, i32, i32
  }
  func.func @transform_9(%arg0: i32) -> (i32, i32, i32, i32) {
    %c0_i32 = arith.constant 0 : i32
    %c0_i32_0 = arith.constant 0 : i32
    %c0_i32_1 = arith.constant 0 : i32
    %c0_i32_2 = arith.constant 0 : i32
    %c0_i32_3 = arith.constant 0 : i32
    return %c0_i32, %c0_i32_0, %c0_i32_1, %c0_i32_2 : i32, i32, i32, i32
  }
  func.func @transform_10(%arg0: i32) -> (i32, i32, i32) {
    %c0_i32 = arith.constant 0 : i32
    %c0_i32_0 = arith.constant 0 : i32
    %c0_i32_1 = arith.constant 0 : i32
    return %arg0, %c0_i32, %c0_i32_0 : i32, i32, i32
  }
}

</mosaic_0001>

<llo_original>
// kernel: ner_model_forward.1
$region0: #{ner_model_forward.1}
  #allocation0 [shape = 'u32[]', space=smem, size = 0x4, offset = 0x4, fixed_abs, tag = 'smem constant byte address 0x4 - core index']
  #allocation1 [shape = 'u32[144,128]{1,0:T(1,128)}', space=vmem, size = 0x12000, scoped, tag = 'internal scratch']
  %s0 = inlined_call_operand.vmem [shape: f32[2,8,32], index: 0, kind: input, shape index: {}]
  %s1 = inlined_call_operand.vmem [shape: f32[2,1,8], index: 1, kind: input, shape index: {}]
  %s2 = inlined_call_operand.vmem [shape: f32[2,1,32], index: 2, kind: input, shape index: {}]
  %s3 = inlined_call_operand.vmem [shape: bf16[3,2,2,32,16], index: 3, kind: input, shape index: {}]
  %s4 = inlined_call_operand.vmem [shape: f32[3,2,2,1,16], index: 4, kind: input, shape index: {}]
  %s5 = inlined_call_operand.vmem [shape: bf16[2,2,16,32], index: 5, kind: input, shape index: {}]
  %s6 = inlined_call_operand.vmem [shape: bf16[2,32,64], index: 6, kind: input, shape index: {}]
  %s7 = inlined_call_operand.vmem [shape: f32[2,1,64], index: 7, kind: input, shape index: {}]
  %s8 = inlined_call_operand.vmem [shape: bf16[2,64,32], index: 8, kind: input, shape index: {}]
  %s9 = inlined_call_operand.vmem [shape: f32[2,6,1,32], index: 9, kind: input, shape index: {}]
  %s10 = inlined_call_operand.hbm [shape: f32[2,1,32], index: 10, kind: output, shape index: {}]
  %s11 = sld [smem:[#allocation0]]
  $region73: #{ner_model_forward.1} parent=0
    _
  %s13 = ssub.s32 1, %s11
  %s14 = scalar_select 0, %s13, %s11
  $region1: #{ner_model_forward.1} parent=0
    #allocation2 [shape = 'u8[1024]{0}', space=vmem, size = 0x400, scoped, tag = 'output window, operand 0']
    #allocation3 [shape = 's32[2]{0}', space=sflag, size = 0x8, scoped, tag = 'scoped memory for ner_model_forward.1']
    %15 = vsyncpa [#allocation3], 0
    %s16 = scalar_lea.sflag [#allocation3], 1
    %17 = vsyncpa %s16, 0
    loop: start=0, step=1, limit=4
    $region2: #{ner_model_forward.1} parent=1 // loop_pre_header
      _
    $region3: #{ner_model_forward.1} parent=1 // loop_header
      %s19 = sphi 0, %s23
      %p20 = scmp.ge.s32.totalorder %s19, 4
      %s29 = sphi 0, %s31
      %s32 = sphi 0, %s29
      %s33 = sphi 0, %s32
      %s49 = sphi 0, %s33
      %s55 = sphi 0, %s57
      %s58 = sphi 0, %s55
      %s59 = sphi 0, %s58
      %s75 = sphi 0, %s59
      %s79 = sphi 0, %s79
      %s81 = sphi 0, %s79
      %s82 = sphi 0, %s81
      %s96 = sphi 0, %s82
      %s100 = sphi 0, %s100
      %s102 = sphi 0, %s100
      %s103 = sphi 0, %s102
      %s117 = sphi 0, %s103
      %s121 = sphi 0, %s121
      %s123 = sphi 0, %s121
      %s124 = sphi 0, %s123
      %s138 = sphi 0, %s124
      %s142 = sphi 0, %s142
      %s144 = sphi 0, %s142
      %s145 = sphi 0, %s144
      %s159 = sphi 0, %s145
      %s163 = sphi 0, %s163
      %s165 = sphi 0, %s163
      %s166 = sphi 0, %s165
      %s180 = sphi 0, %s166
      %s184 = sphi 0, %s184
      %s186 = sphi 0, %s184
      %s187 = sphi 0, %s186
      %s201 = sphi 0, %s187
      %s205 = sphi 0, %s205
      %s207 = sphi 0, %s205
      %s208 = sphi 0, %s207
      %s222 = sphi 0, %s208
      %s226 = sphi 0, %s226
      %s228 = sphi 0, %s226
      %s229 = sphi 0, %s228
      %s243 = sphi 0, %s229
      %s249 = sphi 0, %s251
      %s252 = sphi 0, %s249
      %s253 = sphi 0, %s252
      %s269 = sphi 0, %s253
    $region4: #{ner_model_forward.1} parent=1 // loop_header_branch
      %22 = sbr.rel (%p20) target = $region8
    $region5: #{ner_model_forward.1} parent=1 // loop_body
      %s24 = ssub.s32 %s19, 1
      %s25 = ssub.s32 %s19, 2
      %s26 = sadd.s32 %s19, 1
      %s27 = ssub.s32 %s19, %s26
      %p28 = scmp.eq.s32.totalorder %s27, 0
      %s30 = sadd.s32 %s29, 1
      %s31 = scalar_select %p28, %s29, %s30
      %p34 = pneg %p28
      %p35 = scmp.eq.s32.totalorder %s19, 1
      %p36 = por %p34, %p35
      %p37 = scmp.ne.s32.totalorder %s29, %s32
      %p38 = scmp.eq.s32.totalorder %s19, 0
      %p39 = por %p37, %p38
      %p40 = scmp.ne.s32.totalorder %s29, %s32
      %p41 = scmp.eq.s32.totalorder %s24, 1
      %p42 = por %p40, %p41
      %p43 = scmp.ne.s32.totalorder %s32, %s33
      %p44 = scmp.eq.s32.totalorder %s24, 0
      %p45 = por %p43, %p44
      %p46 = scmp.ne.s32.totalorder %s32, %s33
      %p47 = scmp.eq.s32.totalorder %s25, 1
      %p48 = por %p46, %p47
      %p50 = scmp.ne.s32.totalorder %s33, %s49
      %p51 = scmp.eq.s32.totalorder %s25, 0
      %p52 = por %p50, %p51
      %s53 = ssub.s32 %s19, %s26
      %p54 = scmp.eq.s32.totalorder %s53, 0
      %s56 = sadd.s32 %s55, 1
      %s57 = scalar_select %p54, %s55, %s56
      %p60 = pneg %p54
      %p61 = scmp.eq.s32.totalorder %s19, 1
      %p62 = por %p60, %p61
      %p63 = scmp.ne.s32.totalorder %s55, %s58
      %p64 = scmp.eq.s32.totalorder %s19, 0
      %p65 = por %p63, %p64
      %p66 = scmp.ne.s32.totalorder %s55, %s58
      %p67 = scmp.eq.s32.totalorder %s24, 1
      %p68 = por %p66, %p67
      %p69 = scmp.ne.s32.totalorder %s58, %s59
      %p70 = scmp.eq.s32.totalorder %s24, 0
      %p71 = por %p69, %p70
      %p72 = scmp.ne.s32.totalorder %s58, %s59
      %p73 = scmp.eq.s32.totalorder %s25, 1
      %p74 = por %p72, %p73
      %p76 = scmp.ne.s32.totalorder %s59, %s75
      %p77 = scmp.eq.s32.totalorder %s25, 0
      %p78 = por %p76, %p77
      %s80 = sadd.s32 %s79, 1
      %p83 = scmp.eq.s32.totalorder %s19, 1
      %p84 = scmp.ne.s32.totalorder %s79, %s81
      %p85 = scmp.eq.s32.totalorder %s19, 0
      %p86 = por %p84, %p85
      %p87 = scmp.ne.s32.totalorder %s79, %s81
      %p88 = scmp.eq.s32.totalorder %s24, 1
      %p89 = por %p87, %p88
      %p90 = scmp.ne.s32.totalorder %s81, %s82
      %p91 = scmp.eq.s32.totalorder %s24, 0
      %p92 = por %p90, %p91
      %p93 = scmp.ne.s32.totalorder %s81, %s82
      %p94 = scmp.eq.s32.totalorder %s25, 1
      %p95 = por %p93, %p94
      %p97 = scmp.ne.s32.totalorder %s82, %s96
      %p98 = scmp.eq.s32.totalorder %s25, 0
      %p99 = por %p97, %p98
      %s101 = sadd.s32 %s100, 1
      %p104 = scmp.eq.s32.totalorder %s19, 1
      %p105 = scmp.ne.s32.totalorder %s100, %s102
      %p106 = scmp.eq.s32.totalorder %s19, 0
      %p107 = por %p105, %p106
      %p108 = scmp.ne.s32.totalorder %s100, %s102
      %p109 = scmp.eq.s32.totalorder %s24, 1
      %p110 = por %p108, %p109
      %p111 = scmp.ne.s32.totalorder %s102, %s103
      %p112 = scmp.eq.s32.totalorder %s24, 0
      %p113 = por %p111, %p112
      %p114 = scmp.ne.s32.totalorder %s102, %s103
      %p115 = scmp.eq.s32.totalorder %s25, 1
      %p116 = por %p114, %p115
      %p118 = scmp.ne.s32.totalorder %s103, %s117
      %p119 = scmp.eq.s32.totalorder %s25, 0
      %p120 = por %p118, %p119
      %s122 = sadd.s32 %s121, 1
      %p125 = scmp.eq.s32.totalorder %s19, 1
      %p126 = scmp.ne.s32.totalorder %s121, %s123
      %p127 = scmp.eq.s32.totalorder %s19, 0
      %p128 = por %p126, %p127
      %p129 = scmp.ne.s32.totalorder %s121, %s123
      %p130 = scmp.eq.s32.totalorder %s24, 1
      %p131 = por %p129, %p130
      %p132 = scmp.ne.s32.totalorder %s123, %s124
      %p133 = scmp.eq.s32.totalorder %s24, 0
      %p134 = por %p132, %p133
      %p135 = scmp.ne.s32.totalorder %s123, %s124
      %p136 = scmp.eq.s32.totalorder %s25, 1
      %p137 = por %p135, %p136
      %p139 = scmp.ne.s32.totalorder %s124, %s138
      %p140 = scmp.eq.s32.totalorder %s25, 0
      %p141 = por %p139, %p140
      %s143 = sadd.s32 %s142, 1
      %p146 = scmp.eq.s32.totalorder %s19, 1
      %p147 = scmp.ne.s32.totalorder %s142, %s144
      %p148 = scmp.eq.s32.totalorder %s19, 0
      %p149 = por %p147, %p148
      %p150 = scmp.ne.s32.totalorder %s142, %s144
      %p151 = scmp.eq.s32.totalorder %s24, 1
      %p152 = por %p150, %p151
      %p153 = scmp.ne.s32.totalorder %s144, %s145
      %p154 = scmp.eq.s32.totalorder %s24, 0
      %p155 = por %p153, %p154
      %p156 = scmp.ne.s32.totalorder %s144, %s145
      %p157 = scmp.eq.s32.totalorder %s25, 1
      %p158 = por %p156, %p157
      %p160 = scmp.ne.s32.totalorder %s145, %s159
      %p161 = scmp.eq.s32.totalorder %s25, 0
      %p162 = por %p160, %p161
      %s164 = sadd.s32 %s163, 1
      %p167 = scmp.eq.s32.totalorder %s19, 1
      %p168 = scmp.ne.s32.totalorder %s163, %s165
      %p169 = scmp.eq.s32.totalorder %s19, 0
      %p170 = por %p168, %p169
      %p171 = scmp.ne.s32.totalorder %s163, %s165
      %p172 = scmp.eq.s32.totalorder %s24, 1
      %p173 = por %p171, %p172
      %p174 = scmp.ne.s32.totalorder %s165, %s166
      %p175 = scmp.eq.s32.totalorder %s24, 0
      %p176 = por %p174, %p175
      %p177 = scmp.ne.s32.totalorder %s165, %s166
      %p178 = scmp.eq.s32.totalorder %s25, 1
      %p179 = por %p177, %p178
      %p181 = scmp.ne.s32.totalorder %s166, %s180
      %p182 = scmp.eq.s32.totalorder %s25, 0
      %p183 = por %p181, %p182
      %s185 = sadd.s32 %s184, 1
      %p188 = scmp.eq.s32.totalorder %s19, 1
      %p189 = scmp.ne.s32.totalorder %s184, %s186
      %p190 = scmp.eq.s32.totalorder %s19, 0
      %p191 = por %p189, %p190
      %p192 = scmp.ne.s32.totalorder %s184, %s186
      %p193 = scmp.eq.s32.totalorder %s24, 1
      %p194 = por %p192, %p193
      %p195 = scmp.ne.s32.totalorder %s186, %s187
      %p196 = scmp.eq.s32.totalorder %s24, 0
      %p197 = por %p195, %p196
      %p198 = scmp.ne.s32.totalorder %s186, %s187
      %p199 = scmp.eq.s32.totalorder %s25, 1
      %p200 = por %p198, %p199
      %p202 = scmp.ne.s32.totalorder %s187, %s201
      %p203 = scmp.eq.s32.totalorder %s25, 0
      %p204 = por %p202, %p203
      %s206 = sadd.s32 %s205, 1
      %p209 = scmp.eq.s32.totalorder %s19, 1
      %p210 = scmp.ne.s32.totalorder %s205, %s207
      %p211 = scmp.eq.s32.totalorder %s19, 0
      %p212 = por %p210, %p211
      %p213 = scmp.ne.s32.totalorder %s205, %s207
      %p214 = scmp.eq.s32.totalorder %s24, 1
      %p215 = por %p213, %p214
      %p216 = scmp.ne.s32.totalorder %s207, %s208
      %p217 = scmp.eq.s32.totalorder %s24, 0
      %p218 = por %p216, %p217
      %p219 = scmp.ne.s32.totalorder %s207, %s208
      %p220 = scmp.eq.s32.totalorder %s25, 1
      %p221 = por %p219, %p220
      %p223 = scmp.ne.s32.totalorder %s208, %s222
      %p224 = scmp.eq.s32.totalorder %s25, 0
      %p225 = por %p223, %p224
      %s227 = sadd.s32 %s226, 1
      %p230 = scmp.eq.s32.totalorder %s19, 1
      %p231 = scmp.ne.s32.totalorder %s226, %s228
      %p232 = scmp.eq.s32.totalorder %s19, 0
      %p233 = por %p231, %p232
      %p234 = scmp.ne.s32.totalorder %s226, %s228
      %p235 = scmp.eq.s32.totalorder %s24, 1
      %p236 = por %p234, %p235
      %p237 = scmp.ne.s32.totalorder %s228, %s229
      %p238 = scmp.eq.s32.totalorder %s24, 0
      %p239 = por %p237, %p238
      %p240 = scmp.ne.s32.totalorder %s228, %s229
      %p241 = scmp.eq.s32.totalorder %s25, 1
      %p242 = por %p240, %p241
      %p244 = scmp.ne.s32.totalorder %s229, %s243
      %p245 = scmp.eq.s32.totalorder %s25, 0
      %p246 = por %p244, %p245
      %s247 = ssub.s32 %s19, %s26
      %p248 = scmp.eq.s32.totalorder %s247, 0
      %s250 = sadd.s32 %s249, 1
      %s251 = scalar_select %p248, %s249, %s250
      %p254 = pneg %p248
      %p255 = scmp.eq.s32.totalorder %s19, 1
      %p256 = por %p254, %p255
      %p257 = scmp.ne.s32.totalorder %s249, %s252
      %p258 = scmp.eq.s32.totalorder %s19, 0
      %p259 = por %p257, %p258
      %p260 = scmp.ne.s32.totalorder %s249, %s252
      %p261 = scmp.eq.s32.totalorder %s24, 1
      %p262 = por %p260, %p261
      %p263 = scmp.ne.s32.totalorder %s252, %s253
      %p264 = scmp.eq.s32.totalorder %s24, 0
      %p265 = por %p263, %p264
      %p266 = scmp.ne.s32.totalorder %s252, %s253
      %p267 = scmp.eq.s32.totalorder %s25, 1
      %p268 = por %p266, %p267
      %p270 = scmp.ne.s32.totalorder %s253, %s269
      %p271 = scmp.eq.s32.totalorder %s25, 0
      %p272 = por %p270, %p271
      %p273 = scmp.le.s32.totalorder 1, %s19
      %p274 = scmp.lt.s32.totalorder %s19, 3
      %p275 = pnand %p273, %p274
      %p276 = pneg %p275
      // Predicated region
      $region9: #{ner_model_forward.1} parent=5 // pred_check
        _
      $region10: #{ner_model_forward.1} parent=5 // pred_check_branch
        %278 = sbr.rel (%p275) target = $region12
      $region11: #{ner_model_forward.1} parent=5 // pred_region
        %s279 = ssub.s32 %s19, 1
        // Predicated region
        $region13: #{ner_model_forward.1} parent=11 // pred_check
          %p280 = pneg %p92
        $region14: #{ner_model_forward.1} parent=11 // pred_check_branch
          %282 = sbr.rel (%p280) target = $region16
        $region15: #{ner_model_forward.1} parent=11 // pred_region
          _
        $region16: #{ner_model_forward.1} parent=11 // pred_fallthru
          _
        // Predicated region
        $region17: #{ner_model_forward.1} parent=11 // pred_check
          %p283 = pneg %p113
        $region18: #{ner_model_forward.1} parent=11 // pred_check_branch
          %285 = sbr.rel (%p283) target = $region20
        $region19: #{ner_model_forward.1} parent=11 // pred_region
          _
        $region20: #{ner_model_forward.1} parent=11 // pred_fallthru
          _
        // Predicated region
        $region21: #{ner_model_forward.1} parent=11 // pred_check
          %p286 = pneg %p134
        $region22: #{ner_model_forward.1} parent=11 // pred_check_branch
          %288 = sbr.rel (%p286) target = $region24
        $region23: #{ner_model_forward.1} parent=11 // pred_region
          _
        $region24: #{ner_model_forward.1} parent=11 // pred_fallthru
          _
        // Predicated region
        $region25: #{ner_model_forward.1} parent=11 // pred_check
          %p289 = pneg %p155
        $region26: #{ner_model_forward.1} parent=11 // pred_check_branch
          %291 = sbr.rel (%p289) target = $region28
        $region27: #{ner_model_forward.1} parent=11 // pred_region
          _
        $region28: #{ner_model_forward.1} parent=11 // pred_fallthru
          _
        // Predicated region
        $region29: #{ner_model_forward.1} parent=11 // pred_check
          %p292 = pneg %p176
        $region30: #{ner_model_forward.1} parent=11 // pred_check_branch
          %294 = sbr.rel (%p292) target = $region32
        $region31: #{ner_model_forward.1} parent=11 // pred_region
          _
        $region32: #{ner_model_forward.1} parent=11 // pred_fallthru
          _
        // Predicated region
        $region33: #{ner_model_forward.1} parent=11 // pred_check
          %p295 = pneg %p197
        $region34: #{ner_model_forward.1} parent=11 // pred_check_branch
          %297 = sbr.rel (%p295) target = $region36
        $region35: #{ner_model_forward.1} parent=11 // pred_region
          _
        $region36: #{ner_model_forward.1} parent=11 // pred_fallthru
          _
        // Predicated region
        $region37: #{ner_model_forward.1} parent=11 // pred_check
          %p298 = pneg %p218
        $region38: #{ner_model_forward.1} parent=11 // pred_check_branch
          %300 = sbr.rel (%p298) target = $region40
        $region39: #{ner_model_forward.1} parent=11 // pred_region
          _
        $region40: #{ner_model_forward.1} parent=11 // pred_fallthru
          _
        // Predicated region
        $region41: #{ner_model_forward.1} parent=11 // pred_check
          %p301 = pneg %p239
        $region42: #{ner_model_forward.1} parent=11 // pred_check_branch
          %303 = sbr.rel (%p301) target = $region44
        $region43: #{ner_model_forward.1} parent=11 // pred_region
          _
        $region44: #{ner_model_forward.1} parent=11 // pred_fallthru
          _
      $region12: #{ner_model_forward.1} parent=5 // pred_fallthru
        _
      %p304 = scmp.lt.s32.totalorder %s19, 2
      // Predicated region
      $region45: #{ner_model_forward.1} parent=5 // pred_check
        %p305 = pneg %p304
      $region46: #{ner_model_forward.1} parent=5 // pred_check_branch
        %307 = sbr.rel (%p305) target = $region48
      $region47: #{ner_model_forward.1} parent=5 // pred_region
        // Predicated region
        $region49: #{ner_model_forward.1} parent=47 // pred_check
          %p308 = pneg %p39
        $region50: #{ner_model_forward.1} parent=47 // pred_check_branch
          %310 = sbr.rel (%p308) target = $region52
        $region51: #{ner_model_forward.1} parent=47 // pred_region
          %p311 = scmp.lt.s32.totalorder %s19, 1
          %s312 = scalar_select %p311, %s19, 1
          %s313 = smul.addr %s312, 8
          %s314 = scalar_lea.vmem %s0, %s313
        $region52: #{ner_model_forward.1} parent=47 // pred_fallthru
          _
        // Predicated region
        $region53: #{ner_model_forward.1} parent=47 // pred_check
          %p315 = pneg %p65
        $region54: #{ner_model_forward.1} parent=47 // pred_check_branch
          %317 = sbr.rel (%p315) target = $region56
        $region55: #{ner_model_forward.1} parent=47 // pred_region
          %p318 = scmp.lt.s32.totalorder %s19, 1
          %s319 = scalar_select %p318, %s19, 1
          %s320 = scalar_lea.vmem %s1, %s319
        $region56: #{ner_model_forward.1} parent=47 // pred_fallthru
          _
      $region48: #{ner_model_forward.1} parent=5 // pred_fallthru
        _
      %p321 = scmp.le.s32.totalorder 1, %s19
      %p322 = scmp.lt.s32.totalorder %s19, 3
      %p323 = pnand %p321, %p322
      %p324 = pneg %p323
      // Predicated region
      $region57: #{ner_model_forward.1} parent=5 // pred_check
        _
      $region58: #{ner_model_forward.1} parent=5 // pred_check_branch
        %326 = sbr.rel (%p323) target = $region60
      $region59: #{ner_model_forward.1} parent=5 // pred_region
        %s327 = ssub.s32 %s19, 1
        %p328 = scmp.lt.s32.totalorder %s24, 1
        %s329 = scalar_select %p328, %s24, 1
        %s330 = smul.addr %s329, 8
        %s331 = scalar_lea.vmem %s0, %s330
        %p332 = pneg %p45
        %p333 = pneg %p42
        %p334 = scmp.lt.s32.totalorder %s24, 1
        %s335 = scalar_select %p334, %s24, 1
        %s336 = scalar_lea.vmem %s1, %s335
        %p337 = pneg %p71
        %p338 = pneg %p68
        %p339 = pneg %p92
        %p340 = pneg %p89
        %p341 = pneg %p113
        %p342 = pneg %p110
        %p343 = pneg %p134
        %p344 = pneg %p131
        %p345 = pneg %p155
        %p346 = pneg %p152
        %p347 = pneg %p176
        %p348 = pneg %p173
        %p349 = pneg %p197
        %p350 = pneg %p194
        %p351 = pneg %p218
        %p352 = pneg %p215
        %p353 = pneg %p239
        %p354 = pneg %p236
        %p355 = pneg %p265
        %p356 = pneg %p262
        %s357 = sand.u32 %s252, 1
        %s358 = scalar_lea.sflag [#allocation3], %s357
        %s359 = sand.u32 %s252, 1
        %s360 = scalar_lea.vmem [#allocation2], %s359
        %p361 = scmp.lt.s32.totalorder %s24, 1
        %s362 = scalar_select %p361, %s24, 1
        %s363 = smul.addr %s362, 8
        %s364 = scalar_lea.vmem %s0, %s363
        %p365 = scmp.lt.s32.totalorder %s24, 1
        %s366 = scalar_select %p365, %s24, 1
        %s367 = scalar_lea.vmem %s1, %s366
        %v369 = vld [vmem:[%s364] sm:$0xff]
        %v370 = vld [vmem:[%s367] sm:$0x1]
        %v372 = vlaneseq
        %v373 = vshrl.u32 %v372, 7
        %v374 = vsub.s32 0, %v373
        %v375 = vrot.slane %v370, %v374
        %v377 = vld [vmem:[%s2] sm:$0x1]
        %s378 = scalar_lea.vmem %s2, 1
        %v379 = vld [vmem:[%s378] sm:$0x1]
        %vm380 = vcmask 261120
        %v381 = vsel %vm380, %v369, 0.0
        %382 = vadd.xlane.f32.xlu0 %v381
        %v383 = vpop.xlane.xlu0 %382
        %v384 = vrcp.pop 32.0
        %v385 = vmul.f32 %v383, %v384
        %v386 = vsub.f32 %v369, %v385
        %v387 = vmul.f32 %v386, %v386
        %v388 = vsel %vm380, %v387, 0.0
        %389 = vadd.xlane.f32.xlu0 %v388
        %v390 = vpop.xlane.xlu0 %389
        %v391 = vmul.f32 %v390, %v384
        %v392 = vadd.f32 %v391, 1e-12
        %v393 = vrsqrt.pop %v392
        %v394 = vmul.f32 %v386, %v393
        %v396 = vlaneseq
        %v397 = vshrl.u32 %v396, 7
        %v398 = vsub.s32 0, %v397
        %v399 = vrot.slane %v377, %v398
        %v401 = vmul.f32 %v394, %v399
        %v403 = vlaneseq
        %v404 = vshrl.u32 %v403, 7
        %v405 = vsub.s32 0, %v404
        %v406 = vrot.slane %v379, %v405
        %v408 = vadd.f32 %v401, %v406
        %v409 = vpack.c.bf16 %v408, %v408
        %v410 = vld [vmem:[%s3] sm:$0xf]
        %v411 = vld [vmem:[%s3 + $0x4] sm:$0xf]
        %v412 = vld [vmem:[%s3 + $0x8] sm:$0xf]
        %v413 = vld [vmem:[%s3 + $0xc] sm:$0xf]
        %v414 = vld [vmem:[%s4] sm:$0x1]
        %v416 = vlaneseq
        %v417 = vshrl.u32 %v416, 7
        %v418 = vsub.s32 0, %v417
        %v419 = vrot.slane %v414, %v418
        %v425 = vunpack.c.l.b16 %v410
        %v426 = vunpack.c.l.b16 %v411
        %v427 = vunpack.c.l.b16 %v412
        %v428 = vunpack.c.l.b16 %v413
        %v429 = vpack.c.b16 %v426, %v425
        %v430 = vpack.c.b16 %v428, %v427
        %v434 = vsel %vm380, %v409, 0
        %436 = vmatprep.subr.bf16.mxu0 0
        %437 = vmatpush1.bf16.msra.mxu0 %v429
        %438 = vmatprep.subr.bf16.mxu0 0
        %439 = vmatpush1.bf16.msra.mxu0 %v430
        %440 = vmatprep.subr.bf16.mxu0 0
        %441 = vmatpush1.bf16.msra.mxu0 0
        %442 = vmatprep.subr.bf16.mxu0 0
        %443 = vmatpush1.bf16.msra.mxu0 0
        %444 = vmatprep.subr.bf16.mxu0 0
        %445 = vmatpush1.bf16.msra.mxu0 0
        %446 = vmatprep.subr.bf16.mxu0 0
        %447 = vmatpush1.bf16.msra.mxu0 0
        %448 = vmatprep.subr.bf16.mxu0 0
        %449 = vmatpush1.bf16.msra.mxu0 0
        %450 = vmatprep.subr.bf16.mxu0 0
        %451 = vmatpush1.bf16.msra.mxu0 0
        %452 = vmatprep.subr.bf16.mxu0 0
        %453 = vmatpush1.bf16.msra.mxu0 0
        %454 = vmatprep.subr.bf16.mxu0 0
        %455 = vmatpush1.bf16.msra.mxu0 0
        %456 = vmatprep.subr.bf16.mxu0 0
        %457 = vmatpush1.bf16.msra.mxu0 0
        %458 = vmatprep.subr.bf16.mxu0 0
        %459 = vmatpush1.bf16.msra.mxu0 0
        %460 = vmatprep.subr.bf16.mxu0 0
        %461 = vmatpush1.bf16.msra.mxu0 0
        %462 = vmatprep.subr.bf16.mxu0 0
        %463 = vmatpush1.bf16.msra.mxu0 0
        %464 = vmatprep.subr.bf16.mxu0 0
        %465 = vmatpush1.bf16.msra.mxu0 0
        %466 = vmatprep.subr.bf16.mxu0 0
        %467 = vmatpush1.bf16.msra.mxu0 0
        %468 = vmatprep.mubr.bf16.mxu0 0
        %469 = vmatmul.mubr.bf16.gmra.mrb[0].mxu0 %v434
        %v470 = vpop.f32.mrb[0].mxu0
        %v471 = vadd.f32 %v419, %v470
        %v472 = vpop.f32.mrb[0].mxu0
        %v473 = vpop.f32.mrb[0].mxu0
        %v474 = vpop.f32.mrb[0].mxu0
        %475 = vdwg.mxu0
        %s476 = scalar_lea.vmem %s3, 64
        %v477 = vld [vmem:[%s476] sm:$0xf]
        %v478 = vld [vmem:[%s476 + $0x4] sm:$0xf]
        %v479 = vld [vmem:[%s476 + $0x8] sm:$0xf]
        %v480 = vld [vmem:[%s476 + $0xc] sm:$0xf]
        %s481 = scalar_lea.vmem %s4, 4
        %v482 = vld [vmem:[%s481] sm:$0x1]
        %v484 = vlaneseq
        %v485 = vshrl.u32 %v484, 7
        %v486 = vsub.s32 0, %v485
        %v487 = vrot.slane %v482, %v486
        %v493 = vunpack.c.l.b16 %v477
        %v494 = vunpack.c.l.b16 %v478
        %v495 = vunpack.c.l.b16 %v479
        %v496 = vunpack.c.l.b16 %v480
        %v497 = vpack.c.b16 %v494, %v493
        %v498 = vpack.c.b16 %v496, %v495
        %501 = vmatprep.subr.bf16.mxu0 0
        %502 = vmatpush1.bf16.msra.mxu0 %v497
        %503 = vmatprep.subr.bf16.mxu0 0
        %504 = vmatpush1.bf16.msra.mxu0 %v498
        %505 = vmatprep.subr.bf16.mxu0 0
        %506 = vmatpush1.bf16.msra.mxu0 0
        %507 = vmatprep.subr.bf16.mxu0 0
        %508 = vmatpush1.bf16.msra.mxu0 0
        %509 = vmatprep.subr.bf16.mxu0 0
        %510 = vmatpush1.bf16.msra.mxu0 0
        %511 = vmatprep.subr.bf16.mxu0 0
        %512 = vmatpush1.bf16.msra.mxu0 0
        %513 = vmatprep.subr.bf16.mxu0 0
        %514 = vmatpush1.bf16.msra.mxu0 0
        %515 = vmatprep.subr.bf16.mxu0 0
        %516 = vmatpush1.bf16.msra.mxu0 0
        %517 = vmatprep.subr.bf16.mxu0 0
        %518 = vmatpush1.bf16.msra.mxu0 0
        %519 = vmatprep.subr.bf16.mxu0 0
        %520 = vmatpush1.bf16.msra.mxu0 0
        %521 = vmatprep.subr.bf16.mxu0 0
        %522 = vmatpush1.bf16.msra.mxu0 0
        %523 = vmatprep.subr.bf16.mxu0 0
        %524 = vmatpush1.bf16.msra.mxu0 0
        %525 = vmatprep.subr.bf16.mxu0 0
        %526 = vmatpush1.bf16.msra.mxu0 0
        %527 = vmatprep.subr.bf16.mxu0 0
        %528 = vmatpush1.bf16.msra.mxu0 0
        %529 = vmatprep.subr.bf16.mxu0 0
        %530 = vmatpush1.bf16.msra.mxu0 0
        %531 = vmatprep.subr.bf16.mxu0 0
        %532 = vmatpush1.bf16.msra.mxu0 0
        %533 = vmatprep.mubr.bf16.mxu0 0
        %534 = vmatmul.mubr.bf16.gmra.mrb[0].mxu0 %v434
        %v535 = vpop.f32.mrb[0].mxu0
        %v536 = vadd.f32 %v487, %v535
        %v537 = vpop.f32.mrb[0].mxu0
        %v538 = vpop.f32.mrb[0].mxu0
        %v539 = vpop.f32.mrb[0].mxu0
        %540 = vdwg.mxu0
        %s541 = scalar_lea.vmem %s3, 128
        %v542 = vld [vmem:[%s541] sm:$0xf]
        %v543 = vld [vmem:[%s541 + $0x4] sm:$0xf]
        %v544 = vld [vmem:[%s541 + $0x8] sm:$0xf]
        %v545 = vld [vmem:[%s541 + $0xc] sm:$0xf]
        %s546 = scalar_lea.vmem %s4, 8
        %v547 = vld [vmem:[%s546] sm:$0x1]
        %v549 = vlaneseq
        %v550 = vshrl.u32 %v549, 7
        %v551 = vsub.s32 0, %v550
        %v552 = vrot.slane %v547, %v551
        %v558 = vunpack.c.l.b16 %v542
        %v559 = vunpack.c.l.b16 %v543
        %v560 = vunpack.c.l.b16 %v544
        %v561 = vunpack.c.l.b16 %v545
        %v562 = vpack.c.b16 %v559, %v558
        %v563 = vpack.c.b16 %v561, %v560
        %566 = vmatprep.subr.bf16.mxu0 0
        %567 = vmatpush1.bf16.msra.mxu0 %v562
        %568 = vmatprep.subr.bf16.mxu0 0
        %569 = vmatpush1.bf16.msra.mxu0 %v563
        %570 = vmatprep.subr.bf16.mxu0 0
        %571 = vmatpush1.bf16.msra.mxu0 0
        %572 = vmatprep.subr.bf16.mxu0 0
        %573 = vmatpush1.bf16.msra.mxu0 0
        %574 = vmatprep.subr.bf16.mxu0 0
        %575 = vmatpush1.bf16.msra.mxu0 0
        %576 = vmatprep.subr.bf16.mxu0 0
        %577 = vmatpush1.bf16.msra.mxu0 0
        %578 = vmatprep.subr.bf16.mxu0 0
        %579 = vmatpush1.bf16.msra.mxu0 0
        %580 = vmatprep.subr.bf16.mxu0 0
        %581 = vmatpush1.bf16.msra.mxu0 0
        %582 = vmatprep.subr.bf16.mxu0 0
        %583 = vmatpush1.bf16.msra.mxu0 0
        %584 = vmatprep.subr.bf16.mxu0 0
        %585 = vmatpush1.bf16.msra.mxu0 0
        %586 = vmatprep.subr.bf16.mxu0 0
        %587 = vmatpush1.bf16.msra.mxu0 0
        %588 = vmatprep.subr.bf16.mxu0 0
        %589 = vmatpush1.bf16.msra.mxu0 0
        %590 = vmatprep.subr.bf16.mxu0 0
        %591 = vmatpush1.bf16.msra.mxu0 0
        %592 = vmatprep.subr.bf16.mxu0 0
        %593 = vmatpush1.bf16.msra.mxu0 0
        %594 = vmatprep.subr.bf16.mxu0 0
        %595 = vmatpush1.bf16.msra.mxu0 0
        %596 = vmatprep.subr.bf16.mxu0 0
        %597 = vmatpush1.bf16.msra.mxu0 0
        %598 = vmatprep.mubr.bf16.mxu0 0
        %599 = vmatmul.mubr.bf16.gmra.mrb[0].mxu0 %v434
        %v600 = vpop.f32.mrb[0].mxu0
        %v601 = vadd.f32 %v552, %v600
        %v602 = vpop.f32.mrb[0].mxu0
        %v603 = vpop.f32.mrb[0].mxu0
        %v604 = vpop.f32.mrb[0].mxu0
        %605 = vdwg.mxu0
        %v606 = vpack.c.bf16 %v471, %v471
        %v607 = vpack.c.bf16 %v536, %v536
        %vm608 = vcmask 130048
        %v610 = vsel %vm608, %v606, 0
        %v613 = vsel %vm608, %v607, 0
        %615 = vmatprep.subr.bf16.mxu0 0
        %616 = vmatpush1.bf16.xpose.msra.mxu0 %v613
        %617 = vmatprep.subr.bf16.mxu0 0
        %618 = vmatpush1.bf16.xpose.msra.mxu0 0
        %619 = vmatprep.subr.bf16.mxu0 0
        %620 = vmatpush1.bf16.xpose.msra.mxu0 0
        %621 = vmatprep.subr.bf16.mxu0 0
        %622 = vmatpush1.bf16.xpose.msra.mxu0 0
        %623 = vmatprep.subr.bf16.mxu0 0
        %624 = vmatpush1.bf16.xpose.msra.mxu0 0
        %625 = vmatprep.subr.bf16.mxu0 0
        %626 = vmatpush1.bf16.xpose.msra.mxu0 0
        %627 = vmatprep.subr.bf16.mxu0 0
        %628 = vmatpush1.bf16.xpose.msra.mxu0 0
        %629 = vmatprep.subr.bf16.mxu0 0
        %630 = vmatpush1.bf16.xpose.msra.mxu0 0
        %631 = vmatprep.subr.bf16.mxu0 0
        %632 = vmatpush1.bf16.xpose.msra.mxu0 0
        %633 = vmatprep.subr.bf16.mxu0 0
        %634 = vmatpush1.bf16.xpose.msra.mxu0 0
        %635 = vmatprep.subr.bf16.mxu0 0
        %636 = vmatpush1.bf16.xpose.msra.mxu0 0
        %637 = vmatprep.subr.bf16.mxu0 0
        %638 = vmatpush1.bf16.xpose.msra.mxu0 0
        %639 = vmatprep.subr.bf16.mxu0 0
        %640 = vmatpush1.bf16.xpose.msra.mxu0 0
        %641 = vmatprep.subr.bf16.mxu0 0
        %642 = vmatpush1.bf16.xpose.msra.mxu0 0
        %643 = vmatprep.subr.bf16.mxu0 0
        %644 = vmatpush1.bf16.xpose.msra.mxu0 0
        %645 = vmatprep.subr.bf16.mxu0 0
        %646 = vmatpush1.bf16.xpose.msra.mxu0 0
        %647 = vmatprep.mubr.bf16.mxu0 0
        %648 = vmatmul.mubr.bf16.gmra.mrb[0].mxu0 %v610
        %v649 = vpop.f32.mrb[0].mxu0
        %v650 = vadd.f32 %v375, %v649
        %v651 = vpop.f32.mrb[0].mxu0
        %v652 = vpop.f32.mrb[0].mxu0
        %v653 = vpop.f32.mrb[0].mxu0
        %654 = vdwg.mxu0
        %vm655 = vcmask 64512
        %v656 = vsel %vm655, %v650, -inf
        %657 = vmax.xlane.f32.xlu0 %v656
        %v658 = vpop.xlane.xlu0 %657
        %v659 = vsub.f32 %v650, %v658
        %v660 = vmul.f32 %v659, 1.442695
        %v661 = vpow.pop %v660
        %v662 = vsel %vm655, %v661, 0.0
        %663 = vadd.xlane.f32.xlu0 %v662
        %v664 = vpop.xlane.xlu0 %663
        %v665 = vrcp.pop %v664
        %v666 = vmul.f32 %v661, %v665
        %v667 = vpack.c.bf16 %v666, %v666
        %v668 = vpack.c.bf16 %v601, %v601
        %v670 = vsel %vm655, %v667, 0
        %vm672 = vcmask 1043456
        %v674 = vsel %vm672, %v668, 0
        %676 = vmatprep.subr.bf16.mxu0 0
        %677 = vmatpush1.bf16.msra.mxu0 %v674
        %678 = vmatprep.subr.bf16.mxu0 0
        %679 = vmatpush1.bf16.msra.mxu0 0
        %680 = vmatprep.subr.bf16.mxu0 0
        %681 = vmatpush1.bf16.msra.mxu0 0
        %682 = vmatprep.subr.bf16.mxu0 0
        %683 = vmatpush1.bf16.msra.mxu0 0
        %684 = vmatprep.subr.bf16.mxu0 0
        %685 = vmatpush1.bf16.msra.mxu0 0
        %686 = vmatprep.subr.bf16.mxu0 0
        %687 = vmatpush1.bf16.msra.mxu0 0
        %688 = vmatprep.subr.bf16.mxu0 0
        %689 = vmatpush1.bf16.msra.mxu0 0
        %690 = vmatprep.subr.bf16.mxu0 0
        %691 = vmatpush1.bf16.msra.mxu0 0
        %692 = vmatprep.subr.bf16.mxu0 0
        %693 = vmatpush1.bf16.msra.mxu0 0
        %694 = vmatprep.subr.bf16.mxu0 0
        %695 = vmatpush1.bf16.msra.mxu0 0
        %696 = vmatprep.subr.bf16.mxu0 0
        %697 = vmatpush1.bf16.msra.mxu0 0
        %698 = vmatprep.subr.bf16.mxu0 0
        %699 = vmatpush1.bf16.msra.mxu0 0
        %700 = vmatprep.subr.bf16.mxu0 0
        %701 = vmatpush1.bf16.msra.mxu0 0
        %702 = vmatprep.subr.bf16.mxu0 0
        %703 = vmatpush1.bf16.msra.mxu0 0
        %704 = vmatprep.subr.bf16.mxu0 0
        %705 = vmatpush1.bf16.msra.mxu0 0
        %706 = vmatprep.subr.bf16.mxu0 0
        %707 = vmatpush1.bf16.msra.mxu0 0
        %708 = vmatprep.mubr.bf16.mxu0 0
        %709 = vmatmul.mubr.bf16.gmra.mrb[0].mxu0 %v670
        %v710 = vpop.f32.mrb[0].mxu0
        %v711 = vadd.f32 0.0, %v710
        %v712 = vpop.f32.mrb[0].mxu0
        %v713 = vpop.f32.mrb[0].mxu0
        %v714 = vpop.f32.mrb[0].mxu0
        %715 = vdwg.mxu0
        %v716 = vpack.c.bf16 %v711, %v711
        %v717 = vld [vmem:[%s5] sm:$0xf]
        %v718 = vld [vmem:[%s5 + $0x4] sm:$0xf]
        %s719 = scalar_lea.vmem %s3, 16
        %v720 = vld [vmem:[%s719] sm:$0xf]
        %v721 = vld [vmem:[%s719 + $0x4] sm:$0xf]
        %v722 = vld [vmem:[%s719 + $0x8] sm:$0xf]
        %v723 = vld [vmem:[%s719 + $0xc] sm:$0xf]
        %s724 = scalar_lea.vmem %s4, 1
        %v725 = vld [vmem:[%s724] sm:$0x1]
        %v727 = vlaneseq
        %v728 = vshrl.u32 %v727, 7
        %v729 = vsub.s32 0, %v728
        %v730 = vrot.slane %v725, %v729
        %v736 = vunpack.c.l.b16 %v720
        %v737 = vunpack.c.l.b16 %v721
        %v738 = vunpack.c.l.b16 %v722
        %v739 = vunpack.c.l.b16 %v723
        %v740 = vpack.c.b16 %v737, %v736
        %v741 = vpack.c.b16 %v739, %v738
        %744 = vmatprep.subr.bf16.mxu0 0
        %745 = vmatpush1.bf16.msra.mxu0 %v740
        %746 = vmatprep.subr.bf16.mxu0 0
        %747 = vmatpush1.bf16.msra.mxu0 %v741
        %748 = vmatprep.subr.bf16.mxu0 0
        %749 = vmatpush1.bf16.msra.mxu0 0
        %750 = vmatprep.subr.bf16.mxu0 0
        %751 = vmatpush1.bf16.msra.mxu0 0
        %752 = vmatprep.subr.bf16.mxu0 0
        %753 = vmatpush1.bf16.msra.mxu0 0
        %754 = vmatprep.subr.bf16.mxu0 0
        %755 = vmatpush1.bf16.msra.mxu0 0
        %756 = vmatprep.subr.bf16.mxu0 0
        %757 = vmatpush1.bf16.msra.mxu0 0
        %758 = vmatprep.subr.bf16.mxu0 0
        %759 = vmatpush1.bf16.msra.mxu0 0
        %760 = vmatprep.subr.bf16.mxu0 0
        %761 = vmatpush1.bf16.msra.mxu0 0
        %762 = vmatprep.subr.bf16.mxu0 0
        %763 = vmatpush1.bf16.msra.mxu0 0
        %764 = vmatprep.subr.bf16.mxu0 0
        %765 = vmatpush1.bf16.msra.mxu0 0
        %766 = vmatprep.subr.bf16.mxu0 0
        %767 = vmatpush1.bf16.msra.mxu0 0
        %768 = vmatprep.subr.bf16.mxu0 0
        %769 = vmatpush1.bf16.msra.mxu0 0
        %770 = vmatprep.subr.bf16.mxu0 0
        %771 = vmatpush1.bf16.msra.mxu0 0
        %772 = vmatprep.subr.bf16.mxu0 0
        %773 = vmatpush1.bf16.msra.mxu0 0
        %774 = vmatprep.subr.bf16.mxu0 0
        %775 = vmatpush1.bf16.msra.mxu0 0
        %776 = vmatprep.mubr.bf16.mxu0 0
        %777 = vmatmul.mubr.bf16.gmra.mrb[0].mxu0 %v434
        %v778 = vpop.f32.mrb[0].mxu0
        %v779 = vadd.f32 %v730, %v778
        %v780 = vpop.f32.mrb[0].mxu0
        %v781 = vpop.f32.mrb[0].mxu0
        %v782 = vpop.f32.mrb[0].mxu0
        %783 = vdwg.mxu0
        %s784 = scalar_lea.vmem %s3, 80
        %v785 = vld [vmem:[%s784] sm:$0xf]
        %v786 = vld [vmem:[%s784 + $0x4] sm:$0xf]
        %v787 = vld [vmem:[%s784 + $0x8] sm:$0xf]
        %v788 = vld [vmem:[%s784 + $0xc] sm:$0xf]
        %s789 = scalar_lea.vmem %s4, 5
        %v790 = vld [vmem:[%s789] sm:$0x1]
        %v792 = vlaneseq
        %v793 = vshrl.u32 %v792, 7
        %v794 = vsub.s32 0, %v793
        %v795 = vrot.slane %v790, %v794
        %v801 = vunpack.c.l.b16 %v785
        %v802 = vunpack.c.l.b16 %v786
        %v803 = vunpack.c.l.b16 %v787
        %v804 = vunpack.c.l.b16 %v788
        %v805 = vpack.c.b16 %v802, %v801
        %v806 = vpack.c.b16 %v804, %v803
        %809 = vmatprep.subr.bf16.mxu0 0
        %810 = vmatpush1.bf16.msra.mxu0 %v805
        %811 = vmatprep.subr.bf16.mxu0 0
        %812 = vmatpush1.bf16.msra.mxu0 %v806
        %813 = vmatprep.subr.bf16.mxu0 0
        %814 = vmatpush1.bf16.msra.mxu0 0
        %815 = vmatprep.subr.bf16.mxu0 0
        %816 = vmatpush1.bf16.msra.mxu0 0
        %817 = vmatprep.subr.bf16.mxu0 0
        %818 = vmatpush1.bf16.msra.mxu0 0
        %819 = vmatprep.subr.bf16.mxu0 0
        %820 = vmatpush1.bf16.msra.mxu0 0
        %821 = vmatprep.subr.bf16.mxu0 0
        %822 = vmatpush1.bf16.msra.mxu0 0
        %823 = vmatprep.subr.bf16.mxu0 0
        %824 = vmatpush1.bf16.msra.mxu0 0
        %825 = vmatprep.subr.bf16.mxu0 0
        %826 = vmatpush1.bf16.msra.mxu0 0
        %827 = vmatprep.subr.bf16.mxu0 0
        %828 = vmatpush1.bf16.msra.mxu0 0
        %829 = vmatprep.subr.bf16.mxu0 0
        %830 = vmatpush1.bf16.msra.mxu0 0
        %831 = vmatprep.subr.bf16.mxu0 0
        %832 = vmatpush1.bf16.msra.mxu0 0
        %833 = vmatprep.subr.bf16.mxu0 0
        %834 = vmatpush1.bf16.msra.mxu0 0
        %835 = vmatprep.subr.bf16.mxu0 0
        %836 = vmatpush1.bf16.msra.mxu0 0
        %837 = vmatprep.subr.bf16.mxu0 0
        %838 = vmatpush1.bf16.msra.mxu0 0
        %839 = vmatprep.subr.bf16.mxu0 0
        %840 = vmatpush1.bf16.msra.mxu0 0
        %841 = vmatprep.mubr.bf16.mxu0 0
        %842 = vmatmul.mubr.bf16.gmra.mrb[0].mxu0 %v434
        %v843 = vpop.f32.mrb[0].mxu0
        %v844 = vadd.f32 %v795, %v843
        %v845 = vpop.f32.mrb[0].mxu0
        %v846 = vpop.f32.mrb[0].mxu0
        %v847 = vpop.f32.mrb[0].mxu0
        %848 = vdwg.mxu0
        %s849 = scalar_lea.vmem %s3, 144
        %v850 = vld [vmem:[%s849] sm:$0xf]
        %v851 = vld [vmem:[%s849 + $0x4] sm:$0xf]
        %v852 = vld [vmem:[%s849 + $0x8] sm:$0xf]
        %v853 = vld [vmem:[%s849 + $0xc] sm:$0xf]
        %s854 = scalar_lea.vmem %s4, 9
        %v855 = vld [vmem:[%s854] sm:$0x1]
        %v857 = vlaneseq
        %v858 = vshrl.u32 %v857, 7
        %v859 = vsub.s32 0, %v858
        %v860 = vrot.slane %v855, %v859
        %v866 = vunpack.c.l.b16 %v850
        %v867 = vunpack.c.l.b16 %v851
        %v868 = vunpack.c.l.b16 %v852
        %v869 = vunpack.c.l.b16 %v853
        %v870 = vpack.c.b16 %v867, %v866
        %v871 = vpack.c.b16 %v869, %v868
        %874 = vmatprep.subr.bf16.mxu0 0
        %875 = vmatpush1.bf16.msra.mxu0 %v870
        %876 = vmatprep.subr.bf16.mxu0 0
        %877 = vmatpush1.bf16.msra.mxu0 %v871
        %878 = vmatprep.subr.bf16.mxu0 0
        %879 = vmatpush1.bf16.msra.mxu0 0
        %880 = vmatprep.subr.bf16.mxu0 0
        %881 = vmatpush1.bf16.msra.mxu0 0
        %882 = vmatprep.subr.bf16.mxu0 0
        %883 = vmatpush1.bf16.msra.mxu0 0
        %884 = vmatprep.subr.bf16.mxu0 0
        %885 = vmatpush1.bf16.msra.mxu0 0
        %886 = vmatprep.subr.bf16.mxu0 0
        %887 = vmatpush1.bf16.msra.mxu0 0
        %888 = vmatprep.subr.bf16.mxu0 0
        %889 = vmatpush1.bf16.msra.mxu0 0
        %890 = vmatprep.subr.bf16.mxu0 0
        %891 = vmatpush1.bf16.msra.mxu0 0
        %892 = vmatprep.subr.bf16.mxu0 0
        %893 = vmatpush1.bf16.msra.mxu0 0
        %894 = vmatprep.subr.bf16.mxu0 0
        %895 = vmatpush1.bf16.msra.mxu0 0
        %896 = vmatprep.subr.bf16.mxu0 0
        %897 = vmatpush1.bf16.msra.mxu0 0
        %898 = vmatprep.subr.bf16.mxu0 0
        %899 = vmatpush1.bf16.msra.mxu0 0
        %900 = vmatprep.subr.bf16.mxu0 0
        %901 = vmatpush1.bf16.msra.mxu0 0
        %902 = vmatprep.subr.bf16.mxu0 0
        %903 = vmatpush1.bf16.msra.mxu0 0
        %904 = vmatprep.subr.bf16.mxu0 0
        %905 = vmatpush1.bf16.msra.mxu0 0
        %906 = vmatprep.mubr.bf16.mxu0 0
        %907 = vmatmul.mubr.bf16.gmra.mrb[0].mxu0 %v434
        %v908 = vpop.f32.mrb[0].mxu0
        %v909 = vadd.f32 %v860, %v908
        %v910 = vpop.f32.mrb[0].mxu0
        %v911 = vpop.f32.mrb[0].mxu0
        %v912 = vpop.f32.mrb[0].mxu0
        %913 = vdwg.mxu0
        %v914 = vpack.c.bf16 %v779, %v779
        %v915 = vpack.c.bf16 %v844, %v844
        %v917 = vsel %vm608, %v914, 0
        %v920 = vsel %vm608, %v915, 0
        %922 = vmatprep.subr.bf16.mxu0 0
        %923 = vmatpush1.bf16.xpose.msra.mxu0 %v920
        %924 = vmatprep.subr.bf16.mxu0 0
        %925 = vmatpush1.bf16.xpose.msra.mxu0 0
        %926 = vmatprep.subr.bf16.mxu0 0
        %927 = vmatpush1.bf16.xpose.msra.mxu0 0
        %928 = vmatprep.subr.bf16.mxu0 0
        %929 = vmatpush1.bf16.xpose.msra.mxu0 0
        %930 = vmatprep.subr.bf16.mxu0 0
        %931 = vmatpush1.bf16.xpose.msra.mxu0 0
        %932 = vmatprep.subr.bf16.mxu0 0
        %933 = vmatpush1.bf16.xpose.msra.mxu0 0
        %934 = vmatprep.subr.bf16.mxu0 0
        %935 = vmatpush1.bf16.xpose.msra.mxu0 0
        %936 = vmatprep.subr.bf16.mxu0 0
        %937 = vmatpush1.bf16.xpose.msra.mxu0 0
        %938 = vmatprep.subr.bf16.mxu0 0
        %939 = vmatpush1.bf16.xpose.msra.mxu0 0
        %940 = vmatprep.subr.bf16.mxu0 0
        %941 = vmatpush1.bf16.xpose.msra.mxu0 0
        %942 = vmatprep.subr.bf16.mxu0 0
        %943 = vmatpush1.bf16.xpose.msra.mxu0 0
        %944 = vmatprep.subr.bf16.mxu0 0
        %945 = vmatpush1.bf16.xpose.msra.mxu0 0
        %946 = vmatprep.subr.bf16.mxu0 0
        %947 = vmatpush1.bf16.xpose.msra.mxu0 0
        %948 = vmatprep.subr.bf16.mxu0 0
        %949 = vmatpush1.bf16.xpose.msra.mxu0 0
        %950 = vmatprep.subr.bf16.mxu0 0
        %951 = vmatpush1.bf16.xpose.msra.mxu0 0
        %952 = vmatprep.subr.bf16.mxu0 0
        %953 = vmatpush1.bf16.xpose.msra.mxu0 0
        %954 = vmatprep.mubr.bf16.mxu0 0
        %955 = vmatmul.mubr.bf16.gmra.mrb[0].mxu0 %v917
        %v956 = vpop.f32.mrb[0].mxu0
        %v957 = vadd.f32 %v375, %v956
        %v958 = vpop.f32.mrb[0].mxu0
        %v959 = vpop.f32.mrb[0].mxu0
        %v960 = vpop.f32.mrb[0].mxu0
        %961 = vdwg.mxu0
        %v962 = vsel %vm655, %v957, -inf
        %963 = vmax.xlane.f32.xlu0 %v962
        %v964 = vpop.xlane.xlu0 %963
        %v965 = vsub.f32 %v957, %v964
        %v966 = vmul.f32 %v965, 1.442695
        %v967 = vpow.pop %v966
        %v968 = vsel %vm655, %v967, 0.0
        %969 = vadd.xlane.f32.xlu0 %v968
        %v970 = vpop.xlane.xlu0 %969
        %v971 = vrcp.pop %v970
        %v972 = vmul.f32 %v967, %v971
        %v973 = vpack.c.bf16 %v972, %v972
        %v974 = vpack.c.bf16 %v909, %v909
        %v976 = vsel %vm655, %v973, 0
        %v979 = vsel %vm672, %v974, 0
        %981 = vmatprep.subr.bf16.mxu0 0
        %982 = vmatpush1.bf16.msra.mxu0 %v979
        %983 = vmatprep.subr.bf16.mxu0 0
        %984 = vmatpush1.bf16.msra.mxu0 0
        %985 = vmatprep.subr.bf16.mxu0 0
        %986 = vmatpush1.bf16.msra.mxu0 0
        %987 = vmatprep.subr.bf16.mxu0 0
        %988 = vmatpush1.bf16.msra.mxu0 0
        %989 = vmatprep.subr.bf16.mxu0 0
        %990 = vmatpush1.bf16.msra.mxu0 0
        %991 = vmatprep.subr.bf16.mxu0 0
        %992 = vmatpush1.bf16.msra.mxu0 0
        %993 = vmatprep.subr.bf16.mxu0 0
        %994 = vmatpush1.bf16.msra.mxu0 0
        %995 = vmatprep.subr.bf16.mxu0 0
        %996 = vmatpush1.bf16.msra.mxu0 0
        %997 = vmatprep.subr.bf16.mxu0 0
        %998 = vmatpush1.bf16.msra.mxu0 0
        %999 = vmatprep.subr.bf16.mxu0 0
        %1000 = vmatpush1.bf16.msra.mxu0 0
        %1001 = vmatprep.subr.bf16.mxu0 0
        %1002 = vmatpush1.bf16.msra.mxu0 0
        %1003 = vmatprep.subr.bf16.mxu0 0
        %1004 = vmatpush1.bf16.msra.mxu0 0
        %1005 = vmatprep.subr.bf16.mxu0 0
        %1006 = vmatpush1.bf16.msra.mxu0 0
        %1007 = vmatprep.subr.bf16.mxu0 0
        %1008 = vmatpush1.bf16.msra.mxu0 0
        %1009 = vmatprep.subr.bf16.mxu0 0
        %1010 = vmatpush1.bf16.msra.mxu0 0
        %1011 = vmatprep.subr.bf16.mxu0 0
        %1012 = vmatpush1.bf16.msra.mxu0 0
        %1013 = vmatprep.mubr.bf16.mxu0 0
        %1014 = vmatmul.mubr.bf16.gmra.mrb[0].mxu0 %v976
        %v1015 = vpop.f32.mrb[0].mxu0
        %v1016 = vadd.f32 0.0, %v1015
        %v1017 = vpop.f32.mrb[0].mxu0
        %v1018 = vpop.f32.mrb[0].mxu0
        %v1019 = vpop.f32.mrb[0].mxu0
        %1020 = vdwg.mxu0
        %v1021 = vpack.c.bf16 %v1016, %v1016
        %s1022 = scalar_lea.vmem %s5, 8
        %v1023 = vld [vmem:[%s1022] sm:$0xf]
        %v1024 = vld [vmem:[%s1022 + $0x4] sm:$0xf]
        %v1027 = vunpack.c.l.b16 %v1023
        %v1028 = vunpack.c.l.b16 %v1024
        %v1029 = vpack.c.b16 %v1028, %v1027
        %v1032 = vsel %vm608, %v1021, 0
        %1034 = vmatprep.subr.bf16.mxu0 0
        %1035 = vmatpush1.bf16.msra.mxu0 %v1029
        %1036 = vmatprep.subr.bf16.mxu0 0
        %1037 = vmatpush1.bf16.msra.mxu0 0
        %1038 = vmatprep.subr.bf16.mxu0 0
        %1039 = vmatpush1.bf16.msra.mxu0 0
        %1040 = vmatprep.subr.bf16.mxu0 0
        %1041 = vmatpush1.bf16.msra.mxu0 0
        %1042 = vmatprep.subr.bf16.mxu0 0
        %1043 = vmatpush1.bf16.msra.mxu0 0
        %1044 = vmatprep.subr.bf16.mxu0 0
        %1045 = vmatpush1.bf16.msra.mxu0 0
        %1046 = vmatprep.subr.bf16.mxu0 0
        %1047 = vmatpush1.bf16.msra.mxu0 0
        %1048 = vmatprep.subr.bf16.mxu0 0
        %1049 = vmatpush1.bf16.msra.mxu0 0
        %1050 = vmatprep.subr.bf16.mxu0 0
        %1051 = vmatpush1.bf16.msra.mxu0 0
        %1052 = vmatprep.subr.bf16.mxu0 0
        %1053 = vmatpush1.bf16.msra.mxu0 0
        %1054 = vmatprep.subr.bf16.mxu0 0
        %1055 = vmatpush1.bf16.msra.mxu0 0
        %1056 = vmatprep.subr.bf16.mxu0 0
        %1057 = vmatpush1.bf16.msra.mxu0 0
        %1058 = vmatprep.subr.bf16.mxu0 0
        %1059 = vmatpush1.bf16.msra.mxu0 0
        %1060 = vmatprep.subr.bf16.mxu0 0
        %1061 = vmatpush1.bf16.msra.mxu0 0
        %1062 = vmatprep.subr.bf16.mxu0 0
        %1063 = vmatpush1.bf16.msra.mxu0 0
        %1064 = vmatprep.subr.bf16.mxu0 0
        %1065 = vmatpush1.bf16.msra.mxu0 0
        %1066 = vmatprep.mubr.bf16.mxu0 0
        %1067 = vmatmul.mubr.bf16.gmra.mrb[0].mxu0 %v1032
        %v1068 = vpop.f32.mrb[0].mxu0
        %v1069 = vadd.f32 0.0, %v1068
        %v1070 = vpop.f32.mrb[0].mxu0
        %v1071 = vpop.f32.mrb[0].mxu0
        %v1072 = vpop.f32.mrb[0].mxu0
        %1073 = vdwg.mxu0
        %v1076 = vunpack.c.l.b16 %v717
        %v1077 = vunpack.c.l.b16 %v718
        %v1078 = vpack.c.b16 %v1077, %v1076
        %v1081 = vsel %vm608, %v716, 0
        %1083 = vmatprep.subr.bf16.mxu0 0
        %1084 = vmatpush1.bf16.msra.mxu0 %v1078
        %1085 = vmatprep.subr.bf16.mxu0 0
        %1086 = vmatpush1.bf16.msra.mxu0 0
        %1087 = vmatprep.subr.bf16.mxu0 0
        %1088 = vmatpush1.bf16.msra.mxu0 0
        %1089 = vmatprep.subr.bf16.mxu0 0
        %1090 = vmatpush1.bf16.msra.mxu0 0
        %1091 = vmatprep.subr.bf16.mxu0 0
        %1092 = vmatpush1.bf16.msra.mxu0 0
        %1093 = vmatprep.subr.bf16.mxu0 0
        %1094 = vmatpush1.bf16.msra.mxu0 0
        %1095 = vmatprep.subr.bf16.mxu0 0
        %1096 = vmatpush1.bf16.msra.mxu0 0
        %1097 = vmatprep.subr.bf16.mxu0 0
        %1098 = vmatpush1.bf16.msra.mxu0 0
        %1099 = vmatprep.subr.bf16.mxu0 0
        %1100 = vmatpush1.bf16.msra.mxu0 0
        %1101 = vmatprep.subr.bf16.mxu0 0
        %1102 = vmatpush1.bf16.msra.mxu0 0
        %1103 = vmatprep.subr.bf16.mxu0 0
        %1104 = vmatpush1.bf16.msra.mxu0 0
        %1105 = vmatprep.subr.bf16.mxu0 0
        %1106 = vmatpush1.bf16.msra.mxu0 0
        %1107 = vmatprep.subr.bf16.mxu0 0
        %1108 = vmatpush1.bf16.msra.mxu0 0
        %1109 = vmatprep.subr.bf16.mxu0 0
        %1110 = vmatpush1.bf16.msra.mxu0 0
        %1111 = vmatprep.subr.bf16.mxu0 0
        %1112 = vmatpush1.bf16.msra.mxu0 0
        %1113 = vmatprep.subr.bf16.mxu0 0
        %1114 = vmatpush1.bf16.msra.mxu0 0
        %1115 = vmatprep.mubr.bf16.mxu0 0
        %1116 = vmatmul.mubr.bf16.gmra.mrb[0].mxu0 %v1081
        %v1117 = vpop.f32.mrb[0].mxu0
        %v1118 = vadd.f32 %v1069, %v1117
        %v1119 = vpop.f32.mrb[0].mxu0
        %v1120 = vpop.f32.mrb[0].mxu0
        %v1121 = vpop.f32.mrb[0].mxu0
        %1122 = vdwg.mxu0
        %v1123 = vld [vmem:[%s9] sm:$0x1]
        %v1125 = vlaneseq
        %v1126 = vshrl.u32 %v1125, 7
        %v1127 = vsub.s32 0, %v1126
        %v1128 = vrot.slane %v1123, %v1127
        %v1130 = vadd.f32 %v1118, %v1128
        %v1131 = vadd.f32 %v408, %v1130
        %s1132 = scalar_lea.vmem %s9, 1
        %v1133 = vld [vmem:[%s1132] sm:$0x1]
        %s1134 = scalar_lea.vmem %s9, 2
        %v1135 = vld [vmem:[%s1134] sm:$0x1]
        %v1136 = vsel %vm380, %v1131, 0.0
        %1137 = vadd.xlane.f32.xlu0 %v1136
        %v1138 = vpop.xlane.xlu0 %1137
        %v1139 = vmul.f32 %v1138, %v384
        %v1140 = vsub.f32 %v1131, %v1139
        %v1141 = vmul.f32 %v1140, %v1140
        %v1142 = vsel %vm380, %v1141, 0.0
        %1143 = vadd.xlane.f32.xlu0 %v1142
        %v1144 = vpop.xlane.xlu0 %1143
        %v1145 = vmul.f32 %v1144, %v384
        %v1146 = vadd.f32 %v1145, 1e-12
        %v1147 = vrsqrt.pop %v1146
        %v1148 = vmul.f32 %v1140, %v1147
        %v1150 = vlaneseq
        %v1151 = vshrl.u32 %v1150, 7
        %v1152 = vsub.s32 0, %v1151
        %v1153 = vrot.slane %v1133, %v1152
        %v1155 = vmul.f32 %v1148, %v1153
        %v1157 = vlaneseq
        %v1158 = vshrl.u32 %v1157, 7
        %v1159 = vsub.s32 0, %v1158
        %v1160 = vrot.slane %v1135, %v1159
        %v1162 = vadd.f32 %v1155, %v1160
        %v1163 = vpack.c.bf16 %v1162, %v1162
        %v1164 = vld [vmem:[%s6] sm:$0xf]
        %v1165 = vld [vmem:[%s6 + $0x4] sm:$0xf]
        %v1166 = vld [vmem:[%s6 + $0x8] sm:$0xf]
        %v1167 = vld [vmem:[%s6 + $0xc] sm:$0xf]
        %v1168 = vld [vmem:[%s7] sm:$0x1]
        %v1170 = vlaneseq
        %v1171 = vshrl.u32 %v1170, 7
        %v1172 = vsub.s32 0, %v1171
        %v1173 = vrot.slane %v1168, %v1172
        %v1179 = vunpack.c.l.b16 %v1164
        %v1180 = vunpack.c.l.b16 %v1165
        %v1181 = vunpack.c.l.b16 %v1166
        %v1182 = vunpack.c.l.b16 %v1167
        %v1183 = vpack.c.b16 %v1180, %v1179
        %v1184 = vpack.c.b16 %v1182, %v1181
        %v1188 = vsel %vm380, %v1163, 0
        %1190 = vmatprep.subr.bf16.mxu0 0
        %1191 = vmatpush1.bf16.msra.mxu0 %v1183
        %1192 = vmatprep.subr.bf16.mxu0 0
        %1193 = vmatpush1.bf16.msra.mxu0 %v1184
        %1194 = vmatprep.subr.bf16.mxu0 0
        %1195 = vmatpush1.bf16.msra.mxu0 0
        %1196 = vmatprep.subr.bf16.mxu0 0
        %1197 = vmatpush1.bf16.msra.mxu0 0
        %1198 = vmatprep.subr.bf16.mxu0 0
        %1199 = vmatpush1.bf16.msra.mxu0 0
        %1200 = vmatprep.subr.bf16.mxu0 0
        %1201 = vmatpush1.bf16.msra.mxu0 0
        %1202 = vmatprep.subr.bf16.mxu0 0
        %1203 = vmatpush1.bf16.msra.mxu0 0
        %1204 = vmatprep.subr.bf16.mxu0 0
        %1205 = vmatpush1.bf16.msra.mxu0 0
        %1206 = vmatprep.subr.bf16.mxu0 0
        %1207 = vmatpush1.bf16.msra.mxu0 0
        %1208 = vmatprep.subr.bf16.mxu0 0
        %1209 = vmatpush1.bf16.msra.mxu0 0
        %1210 = vmatprep.subr.bf16.mxu0 0
        %1211 = vmatpush1.bf16.msra.mxu0 0
        %1212 = vmatprep.subr.bf16.mxu0 0
        %1213 = vmatpush1.bf16.msra.mxu0 0
        %1214 = vmatprep.subr.bf16.mxu0 0
        %1215 = vmatpush1.bf16.msra.mxu0 0
        %1216 = vmatprep.subr.bf16.mxu0 0
        %1217 = vmatpush1.bf16.msra.mxu0 0
        %1218 = vmatprep.subr.bf16.mxu0 0
        %1219 = vmatpush1.bf16.msra.mxu0 0
        %1220 = vmatprep.subr.bf16.mxu0 0
        %1221 = vmatpush1.bf16.msra.mxu0 0
        %1222 = vmatprep.mubr.bf16.mxu0 0
        %1223 = vmatmul.mubr.bf16.gmra.mrb[0].mxu0 %v1188
        %v1224 = vpop.f32.mrb[0].mxu0
        %v1225 = vadd.f32 %v1173, %v1224
        %v1226 = vpop.f32.mrb[0].mxu0
        %v1227 = vpop.f32.mrb[0].mxu0
        %v1228 = vpop.f32.mrb[0].mxu0
        %1229 = vdwg.mxu0
        %v1230 = vmul.f32 %v1225, %v1225
        %v1231 = vmul.f32 %v1225, %v1230
        %v1232 = vmul.f32 %v1231, 0.044715
        %v1233 = vadd.f32 %v1225, %v1232
        %v1234 = vmul.f32 %v1233, 0.7978846
        %v1235 = vtanh.pop %v1234
        %v1236 = vadd.f32 %v1235, 1.0
        %v1237 = vmul.f32 %v1236, 0.5
        %v1238 = vmul.f32 %v1225, %v1237
        %v1239 = vpack.c.bf16 %v1238, %v1238
        %v1240 = vld [vmem:[%s8] sm:$0xf]
        %v1241 = vld [vmem:[%s8 + $0x4] sm:$0xf]
        %v1242 = vld [vmem:[%s8 + $0x8] sm:$0xf]
        %v1243 = vld [vmem:[%s8 + $0xc] sm:$0xf]
        %v1244 = vld [vmem:[%s8 + $0x10] sm:$0xf]
        %v1245 = vld [vmem:[%s8 + $0x14] sm:$0xf]
        %v1246 = vld [vmem:[%s8 + $0x18] sm:$0xf]
        %v1247 = vld [vmem:[%s8 + $0x1c] sm:$0xf]
        %s1248 = scalar_lea.vmem %s9, 3
        %v1249 = vld [vmem:[%s1248] sm:$0x1]
        %v1251 = vlaneseq
        %v1252 = vshrl.u32 %v1251, 7
        %v1253 = vsub.s32 0, %v1252
        %v1254 = vrot.slane %v1249, %v1253
        %v1264 = vunpack.c.l.b16 %v1240
        %v1265 = vunpack.c.l.b16 %v1241
        %v1266 = vunpack.c.l.b16 %v1242
        %v1267 = vunpack.c.l.b16 %v1243
        %v1268 = vunpack.c.l.b16 %v1244
        %v1269 = vunpack.c.l.b16 %v1245
        %v1270 = vunpack.c.l.b16 %v1246
        %v1271 = vunpack.c.l.b16 %v1247
        %v1272 = vpack.c.b16 %v1265, %v1264
        %v1273 = vpack.c.b16 %v1267, %v1266
        %v1274 = vpack.c.b16 %v1269, %v1268
        %v1275 = vpack.c.b16 %v1271, %v1270
        %vm1280 = vcmask 523264
        %v1282 = vsel %vm1280, %v1239, 0
        %1284 = vmatprep.subr.bf16.mxu0 0
        %1285 = vmatpush1.bf16.msra.mxu0 %v1272
        %1286 = vmatprep.subr.bf16.mxu0 0
        %1287 = vmatpush1.bf16.msra.mxu0 %v1273
        %1288 = vmatprep.subr.bf16.mxu0 0
        %1289 = vmatpush1.bf16.msra.mxu0 %v1274
        %1290 = vmatprep.subr.bf16.mxu0 0
        %1291 = vmatpush1.bf16.msra.mxu0 %v1275
        %1292 = vmatprep.subr.bf16.mxu0 0
        %1293 = vmatpush1.bf16.msra.mxu0 0
        %1294 = vmatprep.subr.bf16.mxu0 0
        %1295 = vmatpush1.bf16.msra.mxu0 0
        %1296 = vmatprep.subr.bf16.mxu0 0
        %1297 = vmatpush1.bf16.msra.mxu0 0
        %1298 = vmatprep.subr.bf16.mxu0 0
        %1299 = vmatpush1.bf16.msra.mxu0 0
        %1300 = vmatprep.subr.bf16.mxu0 0
        %1301 = vmatpush1.bf16.msra.mxu0 0
        %1302 = vmatprep.subr.bf16.mxu0 0
        %1303 = vmatpush1.bf16.msra.mxu0 0
        %1304 = vmatprep.subr.bf16.mxu0 0
        %1305 = vmatpush1.bf16.msra.mxu0 0
        %1306 = vmatprep.subr.bf16.mxu0 0
        %1307 = vmatpush1.bf16.msra.mxu0 0
        %1308 = vmatprep.subr.bf16.mxu0 0
        %1309 = vmatpush1.bf16.msra.mxu0 0
        %1310 = vmatprep.subr.bf16.mxu0 0
        %1311 = vmatpush1.bf16.msra.mxu0 0
        %1312 = vmatprep.subr.bf16.mxu0 0
        %1313 = vmatpush1.bf16.msra.mxu0 0
        %1314 = vmatprep.subr.bf16.mxu0 0
        %1315 = vmatpush1.bf16.msra.mxu0 0
        %1316 = vmatprep.mubr.bf16.mxu0 0
        %1317 = vmatmul.mubr.bf16.gmra.mrb[0].mxu0 %v1282
        %v1318 = vpop.f32.mrb[0].mxu0
        %v1319 = vadd.f32 %v1254, %v1318
        %v1320 = vpop.f32.mrb[0].mxu0
        %v1321 = vpop.f32.mrb[0].mxu0
        %v1322 = vpop.f32.mrb[0].mxu0
        %1323 = vdwg.mxu0
        %v1324 = vadd.f32 %v1162, %v1319
        %s1325 = scalar_lea.vmem %s9, 4
        %v1326 = vld [vmem:[%s1325] sm:$0x1]
        %s1327 = scalar_lea.vmem %s9, 5
        %v1328 = vld [vmem:[%s1327] sm:$0x1]
        %v1329 = vsel %vm380, %v1324, 0.0
        %1330 = vadd.xlane.f32.xlu0 %v1329
        %v1331 = vpop.xlane.xlu0 %1330
        %v1332 = vmul.f32 %v1331, %v384
        %v1333 = vsub.f32 %v1324, %v1332
        %v1334 = vmul.f32 %v1333, %v1333
        %v1335 = vsel %vm380, %v1334, 0.0
        %1336 = vadd.xlane.f32.xlu0 %v1335
        %v1337 = vpop.xlane.xlu0 %1336
        %v1338 = vmul.f32 %v1337, %v384
        %v1339 = vadd.f32 %v1338, 1e-12
        %v1340 = vrsqrt.pop %v1339
        %v1341 = vmul.f32 %v1333, %v1340
        %v1343 = vlaneseq
        %v1344 = vshrl.u32 %v1343, 7
        %v1345 = vsub.s32 0, %v1344
        %v1346 = vrot.slane %v1326, %v1345
        %v1348 = vmul.f32 %v1341, %v1346
        %v1350 = vlaneseq
        %v1351 = vshrl.u32 %v1350, 7
        %v1352 = vsub.s32 0, %v1351
        %v1353 = vrot.slane %v1328, %v1352
        %v1355 = vadd.f32 %v1348, %v1353
        %v1356 = vpack.c.bf16 %v1355, %v1355
        %s1357 = scalar_lea.vmem %s3, 32
        %v1358 = vld [vmem:[%s1357] sm:$0xf]
        %v1359 = vld [vmem:[%s1357 + $0x4] sm:$0xf]
        %v1360 = vld [vmem:[%s1357 + $0x8] sm:$0xf]
        %v1361 = vld [vmem:[%s1357 + $0xc] sm:$0xf]
        %s1362 = scalar_lea.vmem %s4, 2
        %v1363 = vld [vmem:[%s1362] sm:$0x1]
        %v1365 = vlaneseq
        %v1366 = vshrl.u32 %v1365, 7
        %v1367 = vsub.s32 0, %v1366
        %v1368 = vrot.slane %v1363, %v1367
        %v1374 = vunpack.c.l.b16 %v1358
        %v1375 = vunpack.c.l.b16 %v1359
        %v1376 = vunpack.c.l.b16 %v1360
        %v1377 = vunpack.c.l.b16 %v1361
        %v1378 = vpack.c.b16 %v1375, %v1374
        %v1379 = vpack.c.b16 %v1377, %v1376
        %v1383 = vsel %vm380, %v1356, 0
        %1385 = vmatprep.subr.bf16.mxu0 0
        %1386 = vmatpush1.bf16.msra.mxu0 %v1378
        %1387 = vmatprep.subr.bf16.mxu0 0
        %1388 = vmatpush1.bf16.msra.mxu0 %v1379
        %1389 = vmatprep.subr.bf16.mxu0 0
        %1390 = vmatpush1.bf16.msra.mxu0 0
        %1391 = vmatprep.subr.bf16.mxu0 0
        %1392 = vmatpush1.bf16.msra.mxu0 0
        %1393 = vmatprep.subr.bf16.mxu0 0
        %1394 = vmatpush1.bf16.msra.mxu0 0
        %1395 = vmatprep.subr.bf16.mxu0 0
        %1396 = vmatpush1.bf16.msra.mxu0 0
        %1397 = vmatprep.subr.bf16.mxu0 0
        %1398 = vmatpush1.bf16.msra.mxu0 0
        %1399 = vmatprep.subr.bf16.mxu0 0
        %1400 = vmatpush1.bf16.msra.mxu0 0
        %1401 = vmatprep.subr.bf16.mxu0 0
        %1402 = vmatpush1.bf16.msra.mxu0 0
        %1403 = vmatprep.subr.bf16.mxu0 0
        %1404 = vmatpush1.bf16.msra.mxu0 0
        %1405 = vmatprep.subr.bf16.mxu0 0
        %1406 = vmatpush1.bf16.msra.mxu0 0
        %1407 = vmatprep.subr.bf16.mxu0 0
        %1408 = vmatpush1.bf16.msra.mxu0 0
        %1409 = vmatprep.subr.bf16.mxu0 0
        %1410 = vmatpush1.bf16.msra.mxu0 0
        %1411 = vmatprep.subr.bf16.mxu0 0
        %1412 = vmatpush1.bf16.msra.mxu0 0
        %1413 = vmatprep.subr.bf16.mxu0 0
        %1414 = vmatpush1.bf16.msra.mxu0 0
        %1415 = vmatprep.subr.bf16.mxu0 0
        %1416 = vmatpush1.bf16.msra.mxu0 0
        %1417 = vmatprep.mubr.bf16.mxu0 0
        %1418 = vmatmul.mubr.bf16.gmra.mrb[0].mxu0 %v1383
        %v1419 = vpop.f32.mrb[0].mxu0
        %v1420 = vadd.f32 %v1368, %v1419
        %v1421 = vpop.f32.mrb[0].mxu0
        %v1422 = vpop.f32.mrb[0].mxu0
        %v1423 = vpop.f32.mrb[0].mxu0
        %1424 = vdwg.mxu0
        %s1425 = scalar_lea.vmem %s3, 96
        %v1426 = vld [vmem:[%s1425] sm:$0xf]
        %v1427 = vld [vmem:[%s1425 + $0x4] sm:$0xf]
        %v1428 = vld [vmem:[%s1425 + $0x8] sm:$0xf]
        %v1429 = vld [vmem:[%s1425 + $0xc] sm:$0xf]
        %s1430 = scalar_lea.vmem %s4, 6
        %v1431 = vld [vmem:[%s1430] sm:$0x1]
        %v1433 = vlaneseq
        %v1434 = vshrl.u32 %v1433, 7
        %v1435 = vsub.s32 0, %v1434
        %v1436 = vrot.slane %v1431, %v1435
        %v1442 = vunpack.c.l.b16 %v1426
        %v1443 = vunpack.c.l.b16 %v1427
        %v1444 = vunpack.c.l.b16 %v1428
        %v1445 = vunpack.c.l.b16 %v1429
        %v1446 = vpack.c.b16 %v1443, %v1442
        %v1447 = vpack.c.b16 %v1445, %v1444
        %1450 = vmatprep.subr.bf16.mxu0 0
        %1451 = vmatpush1.bf16.msra.mxu0 %v1446
        %1452 = vmatprep.subr.bf16.mxu0 0
        %1453 = vmatpush1.bf16.msra.mxu0 %v1447
        %1454 = vmatprep.subr.bf16.mxu0 0
        %1455 = vmatpush1.bf16.msra.mxu0 0
        %1456 = vmatprep.subr.bf16.mxu0 0
        %1457 = vmatpush1.bf16.msra.mxu0 0
        %1458 = vmatprep.subr.bf16.mxu0 0
        %1459 = vmatpush1.bf16.msra.mxu0 0
        %1460 = vmatprep.subr.bf16.mxu0 0
        %1461 = vmatpush1.bf16.msra.mxu0 0
        %1462 = vmatprep.subr.bf16.mxu0 0
        %1463 = vmatpush1.bf16.msra.mxu0 0
        %1464 = vmatprep.subr.bf16.mxu0 0
        %1465 = vmatpush1.bf16.msra.mxu0 0
        %1466 = vmatprep.subr.bf16.mxu0 0
        %1467 = vmatpush1.bf16.msra.mxu0 0
        %1468 = vmatprep.subr.bf16.mxu0 0
        %1469 = vmatpush1.bf16.msra.mxu0 0
        %1470 = vmatprep.subr.bf16.mxu0 0
        %1471 = vmatpush1.bf16.msra.mxu0 0
        %1472 = vmatprep.subr.bf16.mxu0 0
        %1473 = vmatpush1.bf16.msra.mxu0 0
        %1474 = vmatprep.subr.bf16.mxu0 0
        %1475 = vmatpush1.bf16.msra.mxu0 0
        %1476 = vmatprep.subr.bf16.mxu0 0
        %1477 = vmatpush1.bf16.msra.mxu0 0
        %1478 = vmatprep.subr.bf16.mxu0 0
        %1479 = vmatpush1.bf16.msra.mxu0 0
        %1480 = vmatprep.subr.bf16.mxu0 0
        %1481 = vmatpush1.bf16.msra.mxu0 0
        %1482 = vmatprep.mubr.bf16.mxu0 0
        %1483 = vmatmul.mubr.bf16.gmra.mrb[0].mxu0 %v1383
        %v1484 = vpop.f32.mrb[0].mxu0
        %v1485 = vadd.f32 %v1436, %v1484
        %v1486 = vpop.f32.mrb[0].mxu0
        %v1487 = vpop.f32.mrb[0].mxu0
        %v1488 = vpop.f32.mrb[0].mxu0
        %1489 = vdwg.mxu0
        %s1490 = scalar_lea.vmem %s3, 160
        %v1491 = vld [vmem:[%s1490] sm:$0xf]
        %v1492 = vld [vmem:[%s1490 + $0x4] sm:$0xf]
        %v1493 = vld [vmem:[%s1490 + $0x8] sm:$0xf]
        %v1494 = vld [vmem:[%s1490 + $0xc] sm:$0xf]
        %s1495 = scalar_lea.vmem %s4, 10
        %v1496 = vld [vmem:[%s1495] sm:$0x1]
        %v1498 = vlaneseq
        %v1499 = vshrl.u32 %v1498, 7
        %v1500 = vsub.s32 0, %v1499
        %v1501 = vrot.slane %v1496, %v1500
        %v1507 = vunpack.c.l.b16 %v1491
        %v1508 = vunpack.c.l.b16 %v1492
        %v1509 = vunpack.c.l.b16 %v1493
        %v1510 = vunpack.c.l.b16 %v1494
        %v1511 = vpack.c.b16 %v1508, %v1507
        %v1512 = vpack.c.b16 %v1510, %v1509
        %1515 = vmatprep.subr.bf16.mxu0 0
        %1516 = vmatpush1.bf16.msra.mxu0 %v1511
        %1517 = vmatprep.subr.bf16.mxu0 0
        %1518 = vmatpush1.bf16.msra.mxu0 %v1512
        %1519 = vmatprep.subr.bf16.mxu0 0
        %1520 = vmatpush1.bf16.msra.mxu0 0
        %1521 = vmatprep.subr.bf16.mxu0 0
        %1522 = vmatpush1.bf16.msra.mxu0 0
        %1523 = vmatprep.subr.bf16.mxu0 0
        %1524 = vmatpush1.bf16.msra.mxu0 0
        %1525 = vmatprep.subr.bf16.mxu0 0
        %1526 = vmatpush1.bf16.msra.mxu0 0
        %1527 = vmatprep.subr.bf16.mxu0 0
        %1528 = vmatpush1.bf16.msra.mxu0 0
        %1529 = vmatprep.subr.bf16.mxu0 0
        %1530 = vmatpush1.bf16.msra.mxu0 0
        %1531 = vmatprep.subr.bf16.mxu0 0
        %1532 = vmatpush1.bf16.msra.mxu0 0
        %1533 = vmatprep.subr.bf16.mxu0 0
        %1534 = vmatpush1.bf16.msra.mxu0 0
        %1535 = vmatprep.subr.bf16.mxu0 0
        %1536 = vmatpush1.bf16.msra.mxu0 0
        %1537 = vmatprep.subr.bf16.mxu0 0
        %1538 = vmatpush1.bf16.msra.mxu0 0
        %1539 = vmatprep.subr.bf16.mxu0 0
        %1540 = vmatpush1.bf16.msra.mxu0 0
        %1541 = vmatprep.subr.bf16.mxu0 0
        %1542 = vmatpush1.bf16.msra.mxu0 0
        %1543 = vmatprep.subr.bf16.mxu0 0
        %1544 = vmatpush1.bf16.msra.mxu0 0
        %1545 = vmatprep.subr.bf16.mxu0 0
        %1546 = vmatpush1.bf16.msra.mxu0 0
        %1547 = vmatprep.mubr.bf16.mxu0 0
        %1548 = vmatmul.mubr.bf16.gmra.mrb[0].mxu0 %v1383
        %v1549 = vpop.f32.mrb[0].mxu0
        %v1550 = vadd.f32 %v1501, %v1549
        %v1551 = vpop.f32.mrb[0].mxu0
        %v1552 = vpop.f32.mrb[0].mxu0
        %v1553 = vpop.f32.mrb[0].mxu0
        %1554 = vdwg.mxu0
        %v1555 = vpack.c.bf16 %v1420, %v1420
        %v1556 = vpack.c.bf16 %v1485, %v1485
        %v1558 = vsel %vm608, %v1555, 0
        %v1561 = vsel %vm608, %v1556, 0
        %1563 = vmatprep.subr.bf16.mxu0 0
        %1564 = vmatpush1.bf16.xpose.msra.mxu0 %v1561
        %1565 = vmatprep.subr.bf16.mxu0 0
        %1566 = vmatpush1.bf16.xpose.msra.mxu0 0
        %1567 = vmatprep.subr.bf16.mxu0 0
        %1568 = vmatpush1.bf16.xpose.msra.mxu0 0
        %1569 = vmatprep.subr.bf16.mxu0 0
        %1570 = vmatpush1.bf16.xpose.msra.mxu0 0
        %1571 = vmatprep.subr.bf16.mxu0 0
        %1572 = vmatpush1.bf16.xpose.msra.mxu0 0
        %1573 = vmatprep.subr.bf16.mxu0 0
        %1574 = vmatpush1.bf16.xpose.msra.mxu0 0
        %1575 = vmatprep.subr.bf16.mxu0 0
        %1576 = vmatpush1.bf16.xpose.msra.mxu0 0
        %1577 = vmatprep.subr.bf16.mxu0 0
        %1578 = vmatpush1.bf16.xpose.msra.mxu0 0
        %1579 = vmatprep.subr.bf16.mxu0 0
        %1580 = vmatpush1.bf16.xpose.msra.mxu0 0
        %1581 = vmatprep.subr.bf16.mxu0 0
        %1582 = vmatpush1.bf16.xpose.msra.mxu0 0
        %1583 = vmatprep.subr.bf16.mxu0 0
        %1584 = vmatpush1.bf16.xpose.msra.mxu0 0
        %1585 = vmatprep.subr.bf16.mxu0 0
        %1586 = vmatpush1.bf16.xpose.msra.mxu0 0
        %1587 = vmatprep.subr.bf16.mxu0 0
        %1588 = vmatpush1.bf16.xpose.msra.mxu0 0
        %1589 = vmatprep.subr.bf16.mxu0 0
        %1590 = vmatpush1.bf16.xpose.msra.mxu0 0
        %1591 = vmatprep.subr.bf16.mxu0 0
        %1592 = vmatpush1.bf16.xpose.msra.mxu0 0
        %1593 = vmatprep.subr.bf16.mxu0 0
        %1594 = vmatpush1.bf16.xpose.msra.mxu0 0
        %1595 = vmatprep.mubr.bf16.mxu0 0
        %1596 = vmatmul.mubr.bf16.gmra.mrb[0].mxu0 %v1558
        %v1597 = vpop.f32.mrb[0].mxu0
        %v1598 = vadd.f32 %v375, %v1597
        %v1599 = vpop.f32.mrb[0].mxu0
        %v1600 = vpop.f32.mrb[0].mxu0
        %v1601 = vpop.f32.mrb[0].mxu0
        %1602 = vdwg.mxu0
        %v1603 = vsel %vm655, %v1598, -inf
        %1604 = vmax.xlane.f32.xlu0 %v1603
        %v1605 = vpop.xlane.xlu0 %1604
        %v1606 = vsub.f32 %v1598, %v1605
        %v1607 = vmul.f32 %v1606, 1.442695
        %v1608 = vpow.pop %v1607
        %v1609 = vsel %vm655, %v1608, 0.0
        %1610 = vadd.xlane.f32.xlu0 %v1609
        %v1611 = vpop.xlane.xlu0 %1610
        %v1612 = vrcp.pop %v1611
        %v1613 = vmul.f32 %v1608, %v1612
        %v1614 = vpack.c.bf16 %v1613, %v1613
        %v1615 = vpack.c.bf16 %v1550, %v1550
        %v1617 = vsel %vm655, %v1614, 0
        %v1620 = vsel %vm672, %v1615, 0
        %1622 = vmatprep.subr.bf16.mxu0 0
        %1623 = vmatpush1.bf16.msra.mxu0 %v1620
        %1624 = vmatprep.subr.bf16.mxu0 0
        %1625 = vmatpush1.bf16.msra.mxu0 0
        %1626 = vmatprep.subr.bf16.mxu0 0
        %1627 = vmatpush1.bf16.msra.mxu0 0
        %1628 = vmatprep.subr.bf16.mxu0 0
        %1629 = vmatpush1.bf16.msra.mxu0 0
        %1630 = vmatprep.subr.bf16.mxu0 0
        %1631 = vmatpush1.bf16.msra.mxu0 0
        %1632 = vmatprep.subr.bf16.mxu0 0
        %1633 = vmatpush1.bf16.msra.mxu0 0
        %1634 = vmatprep.subr.bf16.mxu0 0
        %1635 = vmatpush1.bf16.msra.mxu0 0
        %1636 = vmatprep.subr.bf16.mxu0 0
        %1637 = vmatpush1.bf16.msra.mxu0 0
        %1638 = vmatprep.subr.bf16.mxu0 0
        %1639 = vmatpush1.bf16.msra.mxu0 0
        %1640 = vmatprep.subr.bf16.mxu0 0
        %1641 = vmatpush1.bf16.msra.mxu0 0
        %1642 = vmatprep.subr.bf16.mxu0 0
        %1643 = vmatpush1.bf16.msra.mxu0 0
        %1644 = vmatprep.subr.bf16.mxu0 0
        %1645 = vmatpush1.bf16.msra.mxu0 0
        %1646 = vmatprep.subr.bf16.mxu0 0
        %1647 = vmatpush1.bf16.msra.mxu0 0
        %1648 = vmatprep.subr.bf16.mxu0 0
        %1649 = vmatpush1.bf16.msra.mxu0 0
        %1650 = vmatprep.subr.bf16.mxu0 0
        %1651 = vmatpush1.bf16.msra.mxu0 0
        %1652 = vmatprep.subr.bf16.mxu0 0
        %1653 = vmatpush1.bf16.msra.mxu0 0
        %1654 = vmatprep.mubr.bf16.mxu0 0
        %1655 = vmatmul.mubr.bf16.gmra.mrb[0].mxu0 %v1617
        %v1656 = vpop.f32.mrb[0].mxu0
        %v1657 = vadd.f32 0.0, %v1656
        %v1658 = vpop.f32.mrb[0].mxu0
        %v1659 = vpop.f32.mrb[0].mxu0
        %v1660 = vpop.f32.mrb[0].mxu0
        %1661 = vdwg.mxu0
        %v1662 = vpack.c.bf16 %v1657, %v1657
        %s1663 = scalar_lea.vmem %s5, 16
        %v1664 = vld [vmem:[%s1663] sm:$0xf]
        %v1665 = vld [vmem:[%s1663 + $0x4] sm:$0xf]
        %s1666 = scalar_lea.vmem %s3, 48
        %v1667 = vld [vmem:[%s1666] sm:$0xf]
        %v1668 = vld [vmem:[%s1666 + $0x4] sm:$0xf]
        %v1669 = vld [vmem:[%s1666 + $0x8] sm:$0xf]
        %v1670 = vld [vmem:[%s1666 + $0xc] sm:$0xf]
        %s1671 = scalar_lea.vmem %s4, 3
        %v1672 = vld [vmem:[%s1671] sm:$0x1]
        %v1674 = vlaneseq
        %v1675 = vshrl.u32 %v1674, 7
        %v1676 = vsub.s32 0, %v1675
        %v1677 = vrot.slane %v1672, %v1676
        %v1683 = vunpack.c.l.b16 %v1667
        %v1684 = vunpack.c.l.b16 %v1668
        %v1685 = vunpack.c.l.b16 %v1669
        %v1686 = vunpack.c.l.b16 %v1670
        %v1687 = vpack.c.b16 %v1684, %v1683
        %v1688 = vpack.c.b16 %v1686, %v1685
        %1691 = vmatprep.subr.bf16.mxu0 0
        %1692 = vmatpush1.bf16.msra.mxu0 %v1687
        %1693 = vmatprep.subr.bf16.mxu0 0
        %1694 = vmatpush1.bf16.msra.mxu0 %v1688
        %1695 = vmatprep.subr.bf16.mxu0 0
        %1696 = vmatpush1.bf16.msra.mxu0 0
        %1697 = vmatprep.subr.bf16.mxu0 0
        %1698 = vmatpush1.bf16.msra.mxu0 0
        %1699 = vmatprep.subr.bf16.mxu0 0
        %1700 = vmatpush1.bf16.msra.mxu0 0
        %1701 = vmatprep.subr.bf16.mxu0 0
        %1702 = vmatpush1.bf16.msra.mxu0 0
        %1703 = vmatprep.subr.bf16.mxu0 0
        %1704 = vmatpush1.bf16.msra.mxu0 0
        %1705 = vmatprep.subr.bf16.mxu0 0
        %1706 = vmatpush1.bf16.msra.mxu0 0
        %1707 = vmatprep.subr.bf16.mxu0 0
        %1708 = vmatpush1.bf16.msra.mxu0 0
        %1709 = vmatprep.subr.bf16.mxu0 0
        %1710 = vmatpush1.bf16.msra.mxu0 0
        %1711 = vmatprep.subr.bf16.mxu0 0
        %1712 = vmatpush1.bf16.msra.mxu0 0
        %1713 = vmatprep.subr.bf16.mxu0 0
        %1714 = vmatpush1.bf16.msra.mxu0 0
        %1715 = vmatprep.subr.bf16.mxu0 0
        %1716 = vmatpush1.bf16.msra.mxu0 0
        %1717 = vmatprep.subr.bf16.mxu0 0
        %1718 = vmatpush1.bf16.msra.mxu0 0
        %1719 = vmatprep.subr.bf16.mxu0 0
        %1720 = vmatpush1.bf16.msra.mxu0 0
        %1721 = vmatprep.subr.bf16.mxu0 0
        %1722 = vmatpush1.bf16.msra.mxu0 0
        %1723 = vmatprep.mubr.bf16.mxu0 0
        %1724 = vmatmul.mubr.bf16.gmra.mrb[0].mxu0 %v1383
        %v1725 = vpop.f32.mrb[0].mxu0
        %v1726 = vadd.f32 %v1677, %v1725
        %v1727 = vpop.f32.mrb[0].mxu0
        %v1728 = vpop.f32.mrb[0].mxu0
        %v1729 = vpop.f32.mrb[0].mxu0
        %1730 = vdwg.mxu0
        %s1731 = scalar_lea.vmem %s3, 112
        %v1732 = vld [vmem:[%s1731] sm:$0xf]
        %v1733 = vld [vmem:[%s1731 + $0x4] sm:$0xf]
        %v1734 = vld [vmem:[%s1731 + $0x8] sm:$0xf]
        %v1735 = vld [vmem:[%s1731 + $0xc] sm:$0xf]
        %s1736 = scalar_lea.vmem %s4, 7
        %v1737 = vld [vmem:[%s1736] sm:$0x1]
        %v1739 = vlaneseq
        %v1740 = vshrl.u32 %v1739, 7
        %v1741 = vsub.s32 0, %v1740
        %v1742 = vrot.slane %v1737, %v1741
        %v1748 = vunpack.c.l.b16 %v1732
        %v1749 = vunpack.c.l.b16 %v1733
        %v1750 = vunpack.c.l.b16 %v1734
        %v1751 = vunpack.c.l.b16 %v1735
        %v1752 = vpack.c.b16 %v1749, %v1748
        %v1753 = vpack.c.b16 %v1751, %v1750
        %1756 = vmatprep.subr.bf16.mxu0 0
        %1757 = vmatpush1.bf16.msra.mxu0 %v1752
        %1758 = vmatprep.subr.bf16.mxu0 0
        %1759 = vmatpush1.bf16.msra.mxu0 %v1753
        %1760 = vmatprep.subr.bf16.mxu0 0
        %1761 = vmatpush1.bf16.msra.mxu0 0
        %1762 = vmatprep.subr.bf16.mxu0 0
        %1763 = vmatpush1.bf16.msra.mxu0 0
        %1764 = vmatprep.subr.bf16.mxu0 0
        %1765 = vmatpush1.bf16.msra.mxu0 0
        %1766 = vmatprep.subr.bf16.mxu0 0
        %1767 = vmatpush1.bf16.msra.mxu0 0
        %1768 = vmatprep.subr.bf16.mxu0 0
        %1769 = vmatpush1.bf16.msra.mxu0 0
        %1770 = vmatprep.subr.bf16.mxu0 0
        %1771 = vmatpush1.bf16.msra.mxu0 0
        %1772 = vmatprep.subr.bf16.mxu0 0
        %1773 = vmatpush1.bf16.msra.mxu0 0
        %1774 = vmatprep.subr.bf16.mxu0 0
        %1775 = vmatpush1.bf16.msra.mxu0 0
        %1776 = vmatprep.subr.bf16.mxu0 0
        %1777 = vmatpush1.bf16.msra.mxu0 0
        %1778 = vmatprep.subr.bf16.mxu0 0
        %1779 = vmatpush1.bf16.msra.mxu0 0
        %1780 = vmatprep.subr.bf16.mxu0 0
        %1781 = vmatpush1.bf16.msra.mxu0 0
        %1782 = vmatprep.subr.bf16.mxu0 0
        %1783 = vmatpush1.bf16.msra.mxu0 0
        %1784 = vmatprep.subr.bf16.mxu0 0
        %1785 = vmatpush1.bf16.msra.mxu0 0
        %1786 = vmatprep.subr.bf16.mxu0 0
        %1787 = vmatpush1.bf16.msra.mxu0 0
        %1788 = vmatprep.mubr.bf16.mxu0 0
        %1789 = vmatmul.mubr.bf16.gmra.mrb[0].mxu0 %v1383
        %v1790 = vpop.f32.mrb[0].mxu0
        %v1791 = vadd.f32 %v1742, %v1790
        %v1792 = vpop.f32.mrb[0].mxu0
        %v1793 = vpop.f32.mrb[0].mxu0
        %v1794 = vpop.f32.mrb[0].mxu0
        %1795 = vdwg.mxu0
        %s1796 = scalar_lea.vmem %s3, 176
        %v1797 = vld [vmem:[%s1796] sm:$0xf]
        %v1798 = vld [vmem:[%s1796 + $0x4] sm:$0xf]
        %v1799 = vld [vmem:[%s1796 + $0x8] sm:$0xf]
        %v1800 = vld [vmem:[%s1796 + $0xc] sm:$0xf]
        %s1801 = scalar_lea.vmem %s4, 11
        %v1802 = vld [vmem:[%s1801] sm:$0x1]
        %v1804 = vlaneseq
        %v1805 = vshrl.u32 %v1804, 7
        %v1806 = vsub.s32 0, %v1805
        %v1807 = vrot.slane %v1802, %v1806
        %v1813 = vunpack.c.l.b16 %v1797
        %v1814 = vunpack.c.l.b16 %v1798
        %v1815 = vunpack.c.l.b16 %v1799
        %v1816 = vunpack.c.l.b16 %v1800
        %v1817 = vpack.c.b16 %v1814, %v1813
        %v1818 = vpack.c.b16 %v1816, %v1815
        %1821 = vmatprep.subr.bf16.mxu0 0
        %1822 = vmatpush1.bf16.msra.mxu0 %v1817
        %1823 = vmatprep.subr.bf16.mxu0 0
        %1824 = vmatpush1.bf16.msra.mxu0 %v1818
        %1825 = vmatprep.subr.bf16.mxu0 0
        %1826 = vmatpush1.bf16.msra.mxu0 0
        %1827 = vmatprep.subr.bf16.mxu0 0
        %1828 = vmatpush1.bf16.msra.mxu0 0
        %1829 = vmatprep.subr.bf16.mxu0 0
        %1830 = vmatpush1.bf16.msra.mxu0 0
        %1831 = vmatprep.subr.bf16.mxu0 0
        %1832 = vmatpush1.bf16.msra.mxu0 0
        %1833 = vmatprep.subr.bf16.mxu0 0
        %1834 = vmatpush1.bf16.msra.mxu0 0
        %1835 = vmatprep.subr.bf16.mxu0 0
        %1836 = vmatpush1.bf16.msra.mxu0 0
        %1837 = vmatprep.subr.bf16.mxu0 0
        %1838 = vmatpush1.bf16.msra.mxu0 0
        %1839 = vmatprep.subr.bf16.mxu0 0
        %1840 = vmatpush1.bf16.msra.mxu0 0
        %1841 = vmatprep.subr.bf16.mxu0 0
        %1842 = vmatpush1.bf16.msra.mxu0 0
        %1843 = vmatprep.subr.bf16.mxu0 0
        %1844 = vmatpush1.bf16.msra.mxu0 0
        %1845 = vmatprep.subr.bf16.mxu0 0
        %1846 = vmatpush1.bf16.msra.mxu0 0
        %1847 = vmatprep.subr.bf16.mxu0 0
        %1848 = vmatpush1.bf16.msra.mxu0 0
        %1849 = vmatprep.subr.bf16.mxu0 0
        %1850 = vmatpush1.bf16.msra.mxu0 0
        %1851 = vmatprep.subr.bf16.mxu0 0
        %1852 = vmatpush1.bf16.msra.mxu0 0
        %1853 = vmatprep.mubr.bf16.mxu0 0
        %1854 = vmatmul.mubr.bf16.gmra.mrb[0].mxu0 %v1383
        %v1855 = vpop.f32.mrb[0].mxu0
        %v1856 = vadd.f32 %v1807, %v1855
        %v1857 = vpop.f32.mrb[0].mxu0
        %v1858 = vpop.f32.mrb[0].mxu0
        %v1859 = vpop.f32.mrb[0].mxu0
        %1860 = vdwg.mxu0
        %v1861 = vpack.c.bf16 %v1726, %v1726
        %v1862 = vpack.c.bf16 %v1791, %v1791
        %v1864 = vsel %vm608, %v1861, 0
        %v1867 = vsel %vm608, %v1862, 0
        %1869 = vmatprep.subr.bf16.mxu0 0
        %1870 = vmatpush1.bf16.xpose.msra.mxu0 %v1867
        %1871 = vmatprep.subr.bf16.mxu0 0
        %1872 = vmatpush1.bf16.xpose.msra.mxu0 0
        %1873 = vmatprep.subr.bf16.mxu0 0
        %1874 = vmatpush1.bf16.xpose.msra.mxu0 0
        %1875 = vmatprep.subr.bf16.mxu0 0
        %1876 = vmatpush1.bf16.xpose.msra.mxu0 0
        %1877 = vmatprep.subr.bf16.mxu0 0
        %1878 = vmatpush1.bf16.xpose.msra.mxu0 0
        %1879 = vmatprep.subr.bf16.mxu0 0
        %1880 = vmatpush1.bf16.xpose.msra.mxu0 0
        %1881 = vmatprep.subr.bf16.mxu0 0
        %1882 = vmatpush1.bf16.xpose.msra.mxu0 0
        %1883 = vmatprep.subr.bf16.mxu0 0
        %1884 = vmatpush1.bf16.xpose.msra.mxu0 0
        %1885 = vmatprep.subr.bf16.mxu0 0
        %1886 = vmatpush1.bf16.xpose.msra.mxu0 0
        %1887 = vmatprep.subr.bf16.mxu0 0
        %1888 = vmatpush1.bf16.xpose.msra.mxu0 0
        %1889 = vmatprep.subr.bf16.mxu0 0
        %1890 = vmatpush1.bf16.xpose.msra.mxu0 0
        %1891 = vmatprep.subr.bf16.mxu0 0
        %1892 = vmatpush1.bf16.xpose.msra.mxu0 0
        %1893 = vmatprep.subr.bf16.mxu0 0
        %1894 = vmatpush1.bf16.xpose.msra.mxu0 0
        %1895 = vmatprep.subr.bf16.mxu0 0
        %1896 = vmatpush1.bf16.xpose.msra.mxu0 0
        %1897 = vmatprep.subr.bf16.mxu0 0
        %1898 = vmatpush1.bf16.xpose.msra.mxu0 0
        %1899 = vmatprep.subr.bf16.mxu0 0
        %1900 = vmatpush1.bf16.xpose.msra.mxu0 0
        %1901 = vmatprep.mubr.bf16.mxu0 0
        %1902 = vmatmul.mubr.bf16.gmra.mrb[0].mxu0 %v1864
        %v1903 = vpop.f32.mrb[0].mxu0
        %v1904 = vadd.f32 %v375, %v1903
        %v1905 = vpop.f32.mrb[0].mxu0
        %v1906 = vpop.f32.mrb[0].mxu0
        %v1907 = vpop.f32.mrb[0].mxu0
        %1908 = vdwg.mxu0
        %v1909 = vsel %vm655, %v1904, -inf
        %1910 = vmax.xlane.f32.xlu0 %v1909
        %v1911 = vpop.xlane.xlu0 %1910
        %v1912 = vsub.f32 %v1904, %v1911
        %v1913 = vmul.f32 %v1912, 1.442695
        %v1914 = vpow.pop %v1913
        %v1915 = vsel %vm655, %v1914, 0.0
        %1916 = vadd.xlane.f32.xlu0 %v1915
        %v1917 = vpop.xlane.xlu0 %1916
        %v1918 = vrcp.pop %v1917
        %v1919 = vmul.f32 %v1914, %v1918
        %v1920 = vpack.c.bf16 %v1919, %v1919
        %v1921 = vpack.c.bf16 %v1856, %v1856
        %v1923 = vsel %vm655, %v1920, 0
        %v1926 = vsel %vm672, %v1921, 0
        %1928 = vmatprep.subr.bf16.mxu0 0
        %1929 = vmatpush1.bf16.msra.mxu0 %v1926
        %1930 = vmatprep.subr.bf16.mxu0 0
        %1931 = vmatpush1.bf16.msra.mxu0 0
        %1932 = vmatprep.subr.bf16.mxu0 0
        %1933 = vmatpush1.bf16.msra.mxu0 0
        %1934 = vmatprep.subr.bf16.mxu0 0
        %1935 = vmatpush1.bf16.msra.mxu0 0
        %1936 = vmatprep.subr.bf16.mxu0 0
        %1937 = vmatpush1.bf16.msra.mxu0 0
        %1938 = vmatprep.subr.bf16.mxu0 0
        %1939 = vmatpush1.bf16.msra.mxu0 0
        %1940 = vmatprep.subr.bf16.mxu0 0
        %1941 = vmatpush1.bf16.msra.mxu0 0
        %1942 = vmatprep.subr.bf16.mxu0 0
        %1943 = vmatpush1.bf16.msra.mxu0 0
        %1944 = vmatprep.subr.bf16.mxu0 0
        %1945 = vmatpush1.bf16.msra.mxu0 0
        %1946 = vmatprep.subr.bf16.mxu0 0
        %1947 = vmatpush1.bf16.msra.mxu0 0
        %1948 = vmatprep.subr.bf16.mxu0 0
        %1949 = vmatpush1.bf16.msra.mxu0 0
        %1950 = vmatprep.subr.bf16.mxu0 0
        %1951 = vmatpush1.bf16.msra.mxu0 0
        %1952 = vmatprep.subr.bf16.mxu0 0
        %1953 = vmatpush1.bf16.msra.mxu0 0
        %1954 = vmatprep.subr.bf16.mxu0 0
        %1955 = vmatpush1.bf16.msra.mxu0 0
        %1956 = vmatprep.subr.bf16.mxu0 0
        %1957 = vmatpush1.bf16.msra.mxu0 0
        %1958 = vmatprep.subr.bf16.mxu0 0
        %1959 = vmatpush1.bf16.msra.mxu0 0
        %1960 = vmatprep.mubr.bf16.mxu0 0
        %1961 = vmatmul.mubr.bf16.gmra.mrb[0].mxu0 %v1923
        %v1962 = vpop.f32.mrb[0].mxu0
        %v1963 = vadd.f32 0.0, %v1962
        %v1964 = vpop.f32.mrb[0].mxu0
        %v1965 = vpop.f32.mrb[0].mxu0
        %v1966 = vpop.f32.mrb[0].mxu0
        %1967 = vdwg.mxu0
        %v1968 = vpack.c.bf16 %v1963, %v1963
        %s1969 = scalar_lea.vmem %s5, 24
        %v1970 = vld [vmem:[%s1969] sm:$0xf]
        %v1971 = vld [vmem:[%s1969 + $0x4] sm:$0xf]
        %v1974 = vunpack.c.l.b16 %v1970
        %v1975 = vunpack.c.l.b16 %v1971
        %v1976 = vpack.c.b16 %v1975, %v1974
        %v1979 = vsel %vm608, %v1968, 0
        %1981 = vmatprep.subr.bf16.mxu0 0
        %1982 = vmatpush1.bf16.msra.mxu0 %v1976
        %1983 = vmatprep.subr.bf16.mxu0 0
        %1984 = vmatpush1.bf16.msra.mxu0 0
        %1985 = vmatprep.subr.bf16.mxu0 0
        %1986 = vmatpush1.bf16.msra.mxu0 0
        %1987 = vmatprep.subr.bf16.mxu0 0
        %1988 = vmatpush1.bf16.msra.mxu0 0
        %1989 = vmatprep.subr.bf16.mxu0 0
        %1990 = vmatpush1.bf16.msra.mxu0 0
        %1991 = vmatprep.subr.bf16.mxu0 0
        %1992 = vmatpush1.bf16.msra.mxu0 0
        %1993 = vmatprep.subr.bf16.mxu0 0
        %1994 = vmatpush1.bf16.msra.mxu0 0
        %1995 = vmatprep.subr.bf16.mxu0 0
        %1996 = vmatpush1.bf16.msra.mxu0 0
        %1997 = vmatprep.subr.bf16.mxu0 0
        %1998 = vmatpush1.bf16.msra.mxu0 0
        %1999 = vmatprep.subr.bf16.mxu0 0
        %2000 = vmatpush1.bf16.msra.mxu0 0
        %2001 = vmatprep.subr.bf16.mxu0 0
        %2002 = vmatpush1.bf16.msra.mxu0 0
        %2003 = vmatprep.subr.bf16.mxu0 0
        %2004 = vmatpush1.bf16.msra.mxu0 0
        %2005 = vmatprep.subr.bf16.mxu0 0
        %2006 = vmatpush1.bf16.msra.mxu0 0
        %2007 = vmatprep.subr.bf16.mxu0 0
        %2008 = vmatpush1.bf16.msra.mxu0 0
        %2009 = vmatprep.subr.bf16.mxu0 0
        %2010 = vmatpush1.bf16.msra.mxu0 0
        %2011 = vmatprep.subr.bf16.mxu0 0
        %2012 = vmatpush1.bf16.msra.mxu0 0
        %2013 = vmatprep.mubr.bf16.mxu0 0
        %2014 = vmatmul.mubr.bf16.gmra.mrb[0].mxu0 %v1979
        %v2015 = vpop.f32.mrb[0].mxu0
        %v2016 = vadd.f32 0.0, %v2015
        %v2017 = vpop.f32.mrb[0].mxu0
        %v2018 = vpop.f32.mrb[0].mxu0
        %v2019 = vpop.f32.mrb[0].mxu0
        %2020 = vdwg.mxu0
        %v2023 = vunpack.c.l.b16 %v1664
        %v2024 = vunpack.c.l.b16 %v1665
        %v2025 = vpack.c.b16 %v2024, %v2023
        %v2028 = vsel %vm608, %v1662, 0
        %2030 = vmatprep.subr.bf16.mxu0 0
        %2031 = vmatpush1.bf16.msra.mxu0 %v2025
        %2032 = vmatprep.subr.bf16.mxu0 0
        %2033 = vmatpush1.bf16.msra.mxu0 0
        %2034 = vmatprep.subr.bf16.mxu0 0
        %2035 = vmatpush1.bf16.msra.mxu0 0
        %2036 = vmatprep.subr.bf16.mxu0 0
        %2037 = vmatpush1.bf16.msra.mxu0 0
        %2038 = vmatprep.subr.bf16.mxu0 0
        %2039 = vmatpush1.bf16.msra.mxu0 0
        %2040 = vmatprep.subr.bf16.mxu0 0
        %2041 = vmatpush1.bf16.msra.mxu0 0
        %2042 = vmatprep.subr.bf16.mxu0 0
        %2043 = vmatpush1.bf16.msra.mxu0 0
        %2044 = vmatprep.subr.bf16.mxu0 0
        %2045 = vmatpush1.bf16.msra.mxu0 0
        %2046 = vmatprep.subr.bf16.mxu0 0
        %2047 = vmatpush1.bf16.msra.mxu0 0
        %2048 = vmatprep.subr.bf16.mxu0 0
        %2049 = vmatpush1.bf16.msra.mxu0 0
        %2050 = vmatprep.subr.bf16.mxu0 0
        %2051 = vmatpush1.bf16.msra.mxu0 0
        %2052 = vmatprep.subr.bf16.mxu0 0
        %2053 = vmatpush1.bf16.msra.mxu0 0
        %2054 = vmatprep.subr.bf16.mxu0 0
        %2055 = vmatpush1.bf16.msra.mxu0 0
        %2056 = vmatprep.subr.bf16.mxu0 0
        %2057 = vmatpush1.bf16.msra.mxu0 0
        %2058 = vmatprep.subr.bf16.mxu0 0
        %2059 = vmatpush1.bf16.msra.mxu0 0
        %2060 = vmatprep.subr.bf16.mxu0 0
        %2061 = vmatpush1.bf16.msra.mxu0 0
        %2062 = vmatprep.mubr.bf16.mxu0 0
        %2063 = vmatmul.mubr.bf16.gmra.mrb[0].mxu0 %v2028
        %v2064 = vpop.f32.mrb[0].mxu0
        %v2065 = vadd.f32 %v2016, %v2064
        %v2066 = vpop.f32.mrb[0].mxu0
        %v2067 = vpop.f32.mrb[0].mxu0
        %v2068 = vpop.f32.mrb[0].mxu0
        %2069 = vdwg.mxu0
        %s2070 = scalar_lea.vmem %s9, 6
        %v2071 = vld [vmem:[%s2070] sm:$0x1]
        %v2073 = vlaneseq
        %v2074 = vshrl.u32 %v2073, 7
        %v2075 = vsub.s32 0, %v2074
        %v2076 = vrot.slane %v2071, %v2075
        %v2078 = vadd.f32 %v2065, %v2076
        %v2079 = vadd.f32 %v1355, %v2078
        %s2080 = scalar_lea.vmem %s9, 7
        %v2081 = vld [vmem:[%s2080] sm:$0x1]
        %s2082 = scalar_lea.vmem %s9, 8
        %v2083 = vld [vmem:[%s2082] sm:$0x1]
        %v2084 = vsel %vm380, %v2079, 0.0
        %2085 = vadd.xlane.f32.xlu0 %v2084
        %v2086 = vpop.xlane.xlu0 %2085
        %v2087 = vmul.f32 %v2086, %v384
        %v2088 = vsub.f32 %v2079, %v2087
        %v2089 = vmul.f32 %v2088, %v2088
        %v2090 = vsel %vm380, %v2089, 0.0
        %2091 = vadd.xlane.f32.xlu0 %v2090
        %v2092 = vpop.xlane.xlu0 %2091
        %v2093 = vmul.f32 %v2092, %v384
        %v2094 = vadd.f32 %v2093, 1e-12
        %v2095 = vrsqrt.pop %v2094
        %v2096 = vmul.f32 %v2088, %v2095
        %v2098 = vlaneseq
        %v2099 = vshrl.u32 %v2098, 7
        %v2100 = vsub.s32 0, %v2099
        %v2101 = vrot.slane %v2081, %v2100
        %v2103 = vmul.f32 %v2096, %v2101
        %v2105 = vlaneseq
        %v2106 = vshrl.u32 %v2105, 7
        %v2107 = vsub.s32 0, %v2106
        %v2108 = vrot.slane %v2083, %v2107
        %v2110 = vadd.f32 %v2103, %v2108
        %v2111 = vpack.c.bf16 %v2110, %v2110
        %s2112 = scalar_lea.vmem %s6, 16
        %v2113 = vld [vmem:[%s2112] sm:$0xf]
        %v2114 = vld [vmem:[%s2112 + $0x4] sm:$0xf]
        %v2115 = vld [vmem:[%s2112 + $0x8] sm:$0xf]
        %v2116 = vld [vmem:[%s2112 + $0xc] sm:$0xf]
        %s2117 = scalar_lea.vmem %s7, 1
        %v2118 = vld [vmem:[%s2117] sm:$0x1]
        %v2120 = vlaneseq
        %v2121 = vshrl.u32 %v2120, 7
        %v2122 = vsub.s32 0, %v2121
        %v2123 = vrot.slane %v2118, %v2122
        %v2129 = vunpack.c.l.b16 %v2113
        %v2130 = vunpack.c.l.b16 %v2114
        %v2131 = vunpack.c.l.b16 %v2115
        %v2132 = vunpack.c.l.b16 %v2116
        %v2133 = vpack.c.b16 %v2130, %v2129
        %v2134 = vpack.c.b16 %v2132, %v2131
        %v2138 = vsel %vm380, %v2111, 0
        %2140 = vmatprep.subr.bf16.mxu0 0
        %2141 = vmatpush1.bf16.msra.mxu0 %v2133
        %2142 = vmatprep.subr.bf16.mxu0 0
        %2143 = vmatpush1.bf16.msra.mxu0 %v2134
        %2144 = vmatprep.subr.bf16.mxu0 0
        %2145 = vmatpush1.bf16.msra.mxu0 0
        %2146 = vmatprep.subr.bf16.mxu0 0
        %2147 = vmatpush1.bf16.msra.mxu0 0
        %2148 = vmatprep.subr.bf16.mxu0 0
        %2149 = vmatpush1.bf16.msra.mxu0 0
        %2150 = vmatprep.subr.bf16.mxu0 0
        %2151 = vmatpush1.bf16.msra.mxu0 0
        %2152 = vmatprep.subr.bf16.mxu0 0
        %2153 = vmatpush1.bf16.msra.mxu0 0
        %2154 = vmatprep.subr.bf16.mxu0 0
        %2155 = vmatpush1.bf16.msra.mxu0 0
        %2156 = vmatprep.subr.bf16.mxu0 0
        %2157 = vmatpush1.bf16.msra.mxu0 0
        %2158 = vmatprep.subr.bf16.mxu0 0
        %2159 = vmatpush1.bf16.msra.mxu0 0
        %2160 = vmatprep.subr.bf16.mxu0 0
        %2161 = vmatpush1.bf16.msra.mxu0 0
        %2162 = vmatprep.subr.bf16.mxu0 0
        %2163 = vmatpush1.bf16.msra.mxu0 0
        %2164 = vmatprep.subr.bf16.mxu0 0
        %2165 = vmatpush1.bf16.msra.mxu0 0
        %2166 = vmatprep.subr.bf16.mxu0 0
        %2167 = vmatpush1.bf16.msra.mxu0 0
        %2168 = vmatprep.subr.bf16.mxu0 0
        %2169 = vmatpush1.bf16.msra.mxu0 0
        %2170 = vmatprep.subr.bf16.mxu0 0
        %2171 = vmatpush1.bf16.msra.mxu0 0
        %2172 = vmatprep.mubr.bf16.mxu0 0
        %2173 = vmatmul.mubr.bf16.gmra.mrb[0].mxu0 %v2138
        %v2174 = vpop.f32.mrb[0].mxu0
        %v2175 = vadd.f32 %v2123, %v2174
        %v2176 = vpop.f32.mrb[0].mxu0
        %v2177 = vpop.f32.mrb[0].mxu0
        %v2178 = vpop.f32.mrb[0].mxu0
        %2179 = vdwg.mxu0
        %v2180 = vmul.f32 %v2175, %v2175
        %v2181 = vmul.f32 %v2175, %v2180
        %v2182 = vmul.f32 %v2181, 0.044715
        %v2183 = vadd.f32 %v2175, %v2182
        %v2184 = vmul.f32 %v2183, 0.7978846
        %v2185 = vtanh.pop %v2184
        %v2186 = vadd.f32 %v2185, 1.0
        %v2187 = vmul.f32 %v2186, 0.5
        %v2188 = vmul.f32 %v2175, %v2187
        %v2189 = vpack.c.bf16 %v2188, %v2188
        %s2190 = scalar_lea.vmem %s8, 32
        %v2191 = vld [vmem:[%s2190] sm:$0xf]
        %v2192 = vld [vmem:[%s2190 + $0x4] sm:$0xf]
        %v2193 = vld [vmem:[%s2190 + $0x8] sm:$0xf]
        %v2194 = vld [vmem:[%s2190 + $0xc] sm:$0xf]
        %v2195 = vld [vmem:[%s2190 + $0x10] sm:$0xf]
        %v2196 = vld [vmem:[%s2190 + $0x14] sm:$0xf]
        %v2197 = vld [vmem:[%s2190 + $0x18] sm:$0xf]
        %v2198 = vld [vmem:[%s2190 + $0x1c] sm:$0xf]
        %s2199 = scalar_lea.vmem %s9, 9
        %v2200 = vld [vmem:[%s2199] sm:$0x1]
        %v2202 = vlaneseq
        %v2203 = vshrl.u32 %v2202, 7
        %v2204 = vsub.s32 0, %v2203
        %v2205 = vrot.slane %v2200, %v2204
        %v2215 = vunpack.c.l.b16 %v2191
        %v2216 = vunpack.c.l.b16 %v2192
        %v2217 = vunpack.c.l.b16 %v2193
        %v2218 = vunpack.c.l.b16 %v2194
        %v2219 = vunpack.c.l.b16 %v2195
        %v2220 = vunpack.c.l.b16 %v2196
        %v2221 = vunpack.c.l.b16 %v2197
        %v2222 = vunpack.c.l.b16 %v2198
        %v2223 = vpack.c.b16 %v2216, %v2215
        %v2224 = vpack.c.b16 %v2218, %v2217
        %v2225 = vpack.c.b16 %v2220, %v2219
        %v2226 = vpack.c.b16 %v2222, %v2221
        %v2232 = vsel %vm1280, %v2189, 0
        %2234 = vmatprep.subr.bf16.mxu0 0
        %2235 = vmatpush1.bf16.msra.mxu0 %v2223
        %2236 = vmatprep.subr.bf16.mxu0 0
        %2237 = vmatpush1.bf16.msra.mxu0 %v2224
        %2238 = vmatprep.subr.bf16.mxu0 0
        %2239 = vmatpush1.bf16.msra.mxu0 %v2225
        %2240 = vmatprep.subr.bf16.mxu0 0
        %2241 = vmatpush1.bf16.msra.mxu0 %v2226
        %2242 = vmatprep.subr.bf16.mxu0 0
        %2243 = vmatpush1.bf16.msra.mxu0 0
        %2244 = vmatprep.subr.bf16.mxu0 0
        %2245 = vmatpush1.bf16.msra.mxu0 0
        %2246 = vmatprep.subr.bf16.mxu0 0
        %2247 = vmatpush1.bf16.msra.mxu0 0
        %2248 = vmatprep.subr.bf16.mxu0 0
        %2249 = vmatpush1.bf16.msra.mxu0 0
        %2250 = vmatprep.subr.bf16.mxu0 0
        %2251 = vmatpush1.bf16.msra.mxu0 0
        %2252 = vmatprep.subr.bf16.mxu0 0
        %2253 = vmatpush1.bf16.msra.mxu0 0
        %2254 = vmatprep.subr.bf16.mxu0 0
        %2255 = vmatpush1.bf16.msra.mxu0 0
        %2256 = vmatprep.subr.bf16.mxu0 0
        %2257 = vmatpush1.bf16.msra.mxu0 0
        %2258 = vmatprep.subr.bf16.mxu0 0
        %2259 = vmatpush1.bf16.msra.mxu0 0
        %2260 = vmatprep.subr.bf16.mxu0 0
        %2261 = vmatpush1.bf16.msra.mxu0 0
        %2262 = vmatprep.subr.bf16.mxu0 0
        %2263 = vmatpush1.bf16.msra.mxu0 0
        %2264 = vmatprep.subr.bf16.mxu0 0
        %2265 = vmatpush1.bf16.msra.mxu0 0
        %2266 = vmatprep.mubr.bf16.mxu0 0
        %2267 = vmatmul.mubr.bf16.gmra.mrb[0].mxu0 %v2232
        %v2268 = vpop.f32.mrb[0].mxu0
        %v2269 = vadd.f32 %v2205, %v2268
        %v2270 = vpop.f32.mrb[0].mxu0
        %v2271 = vpop.f32.mrb[0].mxu0
        %v2272 = vpop.f32.mrb[0].mxu0
        %2273 = vdwg.mxu0
        %v2274 = vadd.f32 %v2110, %v2269
        %s2275 = scalar_lea.vmem %s9, 10
        %v2276 = vld [vmem:[%s2275] sm:$0x1]
        %s2277 = scalar_lea.vmem %s9, 11
        %v2278 = vld [vmem:[%s2277] sm:$0x1]
        %v2279 = vsel %vm380, %v2274, 0.0
        %2280 = vadd.xlane.f32.xlu0 %v2279
        %v2281 = vpop.xlane.xlu0 %2280
        %v2282 = vmul.f32 %v2281, %v384
        %v2283 = vsub.f32 %v2274, %v2282
        %v2284 = vmul.f32 %v2283, %v2283
        %v2285 = vsel %vm380, %v2284, 0.0
        %2286 = vadd.xlane.f32.xlu0 %v2285
        %v2287 = vpop.xlane.xlu0 %2286
        %v2288 = vmul.f32 %v2287, %v384
        %v2289 = vadd.f32 %v2288, 1e-12
        %v2290 = vrsqrt.pop %v2289
        %v2291 = vmul.f32 %v2283, %v2290
        %v2293 = vlaneseq
        %v2294 = vshrl.u32 %v2293, 7
        %v2295 = vsub.s32 0, %v2294
        %v2296 = vrot.slane %v2276, %v2295
        %v2298 = vmul.f32 %v2291, %v2296
        %v2300 = vlaneseq
        %v2301 = vshrl.u32 %v2300, 7
        %v2302 = vsub.s32 0, %v2301
        %v2303 = vrot.slane %v2278, %v2302
        %v2305 = vadd.f32 %v2298, %v2303
        %vm2306 = vcmask 253952
        %2307 = vst.msk [vmem:[%s360] sm:$0x1] %vm2306, %v2305
        %s2308 = sand.u32 %s252, 1
        %s2309 = scalar_lea.sflag [#allocation3], %s2308
        %s2310 = sand.u32 %s252, 1
        %s2311 = scalar_lea.vmem [#allocation2], %s2310
        // Predicated region
        $region61: #{ner_model_forward.1} parent=59 // pred_check
          %p2312 = pneg %p262
        $region62: #{ner_model_forward.1} parent=59 // pred_check_branch
          %2314 = sbr.rel (%p2312) target = $region64
        $region63: #{ner_model_forward.1} parent=59 // pred_region
          %s2316 = ssub.s32 16, 16
          %2317 = vsyncadd %s2309, %s2316
          %s2318 = smul.addr %s24, 16
          %s2319 = scalar_lea.hbm %s10, %s2318
          %s2321 = sshll.u32 %s2311, 4
          %s2322 = int_to_ptr.vmem [resolvable:$true] %s2321
          %2324 = dma.vmem_to_hbm [thread:$0]  %s2322, 16, %s2319, %s2309
        $region64: #{ner_model_forward.1} parent=59 // pred_fallthru
          _
      $region60: #{ner_model_forward.1} parent=5 // pred_fallthru
        _
      %p2325 = scmp.le.s32.totalorder 2, %s19
      // Predicated region
      $region65: #{ner_model_forward.1} parent=5 // pred_check
        %p2326 = pneg %p2325
      $region66: #{ner_model_forward.1} parent=5 // pred_check_branch
        %2328 = sbr.rel (%p2326) target = $region68
      $region67: #{ner_model_forward.1} parent=5 // pred_region
        %s2329 = ssub.s32 %s19, 2
        // Predicated region
        $region69: #{ner_model_forward.1} parent=67 // pred_check
          %p2330 = pneg %p268
        $region70: #{ner_model_forward.1} parent=67 // pred_check_branch
          %2332 = sbr.rel (%p2330) target = $region72
        $region71: #{ner_model_forward.1} parent=67 // pred_region
          %s2333 = sand.u32 %s253, 1
          %s2334 = scalar_lea.sflag [#allocation3], %s2333
          %s2335 = sand.u32 %s253, 1
          %s2336 = scalar_lea.vmem [#allocation2], %s2335
          %2337 = dma.done %s2334, 16
        $region72: #{ner_model_forward.1} parent=67 // pred_fallthru
          _
      $region68: #{ner_model_forward.1} parent=5 // pred_fallthru
        _
    $region6: #{ner_model_forward.1} parent=1 // loop_footer
      %s23 = sadd.s32 1, %s19
    $region7: #{ner_model_forward.1} parent=1 // loop_footer_branch
      %18 = sbr.rel target = $region3
    $region8: #{ner_model_forward.1} parent=1 // loop_exit
      _
    %2338 = vsyncpa [#allocation3], 1
    %s2339 = scalar_lea.sflag [#allocation3], 1
    %2340 = vsyncpa %s2339, 1

</llo_original>
